<compile_context>
chip_gen: v6e
topology: v6e:2x2x1
jax: 0.10.0
libtpu: 0.0.40
codegen_flags: <defaults>
</compile_context>

<pallas_src>
import jax
import jax.numpy as jnp
from jax.experimental import pallas as pl
from jax.experimental.pallas import tpu as pltpu

# ------------------------- problem sizes (small) ---------------------------
N = 8                         # batch (one f32 sublane group)
LATENT = 108                  # latent_dim
N_CLASSES = 10
EMB = 2 * N_CLASSES           # embedding width = n_classes * 2 = 20
IN_FEAT = LATENT + EMB        # 128  (lane-dense input to the first matmul)
NODES1, NODES2, NODES3, NODES4 = 512, 256, 512, 1024
EPS = 0.8                     # BatchNorm1d(n, 0.8) -> eps = 0.8 (positional!)
NEG = 0.2                     # LeakyReLU slope


# ------------------------------- kernel ------------------------------------
def generator_kernel(labels_ref, noise_ref, emb_ref,
                     w1n_ref, w1e_ref, vec1_ref,
                     w2_ref, vec2_ref,
                     w3_ref, vec3_ref,
                     w4_hbm_ref, b4_ref,
                     out_ref,
                     w4_vmem, w4_sem):
    # Kick off the layer-4 weight DMA immediately; it is only consumed by the
    # last matmul, so the transfer overlaps the embedding build + layers 1-3.
    w4_copy = pltpu.make_async_copy(w4_hbm_ref, w4_vmem, w4_sem)
    w4_copy.start()

    inv_n = jnp.float32(1.0 / N)

    def bn_lrelu(h, vec_ref):
        # Fused single-pass batch statistics (training mode, biased variance).
        # NOTE: var = E[x^2] - E[x]^2 is safe here (eps=0.8, O(1) activations).
        s = jnp.sum(h, axis=0, keepdims=True)
        ss = jnp.sum(h * h, axis=0, keepdims=True)
        mean = s * inv_n
        var = ss * inv_n - mean * mean
        scale = vec_ref[1:2, :] * jax.lax.rsqrt(var + EPS)   # gamma row
        shift = vec_ref[2:3, :] - mean * scale               # beta row
        y = h * scale + shift                                # single FMA / elem
        return jnp.where(y > 0, y, NEG * y)                  # LeakyReLU(0.2)

    def dense(x_bf16, w_ref, bias):
        # bf16 MXU operands, f32 accumulation.
        return jnp.dot(x_bf16, w_ref[...],
                       preferred_element_type=jnp.float32) + bias

    # --- build the (N, IN_FEAT) input in-kernel -----------------------------
    # Exact embedding gather via a one-hot (0/1, f32) matmul.
    lab = labels_ref[...]                                        # (N, 1) int32
    onehot = (jax.lax.broadcasted_iota(jnp.int32, (N, N_CLASSES), 1)
              == lab).astype(jnp.float32)                        # (N, 10)
    emb_rows = jnp.dot(onehot, emb_ref[...],
                       preferred_element_type=jnp.float32)       # (N, 20)

    # cat(noise, emb) @ w1 == noise @ w1[:LATENT] + emb @ w1[LATENT:]
    h = (jnp.dot(noise_ref[...].astype(jnp.bfloat16), w1n_ref[...],
                 preferred_element_type=jnp.float32)
         + jnp.dot(emb_rows.astype(jnp.bfloat16), w1e_ref[...],
                   preferred_element_type=jnp.float32)
         + vec1_ref[0:1, :])                                     # (N, 512)

    h = dense(bn_lrelu(h, vec1_ref).astype(jnp.bfloat16),
              w2_ref, vec2_ref[0:1, :])                          # (N, 256)
    h = dense(bn_lrelu(h, vec2_ref).astype(jnp.bfloat16),
              w3_ref, vec3_ref[0:1, :])                          # (N, 512)
    h = bn_lrelu(h, vec3_ref).astype(jnp.bfloat16)               # (N, 512)

    w4_copy.wait()                                               # w4 now in VMEM
    out_ref[...] = jnp.dot(h, w4_vmem[...],
                           preferred_element_type=jnp.float32) + b4_ref[...]


# ------------------------------ wrapper -------------------------------------
def prepare_params(p):
    """One-time conversion/packing of the f32 module params for the kernel.

    Runs once at init (outside the jitted forward), so there is no per-call
    f32->bf16 cast traffic and only a handful of prologue DMAs per call.
    """
    bf = lambda a: a.astype(jnp.bfloat16)
    pack = lambda b, g, be: jnp.concatenate([b, g, be], axis=0)   # (3, NODES)
    return {
        'emb':  p['emb'],                       # f32: exact one-hot gather
        'w1n':  bf(p['w1'][:LATENT]),           # noise columns of w1
        'w1e':  bf(p['w1'][LATENT:]),           # embedding columns of w1
        'vec1': pack(p['b1'], p['g1'], p['be1']),
        'w2':   bf(p['w2']),
        'vec2': pack(p['b2'], p['g2'], p['be2']),
        'w3':   bf(p['w3']),
        'vec3': pack(p['b3'], p['g3'], p['be3']),
        'w4':   bf(p['w4']),                    # stays in HBM, DMA'd in-kernel
        'b4':   p['b4'],
    }


def generator_forward(noise, labels, kp):
    labels2d = labels.astype(jnp.int32).reshape(N, 1)

    vmem = pl.BlockSpec(memory_space=pltpu.MemorySpace.VMEM)
    hbm = pl.BlockSpec(memory_space=pl.ANY)     # w4: no auto-DMA, copied in-kernel

    args = (labels2d, noise,
            kp['emb'], kp['w1n'], kp['w1e'], kp['vec1'],
            kp['w2'], kp['vec2'],
            kp['w3'], kp['vec3'],
            kp['w4'], kp['b4'])
    in_specs = [vmem] * 10 + [hbm, vmem]

    # TODO(synk): for batches > 8, add a batch grid (128-256 rows per step,
    # weight index_maps pinned to block (0,0), batch axis "parallel") to fill
    # the MXU rows and both v7x TensorCores.
    return pl.pallas_call(
        generator_kernel,
        out_shape=jax.ShapeDtypeStruct((N, NODES4), jnp.float32),
        in_specs=in_specs,
        out_specs=vmem,
        scratch_shapes=[pltpu.VMEM((NODES3, NODES4), jnp.bfloat16),
                        pltpu.SemaphoreType.DMA],
    )(*args)


# ---------------------------- pure-JAX reference ----------------------------
def reference_forward(noise, labels, p):
    HIGH = jax.lax.Precision.HIGHEST
    em = jnp.take(p['emb'], labels, axis=0)
    x = jnp.concatenate([noise, em], axis=-1)

    def bn(h, g, b):
        m = jnp.mean(h, axis=0, keepdims=True)
        v = jnp.mean((h - m) ** 2, axis=0, keepdims=True)   # biased variance
        return g * (h - m) * jax.lax.rsqrt(v + EPS) + b

    def lrelu(h):
        return jnp.where(h > 0, h, NEG * h)

    h = jnp.dot(x, p['w1'], precision=HIGH) + p['b1']
    h = lrelu(bn(h, p['g1'], p['be1']))
    h = jnp.dot(h, p['w2'], precision=HIGH) + p['b2']
    h = lrelu(bn(h, p['g2'], p['be2']))
    h = jnp.dot(h, p['w3'], precision=HIGH) + p['b3']
    h = lrelu(bn(h, p['g3'], p['be3']))
    return jnp.dot(h, p['w4'], precision=HIGH) + p['b4']


# ------------------------------- params -------------------------------------
def make_params(key):
    ks = jax.random.split(key, 20)

    def nrm(k, shape, s):
        return (s * jax.random.normal(k, shape)).astype(jnp.float32)

    p = {
        'emb': nrm(ks[0], (N_CLASSES, EMB), 1.0),
        'w1':  nrm(ks[1], (IN_FEAT, NODES1), 0.10),
        'b1':  nrm(ks[2], (1, NODES1), 0.02),
        'g1':  1.0 + nrm(ks[3], (1, NODES1), 0.1),
        'be1': nrm(ks[4], (1, NODES1), 0.1),
        'w2':  nrm(ks[5], (NODES1, NODES2), 0.06),
        'b2':  nrm(ks[6], (1, NODES2), 0.02),
        'g2':  1.0 + nrm(ks[7], (1, NODES2), 0.1),
        'be2': nrm(ks[8], (1, NODES2), 0.1),
        'w3':  nrm(ks[9], (NODES2, NODES3), 0.09),
        'b3':  nrm(ks[10], (1, NODES3), 0.02),
        'g3':  1.0 + nrm(ks[11], (1, NODES3), 0.1),
        'be3': nrm(ks[12], (1, NODES3), 0.1),
        'w4':  nrm(ks[13], (NODES3, NODES4), 0.06),
        'b4':  nrm(ks[14], (1, NODES4), 0.02),
    }
    return p, ks[15], ks[16]


if __name__ == "__main__":
    key = jax.random.PRNGKey(0)
    params, k_noise, k_lab = make_params(key)
    kparams = prepare_params(params)   # one-time bf16 conversion + vector packing

    noise = jax.random.normal(k_noise, (N, LATENT), dtype=jnp.float32)
    labels = jax.random.randint(k_lab, (N,), 0, N_CLASSES)

    out = jax.jit(generator_forward)(noise, labels, kparams)
    out = jax.block_until_ready(out)

    assert out.shape == (N, NODES4), out.shape
    assert bool(jnp.all(jnp.isfinite(out)))

    # bf16 MXU operands give ~1e-2 RMS error on O(1) outputs vs the f32
    # HIGHEST-precision reference; BN (eps=0.8) keeps everything
    # well-conditioned, so a 0.1 max-abs bound is a robust structural check.
    ref = reference_forward(noise, labels, params)
    err = float(jnp.max(jnp.abs(out - ref)))
    assert err < 1e-1, err

    print("KERNEL_OK")
</pallas_src>

<mosaic_0001>
module attributes {stable_mosaic.version = 11 : i64} {
  func.func @generator_kernel(%arg0: memref<8x1xi32, #tpu.memory_space<vmem>>, %arg1: memref<8x108xf32, #tpu.memory_space<vmem>>, %arg2: memref<10x20xf32, #tpu.memory_space<vmem>>, %arg3: memref<108x512xbf16, #tpu.memory_space<vmem>>, %arg4: memref<20x512xbf16, #tpu.memory_space<vmem>>, %arg5: memref<3x512xf32, #tpu.memory_space<vmem>>, %arg6: memref<512x256xbf16, #tpu.memory_space<vmem>>, %arg7: memref<3x256xf32, #tpu.memory_space<vmem>>, %arg8: memref<256x512xbf16, #tpu.memory_space<vmem>>, %arg9: memref<3x512xf32, #tpu.memory_space<vmem>>, %arg10: memref<512x1024xbf16, #tpu.memory_space<any>>, %arg11: memref<1x1024xf32, #tpu.memory_space<vmem>>, %arg12: memref<8x1024xf32, #tpu.memory_space<vmem>>, %arg13: memref<512x1024xbf16, #tpu.memory_space<vmem>>, %arg14: memref<!tpu.dma_semaphore, #tpu.memory_space<semaphore_mem>>) attributes {dimension_semantics = [], scalar_prefetch = 0 : i64, scratch_operands = 2 : i64, tpu.core_type = #tpu.core_type<tc>} {
    tpu.enqueue_dma source(%arg10 : memref<512x1024xbf16, #tpu.memory_space<any>>) target(%arg13 : memref<512x1024xbf16, #tpu.memory_space<vmem>>) target_semaphore(%arg14 : memref<!tpu.dma_semaphore, #tpu.memory_space<semaphore_mem>>)
    %c0 = arith.constant 0 : index
    %c0_0 = arith.constant 0 : index
    %0 = vector.load %arg0[%c0, %c0_0] : memref<8x1xi32, #tpu.memory_space<vmem>>, vector<8x1xi32>
    %1 = tpu.iota {dimensions = array<i32: 1>} : vector<8x10xi32>
    %2 = vector.broadcast %0 : vector<8x1xi32> to vector<8x10xi32>
    %3 = arith.cmpi eq, %1, %2 : vector<8x10xi32>
    %4 = arith.extui %3 : vector<8x10xi1> to vector<8x10xi32>
    %5 = arith.sitofp %4 : vector<8x10xi32> to vector<8x10xf32>
    %c0_1 = arith.constant 0 : index
    %c0_2 = arith.constant 0 : index
    %6 = vector.load %arg2[%c0_1, %c0_2] : memref<10x20xf32, #tpu.memory_space<vmem>>, vector<10x20xf32>
    %cst = arith.constant dense<0.000000e+00> : vector<8x20xf32>
    %7 = tpu.matmul %5, %6, %cst {dimension_numbers = #tpu.dot_dimension_numbers<[1], [0], [0], [1], [0, 0, 1, 1], [], []>} : vector<8x10xf32>, vector<10x20xf32>, vector<8x20xf32> -> vector<8x20xf32>
    %c0_3 = arith.constant 0 : index
    %c0_4 = arith.constant 0 : index
    %8 = vector.load %arg1[%c0_3, %c0_4] : memref<8x108xf32, #tpu.memory_space<vmem>>, vector<8x108xf32>
    %9 = arith.truncf %8 : vector<8x108xf32> to vector<8x108xbf16>
    %c0_5 = arith.constant 0 : index
    %c0_6 = arith.constant 0 : index
    %10 = vector.load %arg3[%c0_5, %c0_6] : memref<108x512xbf16, #tpu.memory_space<vmem>>, vector<108x512xbf16>
    %cst_7 = arith.constant dense<0.000000e+00> : vector<8x512xf32>
    %11 = tpu.matmul %9, %10, %cst_7 {dimension_numbers = #tpu.dot_dimension_numbers<[1], [0], [0], [1], [0, 0, 1, 1], [], []>} : vector<8x108xbf16>, vector<108x512xbf16>, vector<8x512xf32> -> vector<8x512xf32>
    %12 = arith.truncf %7 : vector<8x20xf32> to vector<8x20xbf16>
    %c0_8 = arith.constant 0 : index
    %c0_9 = arith.constant 0 : index
    %13 = vector.load %arg4[%c0_8, %c0_9] : memref<20x512xbf16, #tpu.memory_space<vmem>>, vector<20x512xbf16>
    %cst_10 = arith.constant dense<0.000000e+00> : vector<8x512xf32>
    %14 = tpu.matmul %12, %13, %cst_10 {dimension_numbers = #tpu.dot_dimension_numbers<[1], [0], [0], [1], [0, 0, 1, 1], [], []>} : vector<8x20xbf16>, vector<20x512xbf16>, vector<8x512xf32> -> vector<8x512xf32>
    %15 = arith.addf %11, %14 : vector<8x512xf32>
    %c0_11 = arith.constant 0 : index
    %c0_12 = arith.constant 0 : index
    %16 = vector.load %arg5[%c0_11, %c0_12] : memref<3x512xf32, #tpu.memory_space<vmem>>, vector<1x512xf32>
    %17 = vector.broadcast %16 : vector<1x512xf32> to vector<8x512xf32>
    %18 = arith.addf %15, %17 : vector<8x512xf32>
    %cst_13 = arith.constant dense<0.000000e+00> : vector<512xf32>
    %19 = vector.multi_reduction <add>, %18, %cst_13 [0] : vector<8x512xf32> to vector<512xf32>
    %20 = vector.shape_cast %19 : vector<512xf32> to vector<1x512xf32>
    %21 = arith.mulf %18, %18 : vector<8x512xf32>
    %cst_14 = arith.constant dense<0.000000e+00> : vector<512xf32>
    %22 = vector.multi_reduction <add>, %21, %cst_14 [0] : vector<8x512xf32> to vector<512xf32>
    %23 = vector.shape_cast %22 : vector<512xf32> to vector<1x512xf32>
    %cst_15 = arith.constant 1.250000e-01 : f32
    %24 = vector.broadcast %cst_15 : f32 to vector<1x512xf32>
    %25 = arith.mulf %20, %24 : vector<1x512xf32>
    %cst_16 = arith.constant 1.250000e-01 : f32
    %26 = vector.broadcast %cst_16 : f32 to vector<1x512xf32>
    %27 = arith.mulf %23, %26 : vector<1x512xf32>
    %28 = arith.mulf %25, %25 : vector<1x512xf32>
    %29 = arith.subf %27, %28 : vector<1x512xf32>
    %c1 = arith.constant 1 : index
    %c0_17 = arith.constant 0 : index
    %30 = vector.load %arg5[%c1, %c0_17] : memref<3x512xf32, #tpu.memory_space<vmem>>, vector<1x512xf32>
    %cst_18 = arith.constant 8.000000e-01 : f32
    %31 = vector.broadcast %cst_18 : f32 to vector<1x512xf32>
    %32 = arith.addf %29, %31 : vector<1x512xf32>
    %33 = math.rsqrt %32 : vector<1x512xf32>
    %34 = arith.mulf %30, %33 : vector<1x512xf32>
    %c2 = arith.constant 2 : index
    %c0_19 = arith.constant 0 : index
    %35 = vector.load %arg5[%c2, %c0_19] : memref<3x512xf32, #tpu.memory_space<vmem>>, vector<1x512xf32>
    %36 = arith.mulf %25, %34 : vector<1x512xf32>
    %37 = arith.subf %35, %36 : vector<1x512xf32>
    %38 = vector.broadcast %34 : vector<1x512xf32> to vector<8x512xf32>
    %39 = arith.mulf %18, %38 : vector<8x512xf32>
    %40 = vector.broadcast %37 : vector<1x512xf32> to vector<8x512xf32>
    %41 = arith.addf %39, %40 : vector<8x512xf32>
    %cst_20 = arith.constant 0.000000e+00 : f32
    %42 = vector.broadcast %cst_20 : f32 to vector<8x512xf32>
    %43 = arith.cmpf ogt, %41, %42 : vector<8x512xf32>
    %cst_21 = arith.constant 2.000000e-01 : f32
    %44 = vector.broadcast %cst_21 : f32 to vector<8x512xf32>
    %45 = arith.mulf %44, %41 : vector<8x512xf32>
    %46 = arith.select %43, %41, %45 : vector<8x512xi1>, vector<8x512xf32>
    %47 = arith.truncf %46 : vector<8x512xf32> to vector<8x512xbf16>
    %c0_22 = arith.constant 0 : index
    %c0_23 = arith.constant 0 : index
    %48 = vector.load %arg7[%c0_22, %c0_23] : memref<3x256xf32, #tpu.memory_space<vmem>>, vector<1x256xf32>
    %c0_24 = arith.constant 0 : index
    %c0_25 = arith.constant 0 : index
    %49 = vector.load %arg6[%c0_24, %c0_25] : memref<512x256xbf16, #tpu.memory_space<vmem>>, vector<512x256xbf16>
    %cst_26 = arith.constant dense<0.000000e+00> : vector<8x256xf32>
    %50 = tpu.matmul %47, %49, %cst_26 {dimension_numbers = #tpu.dot_dimension_numbers<[1], [0], [0], [1], [0, 0, 1, 1], [], []>} : vector<8x512xbf16>, vector<512x256xbf16>, vector<8x256xf32> -> vector<8x256xf32>
    %51 = vector.broadcast %48 : vector<1x256xf32> to vector<8x256xf32>
    %52 = arith.addf %50, %51 : vector<8x256xf32>
    %cst_27 = arith.constant dense<0.000000e+00> : vector<256xf32>
    %53 = vector.multi_reduction <add>, %52, %cst_27 [0] : vector<8x256xf32> to vector<256xf32>
    %54 = vector.shape_cast %53 : vector<256xf32> to vector<1x256xf32>
    %55 = arith.mulf %52, %52 : vector<8x256xf32>
    %cst_28 = arith.constant dense<0.000000e+00> : vector<256xf32>
    %56 = vector.multi_reduction <add>, %55, %cst_28 [0] : vector<8x256xf32> to vector<256xf32>
    %57 = vector.shape_cast %56 : vector<256xf32> to vector<1x256xf32>
    %cst_29 = arith.constant 1.250000e-01 : f32
    %58 = vector.broadcast %cst_29 : f32 to vector<1x256xf32>
    %59 = arith.mulf %54, %58 : vector<1x256xf32>
    %cst_30 = arith.constant 1.250000e-01 : f32
    %60 = vector.broadcast %cst_30 : f32 to vector<1x256xf32>
    %61 = arith.mulf %57, %60 : vector<1x256xf32>
    %62 = arith.mulf %59, %59 : vector<1x256xf32>
    %63 = arith.subf %61, %62 : vector<1x256xf32>
    %c1_31 = arith.constant 1 : index
    %c0_32 = arith.constant 0 : index
    %64 = vector.load %arg7[%c1_31, %c0_32] : memref<3x256xf32, #tpu.memory_space<vmem>>, vector<1x256xf32>
    %cst_33 = arith.constant 8.000000e-01 : f32
    %65 = vector.broadcast %cst_33 : f32 to vector<1x256xf32>
    %66 = arith.addf %63, %65 : vector<1x256xf32>
    %67 = math.rsqrt %66 : vector<1x256xf32>
    %68 = arith.mulf %64, %67 : vector<1x256xf32>
    %c2_34 = arith.constant 2 : index
    %c0_35 = arith.constant 0 : index
    %69 = vector.load %arg7[%c2_34, %c0_35] : memref<3x256xf32, #tpu.memory_space<vmem>>, vector<1x256xf32>
    %70 = arith.mulf %59, %68 : vector<1x256xf32>
    %71 = arith.subf %69, %70 : vector<1x256xf32>
    %72 = vector.broadcast %68 : vector<1x256xf32> to vector<8x256xf32>
    %73 = arith.mulf %52, %72 : vector<8x256xf32>
    %74 = vector.broadcast %71 : vector<1x256xf32> to vector<8x256xf32>
    %75 = arith.addf %73, %74 : vector<8x256xf32>
    %cst_36 = arith.constant 0.000000e+00 : f32
    %76 = vector.broadcast %cst_36 : f32 to vector<8x256xf32>
    %77 = arith.cmpf ogt, %75, %76 : vector<8x256xf32>
    %cst_37 = arith.constant 2.000000e-01 : f32
    %78 = vector.broadcast %cst_37 : f32 to vector<8x256xf32>
    %79 = arith.mulf %78, %75 : vector<8x256xf32>
    %80 = arith.select %77, %75, %79 : vector<8x256xi1>, vector<8x256xf32>
    %81 = arith.truncf %80 : vector<8x256xf32> to vector<8x256xbf16>
    %c0_38 = arith.constant 0 : index
    %c0_39 = arith.constant 0 : index
    %82 = vector.load %arg9[%c0_38, %c0_39] : memref<3x512xf32, #tpu.memory_space<vmem>>, vector<1x512xf32>
    %c0_40 = arith.constant 0 : index
    %c0_41 = arith.constant 0 : index
    %83 = vector.load %arg8[%c0_40, %c0_41] : memref<256x512xbf16, #tpu.memory_space<vmem>>, vector<256x512xbf16>
    %cst_42 = arith.constant dense<0.000000e+00> : vector<8x512xf32>
    %84 = tpu.matmul %81, %83, %cst_42 {dimension_numbers = #tpu.dot_dimension_numbers<[1], [0], [0], [1], [0, 0, 1, 1], [], []>} : vector<8x256xbf16>, vector<256x512xbf16>, vector<8x512xf32> -> vector<8x512xf32>
    %85 = vector.broadcast %82 : vector<1x512xf32> to vector<8x512xf32>
    %86 = arith.addf %84, %85 : vector<8x512xf32>
    %cst_43 = arith.constant dense<0.000000e+00> : vector<512xf32>
    %87 = vector.multi_reduction <add>, %86, %cst_43 [0] : vector<8x512xf32> to vector<512xf32>
    %88 = vector.shape_cast %87 : vector<512xf32> to vector<1x512xf32>
    %89 = arith.mulf %86, %86 : vector<8x512xf32>
    %cst_44 = arith.constant dense<0.000000e+00> : vector<512xf32>
    %90 = vector.multi_reduction <add>, %89, %cst_44 [0] : vector<8x512xf32> to vector<512xf32>
    %91 = vector.shape_cast %90 : vector<512xf32> to vector<1x512xf32>
    %cst_45 = arith.constant 1.250000e-01 : f32
    %92 = vector.broadcast %cst_45 : f32 to vector<1x512xf32>
    %93 = arith.mulf %88, %92 : vector<1x512xf32>
    %cst_46 = arith.constant 1.250000e-01 : f32
    %94 = vector.broadcast %cst_46 : f32 to vector<1x512xf32>
    %95 = arith.mulf %91, %94 : vector<1x512xf32>
    %96 = arith.mulf %93, %93 : vector<1x512xf32>
    %97 = arith.subf %95, %96 : vector<1x512xf32>
    %c1_47 = arith.constant 1 : index
    %c0_48 = arith.constant 0 : index
    %98 = vector.load %arg9[%c1_47, %c0_48] : memref<3x512xf32, #tpu.memory_space<vmem>>, vector<1x512xf32>
    %cst_49 = arith.constant 8.000000e-01 : f32
    %99 = vector.broadcast %cst_49 : f32 to vector<1x512xf32>
    %100 = arith.addf %97, %99 : vector<1x512xf32>
    %101 = math.rsqrt %100 : vector<1x512xf32>
    %102 = arith.mulf %98, %101 : vector<1x512xf32>
    %c2_50 = arith.constant 2 : index
    %c0_51 = arith.constant 0 : index
    %103 = vector.load %arg9[%c2_50, %c0_51] : memref<3x512xf32, #tpu.memory_space<vmem>>, vector<1x512xf32>
    %104 = arith.mulf %93, %102 : vector<1x512xf32>
    %105 = arith.subf %103, %104 : vector<1x512xf32>
    %106 = vector.broadcast %102 : vector<1x512xf32> to vector<8x512xf32>
    %107 = arith.mulf %86, %106 : vector<8x512xf32>
    %108 = vector.broadcast %105 : vector<1x512xf32> to vector<8x512xf32>
    %109 = arith.addf %107, %108 : vector<8x512xf32>
    %cst_52 = arith.constant 0.000000e+00 : f32
    %110 = vector.broadcast %cst_52 : f32 to vector<8x512xf32>
    %111 = arith.cmpf ogt, %109, %110 : vector<8x512xf32>
    %cst_53 = arith.constant 2.000000e-01 : f32
    %112 = vector.broadcast %cst_53 : f32 to vector<8x512xf32>
    %113 = arith.mulf %112, %109 : vector<8x512xf32>
    %114 = arith.select %111, %109, %113 : vector<8x512xi1>, vector<8x512xf32>
    %115 = arith.truncf %114 : vector<8x512xf32> to vector<8x512xbf16>
    tpu.wait_dma2 semaphore(%arg14 : memref<!tpu.dma_semaphore, #tpu.memory_space<semaphore_mem>>) src(%arg10 : memref<512x1024xbf16, #tpu.memory_space<any>>) dst(%arg13 : memref<512x1024xbf16, #tpu.memory_space<vmem>>)
    %c0_54 = arith.constant 0 : index
    %c0_55 = arith.constant 0 : index
    %116 = vector.load %arg13[%c0_54, %c0_55] : memref<512x1024xbf16, #tpu.memory_space<vmem>>, vector<512x1024xbf16>
    %cst_56 = arith.constant dense<0.000000e+00> : vector<8x1024xf32>
    %117 = tpu.matmul %115, %116, %cst_56 {dimension_numbers = #tpu.dot_dimension_numbers<[1], [0], [0], [1], [0, 0, 1, 1], [], []>} : vector<8x512xbf16>, vector<512x1024xbf16>, vector<8x1024xf32> -> vector<8x1024xf32>
    %c0_57 = arith.constant 0 : index
    %c0_58 = arith.constant 0 : index
    %118 = vector.load %arg11[%c0_57, %c0_58] : memref<1x1024xf32, #tpu.memory_space<vmem>>, vector<1x1024xf32>
    %119 = vector.broadcast %118 : vector<1x1024xf32> to vector<8x1024xf32>
    %120 = arith.addf %117, %119 : vector<8x1024xf32>
    %c0_59 = arith.constant 0 : index
    %c0_60 = arith.constant 0 : index
    %121 = vector.load %arg12[%c0_59, %c0_60] : memref<8x1024xf32, #tpu.memory_space<vmem>>, vector<8x1024xf32>
    tpu.vector_store %arg12[%c0_59, %c0_60], %120 {strides = array<i32>} : memref<8x1024xf32, #tpu.memory_space<vmem>>, vector<8x1024xf32>,
    return
  }
}

</mosaic_0001>

<llo_original>
// kernel: generator_forward.1
$region0: #{generator_forward.1}
  #allocation0 [shape = 'u32[]', space=smem, size = 0x4, offset = 0x4, fixed_abs, tag = 'smem constant byte address 0x4 - core index']
  #allocation1 [shape = 'u32[144,128]{1,0:T(1,128)}', space=vmem, size = 0x12000, scoped, tag = 'internal scratch']
  #allocation2 [shape = 'bf16[512,1024]{1,0:T(8,128)(2,1)}', space=vmem, size = 0x100000, scoped, tag = 'scratch operand']
  #allocation3 [shape = 's32[1]{0}', space=sflag, size = 0x4, scoped, tag = 'scratch operand']
  #allocation20 [shape = 's32[]', space=sflag, size = 0x4, offset = 0, fixed_abs, tag = 'sflag constant byte address 0x0 - dummy sync flag']
  #allocation21 [shape = 's32[]', space=sflag, size = 0x4, offset = 0, fixed_abs, tag = 'sflag constant byte address 0x0 - dummy sync flag']
  #allocation22 [shape = 'u32[]', space=smem, size = 0x4, offset = 0x44, fixed_abs, tag = 'smem constant byte address 0x44 - assertion arg 0']
  #allocation23 [shape = 'u32[]', space=smem, size = 0x4, offset = 0x48, fixed_abs, tag = 'smem constant byte address 0x48 - assertion arg 1']
  %s0 = inlined_call_operand.vmem [shape: s32[8,1], index: 0, kind: input, shape index: {}]
  %s1 = inlined_call_operand.hbm [shape: f32[8,108], index: 1, kind: input, shape index: {}]
  %s2 = inlined_call_operand.vmem [shape: f32[10,20], index: 2, kind: input, shape index: {}]
  %s3 = inlined_call_operand.hbm [shape: bf16[108,512], index: 3, kind: input, shape index: {}]
  %s4 = inlined_call_operand.hbm [shape: bf16[20,512], index: 4, kind: input, shape index: {}]
  %s5 = inlined_call_operand.hbm [shape: f32[3,512], index: 5, kind: input, shape index: {}]
  %s6 = inlined_call_operand.hbm [shape: bf16[512,256], index: 6, kind: input, shape index: {}]
  %s7 = inlined_call_operand.hbm [shape: f32[3,256], index: 7, kind: input, shape index: {}]
  %s8 = inlined_call_operand.hbm [shape: bf16[256,512], index: 8, kind: input, shape index: {}]
  %s9 = inlined_call_operand.hbm [shape: f32[3,512], index: 9, kind: input, shape index: {}]
  %s10 = inlined_call_operand.hbm [shape: bf16[512,1024], index: 10, kind: input, shape index: {}]
  %s11 = inlined_call_operand.hbm [shape: f32[1,1024], index: 11, kind: input, shape index: {}]
  %s12 = inlined_call_operand.hbm [shape: f32[8,1024], index: 12, kind: output, shape index: {}]
  %s13 = sld [smem:[#allocation0]]
  $region94: #{generator_forward.1} parent=0
    _
  %s15 = ssub.s32 1, %s13
  %s16 = scalar_select 0, %s15, %s13
  $region1: #{generator_forward.1} parent=0
    #allocation4 [shape = 'u8[4096]{0}', space=vmem, size = 0x1000, scoped, tag = 'input window, operand 1, single buffered']
    #allocation5 [shape = 's32[1]{0}', space=sflag, size = 0x4, scoped, tag = 'scoped memory for generator_forward.1']
    #allocation6 [shape = 's32[1]{0}', space=sflag, size = 0x4, scoped, tag = 'scoped memory for generator_forward.1']
    #allocation7 [shape = 'u8[114688]{0}', space=vmem, size = 0x1c000, scoped, tag = 'input window, operand 3, single buffered']
    #allocation8 [shape = 's32[1]{0}', space=sflag, size = 0x4, scoped, tag = 'scoped memory for generator_forward.1']
    #allocation9 [shape = 'u8[24576]{0}', space=vmem, size = 0x6000, scoped, tag = 'input window, operand 4, single buffered']
    #allocation10 [shape = 'u8[8192]{0}', space=vmem, size = 0x2000, scoped, tag = 'input window, operand 5, single buffered']
    #allocation11 [shape = 's32[1]{0}', space=sflag, size = 0x4, scoped, tag = 'scoped memory for generator_forward.1']
    #allocation12 [shape = 'u8[262144]{0}', space=vmem, size = 0x40000, scoped, tag = 'input window, operand 6, single buffered']
    #allocation13 [shape = 'u8[4096]{0}', space=vmem, size = 0x1000, scoped, tag = 'input window, operand 7, single buffered']
    #allocation14 [shape = 's32[1]{0}', space=sflag, size = 0x4, scoped, tag = 'scoped memory for generator_forward.1']
    #allocation15 [shape = 'u8[262144]{0}', space=vmem, size = 0x40000, scoped, tag = 'input window, operand 8, single buffered']
    #allocation16 [shape = 'u8[8192]{0}', space=vmem, size = 0x2000, scoped, tag = 'input window, operand 9, single buffered']
    #allocation17 [shape = 's32[1]{0}', space=sflag, size = 0x4, scoped, tag = 'scoped memory for generator_forward.1']
    #allocation18 [shape = 'u8[4096]{0}', space=vmem, size = 0x1000, scoped, tag = 'input window, operand 11, single buffered']
    #allocation19 [shape = 'u8[32768]{0}', space=vmem, size = 0x8000, scoped, tag = 'output window, operand 0, single buffered']
    %17 = vsyncpa [#allocation5], 0
    %18 = vsyncpa [#allocation8], 0
    %19 = vsyncpa [#allocation11], 0
    %20 = vsyncpa [#allocation14], 0
    %21 = vsyncpa [#allocation17], 0
    %22 = vsyncpa [#allocation6], 0
    // Predicated region
    $region2: #{generator_forward.1} parent=1 // pred_check
      _
    $region3: #{generator_forward.1} parent=1 // pred_check_branch
      %24 = sbr.rel (0) target = $region5
    $region4: #{generator_forward.1} parent=1 // pred_region
      _
    $region5: #{generator_forward.1} parent=1 // pred_fallthru
      _
    // Predicated region
    $region6: #{generator_forward.1} parent=1 // pred_check
      _
    $region7: #{generator_forward.1} parent=1 // pred_check_branch
      %26 = sbr.rel (0) target = $region9
    $region8: #{generator_forward.1} parent=1 // pred_region
      %s28 = ssub.s32 128, 128
      %29 = vsyncadd [#allocation5], %s28
      %s31 = sshll.u32 [#allocation4], 4
      %s32 = int_to_ptr.vmem [resolvable:$true] %s31
      %34 = dma.hbm_to_vmem [thread:$0]  %s1, 128, %s32, [#allocation5]
    $region9: #{generator_forward.1} parent=1 // pred_fallthru
      _
    // Predicated region
    $region10: #{generator_forward.1} parent=1 // pred_check
      _
    $region11: #{generator_forward.1} parent=1 // pred_check_branch
      %36 = sbr.rel (0) target = $region13
    $region12: #{generator_forward.1} parent=1 // pred_region
      _
    $region13: #{generator_forward.1} parent=1 // pred_fallthru
      _
    // Predicated region
    $region14: #{generator_forward.1} parent=1 // pred_check
      _
    $region15: #{generator_forward.1} parent=1 // pred_check_branch
      %38 = sbr.rel (0) target = $region17
    $region16: #{generator_forward.1} parent=1 // pred_region
      %s40 = ssub.s32 3584, 3584
      %41 = vsyncadd [#allocation8], %s40
      %s42 = sshll.u32 [#allocation7], 4
      %s43 = int_to_ptr.vmem [resolvable:$true] %s42
      %48 = dma.hbm_to_vmem [thread:$0]  %s3, 3584, %s43, [#allocation8], 256, 256, 16
    $region17: #{generator_forward.1} parent=1 // pred_fallthru
      _
    // Predicated region
    $region18: #{generator_forward.1} parent=1 // pred_check
      _
    $region19: #{generator_forward.1} parent=1 // pred_check_branch
      %50 = sbr.rel (0) target = $region21
    $region20: #{generator_forward.1} parent=1 // pred_region
      %s52 = ssub.s32 768, 768
      %53 = vsyncadd [#allocation8], %s52
      %s54 = sshll.u32 [#allocation9], 4
      %s55 = int_to_ptr.vmem [resolvable:$true] %s54
      %60 = dma.hbm_to_vmem [thread:$0]  %s4, 768, %s55, [#allocation8], 256, 256, 16
    $region21: #{generator_forward.1} parent=1 // pred_fallthru
      _
    // Predicated region
    $region22: #{generator_forward.1} parent=1 // pred_check
      _
    $region23: #{generator_forward.1} parent=1 // pred_check_branch
      %62 = sbr.rel (0) target = $region25
    $region24: #{generator_forward.1} parent=1 // pred_region
      %s64 = ssub.s32 256, 256
      %65 = vsyncadd [#allocation11], %s64
      %s67 = sshll.u32 [#allocation10], 4
      %s68 = int_to_ptr.vmem [resolvable:$true] %s67
      %70 = dma.hbm_to_vmem [thread:$0]  %s5, 256, %s68, [#allocation11]
    $region25: #{generator_forward.1} parent=1 // pred_fallthru
      _
    // Predicated region
    $region26: #{generator_forward.1} parent=1 // pred_check
      _
    $region27: #{generator_forward.1} parent=1 // pred_check_branch
      %72 = sbr.rel (0) target = $region29
    $region28: #{generator_forward.1} parent=1 // pred_region
      %s74 = ssub.s32 8192, 8192
      %75 = vsyncadd [#allocation11], %s74
      %s76 = sshll.u32 [#allocation12], 4
      %s77 = int_to_ptr.vmem [resolvable:$true] %s76
      %82 = dma.hbm_to_vmem [thread:$0]  %s6, 8192, %s77, [#allocation11], 128, 128, 8
    $region29: #{generator_forward.1} parent=1 // pred_fallthru
      _
    // Predicated region
    $region30: #{generator_forward.1} parent=1 // pred_check
      _
    $region31: #{generator_forward.1} parent=1 // pred_check_branch
      %84 = sbr.rel (0) target = $region33
    $region32: #{generator_forward.1} parent=1 // pred_region
      %s86 = ssub.s32 128, 128
      %87 = vsyncadd [#allocation14], %s86
      %s89 = sshll.u32 [#allocation13], 4
      %s90 = int_to_ptr.vmem [resolvable:$true] %s89
      %92 = dma.hbm_to_vmem [thread:$0]  %s7, 128, %s90, [#allocation14]
    $region33: #{generator_forward.1} parent=1 // pred_fallthru
      _
    // Predicated region
    $region34: #{generator_forward.1} parent=1 // pred_check
      _
    $region35: #{generator_forward.1} parent=1 // pred_check_branch
      %94 = sbr.rel (0) target = $region37
    $region36: #{generator_forward.1} parent=1 // pred_region
      %s96 = ssub.s32 8192, 8192
      %97 = vsyncadd [#allocation14], %s96
      %s98 = sshll.u32 [#allocation15], 4
      %s99 = int_to_ptr.vmem [resolvable:$true] %s98
      %104 = dma.hbm_to_vmem [thread:$0]  %s8, 8192, %s99, [#allocation14], 256, 256, 16
    $region37: #{generator_forward.1} parent=1 // pred_fallthru
      _
    // Predicated region
    $region38: #{generator_forward.1} parent=1 // pred_check
      _
    $region39: #{generator_forward.1} parent=1 // pred_check_branch
      %106 = sbr.rel (0) target = $region41
    $region40: #{generator_forward.1} parent=1 // pred_region
      %s108 = ssub.s32 256, 256
      %109 = vsyncadd [#allocation17], %s108
      %s111 = sshll.u32 [#allocation16], 4
      %s112 = int_to_ptr.vmem [resolvable:$true] %s111
      %114 = dma.hbm_to_vmem [thread:$0]  %s9, 256, %s112, [#allocation17]
    $region41: #{generator_forward.1} parent=1 // pred_fallthru
      _
    // Predicated region
    $region42: #{generator_forward.1} parent=1 // pred_check
      _
    $region43: #{generator_forward.1} parent=1 // pred_check_branch
      %116 = sbr.rel (0) target = $region45
    $region44: #{generator_forward.1} parent=1 // pred_region
      %s118 = ssub.s32 128, 128
      %119 = vsyncadd [#allocation17], %s118
      %s121 = sshll.u32 [#allocation18], 4
      %s122 = int_to_ptr.vmem [resolvable:$true] %s121
      %124 = dma.hbm_to_vmem [thread:$0]  %s11, 128, %s122, [#allocation17]
    $region45: #{generator_forward.1} parent=1 // pred_fallthru
      _
    // Predicated region
    $region46: #{generator_forward.1} parent=1 // pred_check
      _
    $region47: #{generator_forward.1} parent=1 // pred_check_branch
      %126 = sbr.rel (0) target = $region49
    $region48: #{generator_forward.1} parent=1 // pred_region
      %127 = dma.done [#allocation5], 128
    $region49: #{generator_forward.1} parent=1 // pred_fallthru
      _
    // Predicated region
    $region50: #{generator_forward.1} parent=1 // pred_check
      _
    $region51: #{generator_forward.1} parent=1 // pred_check_branch
      %129 = sbr.rel (0) target = $region53
    $region52: #{generator_forward.1} parent=1 // pred_region
      %130 = dma.done [#allocation8], 3584
    $region53: #{generator_forward.1} parent=1 // pred_fallthru
      _
    // Predicated region
    $region54: #{generator_forward.1} parent=1 // pred_check
      _
    $region55: #{generator_forward.1} parent=1 // pred_check_branch
      %132 = sbr.rel (0) target = $region57
    $region56: #{generator_forward.1} parent=1 // pred_region
      %133 = dma.done [#allocation8], 768
    $region57: #{generator_forward.1} parent=1 // pred_fallthru
      _
    // Predicated region
    $region58: #{generator_forward.1} parent=1 // pred_check
      _
    $region59: #{generator_forward.1} parent=1 // pred_check_branch
      %135 = sbr.rel (0) target = $region61
    $region60: #{generator_forward.1} parent=1 // pred_region
      %136 = dma.done [#allocation11], 256
    $region61: #{generator_forward.1} parent=1 // pred_fallthru
      _
    // Predicated region
    $region62: #{generator_forward.1} parent=1 // pred_check
      _
    $region63: #{generator_forward.1} parent=1 // pred_check_branch
      %138 = sbr.rel (0) target = $region65
    $region64: #{generator_forward.1} parent=1 // pred_region
      %139 = dma.done [#allocation11], 8192
    $region65: #{generator_forward.1} parent=1 // pred_fallthru
      _
    // Predicated region
    $region66: #{generator_forward.1} parent=1 // pred_check
      _
    $region67: #{generator_forward.1} parent=1 // pred_check_branch
      %141 = sbr.rel (0) target = $region69
    $region68: #{generator_forward.1} parent=1 // pred_region
      %142 = dma.done [#allocation14], 128
    $region69: #{generator_forward.1} parent=1 // pred_fallthru
      _
    // Predicated region
    $region70: #{generator_forward.1} parent=1 // pred_check
      _
    $region71: #{generator_forward.1} parent=1 // pred_check_branch
      %144 = sbr.rel (0) target = $region73
    $region72: #{generator_forward.1} parent=1 // pred_region
      %145 = dma.done [#allocation14], 8192
    $region73: #{generator_forward.1} parent=1 // pred_fallthru
      _
    // Predicated region
    $region74: #{generator_forward.1} parent=1 // pred_check
      _
    $region75: #{generator_forward.1} parent=1 // pred_check_branch
      %147 = sbr.rel (0) target = $region77
    $region76: #{generator_forward.1} parent=1 // pred_region
      %148 = dma.done [#allocation17], 256
    $region77: #{generator_forward.1} parent=1 // pred_fallthru
      _
    // Predicated region
    $region78: #{generator_forward.1} parent=1 // pred_check
      _
    $region79: #{generator_forward.1} parent=1 // pred_check_branch
      %150 = sbr.rel (0) target = $region81
    $region80: #{generator_forward.1} parent=1 // pred_region
      %151 = dma.done [#allocation17], 128
    $region81: #{generator_forward.1} parent=1 // pred_fallthru
      _
    // Predicated region
    $region82: #{generator_forward.1} parent=1 // pred_check
      _
    $region83: #{generator_forward.1} parent=1 // pred_check_branch
      %154 = sbr.rel target = $region85
    $region84: #{generator_forward.1} parent=1 // pred_region
      %155 = sst [smem:[#allocation22]] [#allocation21]
      %156 = sst [smem:[#allocation23]] [#allocation20]
    $region85: #{generator_forward.1} parent=1 // pred_fallthru
      _
    %158 = shalt.err (0)
    %s160 = sshll.u32 [#allocation2], 4
    %s161 = int_to_ptr.vmem [resolvable:$true] %s160
    %163 = dma.hbm_to_vmem [thread:$0]  %s10, 32768, %s161, [#allocation3]
    %v164 = vld [vmem:[%s0] sm:$0xff]
    %v165 = vlaneseq
    %v166 = vand.u32 %v165, 127
    %167 = vset.pattern.permute.xlu0 0
    %168 = vperm.xlu0 %167, %v164
    %v169 = vpop.permute.xlu0 %168
    %vm170 = vcmp.eq.s32.totalorder %v166, %v169
    %v171 = vsel %vm170, 1, 0
    %v172 = vcvt.s32.f32 %v171
    %v173 = vld [vmem:[%s2] sm:$0xff]
    %v174 = vld [vmem:[%s2 + $0x8] sm:$0x3]
    %vm175 = vcmask 80896
    %v177 = vsel %vm175, %v172, 0
    %vm179 = vcmask 1041408
    %v181 = vsel %vm179, %v174, 0
    %183 = vmatprep.subr.mxu0 0.0
    %184 = vmatpush1.msra.mxu0 0.0
    %185 = vmatprep.subr.mxu0 0.0
    %186 = vmatpush1.msra.mxu0 0.0
    %187 = vmatprep.subr.mxu0 0.0
    %188 = vmatpush1.msra.mxu0 0.0
    %189 = vmatprep.subr.mxu0 0.0
    %190 = vmatpush1.msra.mxu0 0.0
    %191 = vmatprep.subr.mxu0 0.0
    %192 = vmatpush1.msra.mxu0 0.0
    %193 = vmatprep.subr.mxu0 0.0
    %194 = vmatpush1.msra.mxu0 0.0
    %195 = vmatprep.subr.mxu0 0.0
    %196 = vmatpush1.msra.mxu0 0.0
    %197 = vmatprep.subr.mxu0 0.0
    %198 = vmatpush1.msra.mxu0 0.0
    %199 = vmatprep.subr.mxu0 0.0
    %200 = vmatpush1.msra.mxu0 0.0
    %201 = vmatprep.subr.mxu0 0.0
    %202 = vmatpush1.msra.mxu0 0.0
    %203 = vmatprep.subr.mxu0 0.0
    %204 = vmatpush1.msra.mxu0 0.0
    %205 = vmatprep.subr.mxu0 0.0
    %206 = vmatpush1.msra.mxu0 0.0
    %207 = vmatprep.subr.mxu0 0.0
    %208 = vmatpush1.msra.mxu0 0.0
    %209 = vmatprep.subr.mxu0 0.0
    %210 = vmatpush1.msra.mxu0 0.0
    %211 = vmatprep.subr.mxu0 0.0
    %212 = vmatpush1.msra.mxu0 %v181
    %213 = vmatprep.subr.mxu0 0.0
    %214 = vmatpush1.msra.mxu0 %v173
    %215 = vmatprep.subr.mxu0 0.0
    %216 = vmatpush2.msra.mxu0 0.0
    %217 = vmatprep.subr.mxu0 0.0
    %218 = vmatpush2.msra.mxu0 0.0
    %219 = vmatprep.subr.mxu0 0.0
    %220 = vmatpush2.msra.mxu0 0.0
    %221 = vmatprep.subr.mxu0 0.0
    %222 = vmatpush2.msra.mxu0 0.0
    %223 = vmatprep.subr.mxu0 0.0
    %224 = vmatpush2.msra.mxu0 0.0
    %225 = vmatprep.subr.mxu0 0.0
    %226 = vmatpush2.msra.mxu0 0.0
    %227 = vmatprep.subr.mxu0 0.0
    %228 = vmatpush2.msra.mxu0 0.0
    %229 = vmatprep.subr.mxu0 0.0
    %230 = vmatpush2.msra.mxu0 0.0
    %231 = vmatprep.subr.mxu0 0.0
    %232 = vmatpush2.msra.mxu0 0.0
    %233 = vmatprep.subr.mxu0 0.0
    %234 = vmatpush2.msra.mxu0 0.0
    %235 = vmatprep.subr.mxu0 0.0
    %236 = vmatpush2.msra.mxu0 0.0
    %237 = vmatprep.subr.mxu0 0.0
    %238 = vmatpush2.msra.mxu0 0.0
    %239 = vmatprep.subr.mxu0 0.0
    %240 = vmatpush2.msra.mxu0 0.0
    %241 = vmatprep.subr.mxu0 0.0
    %242 = vmatpush2.msra.mxu0 0.0
    %243 = vmatprep.subr.mxu0 0.0
    %244 = vmatpush2.msra.mxu0 0.0
    %245 = vmatprep.subr.mxu0 0.0
    %246 = vmatpush2.msra.mxu0 0.0
    %247 = vmatprep.mubr.f32.mxu0 0.0
    %248 = vmatmul.mubr.f32.gmra.mxu0 %v177
    %v249 = vpop.f32.mrf.mxu0
    %v250 = vadd.f32 0.0, %v249
    %v251 = vpop.f32.mrf.mxu0
    %252 = vdwg.mxu0
    %v253 = vld [vmem:[#allocation4] sm:$0xff]
    %v254 = vpack.c.bf16 %v253, %v253
    %v255 = vld [vmem:[#allocation7] sm:$0xff]
    %v256 = vld [vmem:[#allocation7 + $0x8] sm:$0xff]
    %v257 = vld [vmem:[#allocation7 + $0x10] sm:$0xff]
    %v258 = vld [vmem:[#allocation7 + $0x18] sm:$0xff]
    %v259 = vld [vmem:[#allocation7 + $0x20] sm:$0xff]
    %v260 = vld [vmem:[#allocation7 + $0x28] sm:$0xff]
    %v261 = vld [vmem:[#allocation7 + $0x30] sm:$0xff]
    %v262 = vld [vmem:[#allocation7 + $0x38] sm:$0xff]
    %v263 = vld [vmem:[#allocation7 + $0x40] sm:$0xff]
    %v264 = vld [vmem:[#allocation7 + $0x48] sm:$0xff]
    %v265 = vld [vmem:[#allocation7 + $0x50] sm:$0xff]
    %v266 = vld [vmem:[#allocation7 + $0x58] sm:$0xff]
    %v267 = vld [vmem:[#allocation7 + $0x60] sm:$0xff]
    %v268 = vld [vmem:[#allocation7 + $0x68] sm:$0xff]
    %v269 = vld [vmem:[#allocation7 + $0x70] sm:$0xff]
    %v270 = vld [vmem:[#allocation7 + $0x78] sm:$0xff]
    %v271 = vld [vmem:[#allocation7 + $0x80] sm:$0xff]
    %v272 = vld [vmem:[#allocation7 + $0x88] sm:$0xff]
    %v273 = vld [vmem:[#allocation7 + $0x90] sm:$0xff]
    %v274 = vld [vmem:[#allocation7 + $0x98] sm:$0xff]
    %v275 = vld [vmem:[#allocation7 + $0xa0] sm:$0xff]
    %v276 = vld [vmem:[#allocation7 + $0xa8] sm:$0xff]
    %v277 = vld [vmem:[#allocation7 + $0xb0] sm:$0xff]
    %v278 = vld [vmem:[#allocation7 + $0xb8] sm:$0xff]
    %v279 = vld [vmem:[#allocation7 + $0xc0] sm:$0xff]
    %v280 = vld [vmem:[#allocation7 + $0xc8] sm:$0xff]
    %v281 = vld [vmem:[#allocation7 + $0xd0] sm:$0x33]
    %v282 = vld [vmem:[#allocation7 + $0xd8] sm:$0x33]
    %v283 = vpack.c.bf16 %v250, %v250
    %v284 = vld [vmem:[#allocation9] sm:$0xff]
    %v285 = vld [vmem:[#allocation9 + $0x8] sm:$0xff]
    %v286 = vld [vmem:[#allocation9 + $0x10] sm:$0xff]
    %v287 = vld [vmem:[#allocation9 + $0x18] sm:$0xff]
    %v288 = vld [vmem:[#allocation9 + $0x20] sm:$0x33]
    %v289 = vld [vmem:[#allocation9 + $0x28] sm:$0x33]
    %v296 = vunpack.c.l.b16 %v284
    %v297 = vunpack.c.h.b16 %v284
    %v298 = vunpack.c.l.b16 %v285
    %v299 = vunpack.c.h.b16 %v285
    %v300 = vunpack.c.l.b16 %v286
    %v301 = vunpack.c.h.b16 %v286
    %v302 = vunpack.c.l.b16 %v287
    %v303 = vunpack.c.h.b16 %v287
    %v304 = vunpack.c.l.b16 %v288
    %v305 = vunpack.c.h.b16 %v288
    %v306 = vunpack.c.l.b16 %v289
    %v307 = vunpack.c.h.b16 %v289
    %v308 = vpack.c.b16 %v300, %v296
    %v309 = vpack.c.b16 %v301, %v297
    %v310 = vpack.c.b16 %v302, %v298
    %v311 = vpack.c.b16 %v303, %v299
    %v312 = vpack.c.b16 %v304, %v304
    %v313 = vpack.c.b16 %v305, %v305
    %v314 = vpack.c.b16 %v306, %v306
    %v315 = vpack.c.b16 %v307, %v307
    %vm320 = vcmask 162816
    %v322 = vsel %vm320, %v283, 0
    %v325 = vsel %vm179, %v312, 0
    %v328 = vsel %vm179, %v313, 0
    %v331 = vsel %vm179, %v314, 0
    %v334 = vsel %vm179, %v315, 0
    %336 = vmatprep.subr.bf16.mxu0 0
    %337 = vmatpush1.bf16.msra.mxu0 0
    %338 = vmatprep.subr.bf16.mxu0 0
    %339 = vmatpush1.bf16.msra.mxu0 0
    %340 = vmatprep.subr.bf16.mxu0 0
    %341 = vmatpush1.bf16.msra.mxu0 0
    %342 = vmatprep.subr.bf16.mxu0 0
    %343 = vmatpush1.bf16.msra.mxu0 0
    %344 = vmatprep.subr.bf16.mxu0 0
    %345 = vmatpush1.bf16.msra.mxu0 0
    %346 = vmatprep.subr.bf16.mxu0 0
    %347 = vmatpush1.bf16.msra.mxu0 0
    %348 = vmatprep.subr.bf16.mxu0 %v328
    %349 = vmatpush1.bf16.msra.mxu0 %v325
    %350 = vmatprep.subr.bf16.mxu0 %v309
    %351 = vmatpush1.bf16.msra.mxu0 %v308
    %352 = vmatprep.subr.bf16.mxu0 0
    %353 = vmatpush2.bf16.msra.mxu0 0
    %354 = vmatprep.subr.bf16.mxu0 0
    %355 = vmatpush2.bf16.msra.mxu0 0
    %356 = vmatprep.subr.bf16.mxu0 0
    %357 = vmatpush2.bf16.msra.mxu0 0
    %358 = vmatprep.subr.bf16.mxu0 0
    %359 = vmatpush2.bf16.msra.mxu0 0
    %360 = vmatprep.subr.bf16.mxu0 0
    %361 = vmatpush2.bf16.msra.mxu0 0
    %362 = vmatprep.subr.bf16.mxu0 0
    %363 = vmatpush2.bf16.msra.mxu0 0
    %364 = vmatprep.subr.bf16.mxu0 0
    %365 = vmatpush2.bf16.msra.mxu0 0
    %366 = vmatprep.subr.bf16.mxu0 0
    %367 = vmatpush2.bf16.msra.mxu0 0
    %368 = vmatprep.mubr.bf16.mxu0 0
    %369 = vmatmul.mubr.bf16.gmra.mxu0 %v322
    %v370 = vpop.f32.mrf.mxu0
    %v371 = vadd.f32 0.0, %v370
    %v372 = vpop.f32.mrf.mxu0
    %v373 = vadd.f32 0.0, %v372
    %v374 = vpop.f32.mrf.mxu0
    %v375 = vpop.f32.mrf.mxu0
    %376 = vdwg.mxu0
    %377 = vmatprep.subr.bf16.mxu0 0
    %378 = vmatpush1.bf16.msra.mxu0 0
    %379 = vmatprep.subr.bf16.mxu0 0
    %380 = vmatpush1.bf16.msra.mxu0 0
    %381 = vmatprep.subr.bf16.mxu0 0
    %382 = vmatpush1.bf16.msra.mxu0 0
    %383 = vmatprep.subr.bf16.mxu0 0
    %384 = vmatpush1.bf16.msra.mxu0 0
    %385 = vmatprep.subr.bf16.mxu0 0
    %386 = vmatpush1.bf16.msra.mxu0 0
    %387 = vmatprep.subr.bf16.mxu0 0
    %388 = vmatpush1.bf16.msra.mxu0 0
    %389 = vmatprep.subr.bf16.mxu0 %v334
    %390 = vmatpush1.bf16.msra.mxu0 %v331
    %391 = vmatprep.subr.bf16.mxu0 %v311
    %392 = vmatpush1.bf16.msra.mxu0 %v310
    %393 = vmatprep.subr.bf16.mxu0 0
    %394 = vmatpush2.bf16.msra.mxu0 0
    %395 = vmatprep.subr.bf16.mxu0 0
    %396 = vmatpush2.bf16.msra.mxu0 0
    %397 = vmatprep.subr.bf16.mxu0 0
    %398 = vmatpush2.bf16.msra.mxu0 0
    %399 = vmatprep.subr.bf16.mxu0 0
    %400 = vmatpush2.bf16.msra.mxu0 0
    %401 = vmatprep.subr.bf16.mxu0 0
    %402 = vmatpush2.bf16.msra.mxu0 0
    %403 = vmatprep.subr.bf16.mxu0 0
    %404 = vmatpush2.bf16.msra.mxu0 0
    %405 = vmatprep.subr.bf16.mxu0 0
    %406 = vmatpush2.bf16.msra.mxu0 0
    %407 = vmatprep.subr.bf16.mxu0 0
    %408 = vmatpush2.bf16.msra.mxu0 0
    %409 = vmatprep.mubr.bf16.mxu0 0
    %410 = vmatmul.mubr.bf16.gmra.mxu0 %v322
    %v411 = vpop.f32.mrf.mxu0
    %v412 = vadd.f32 0.0, %v411
    %v413 = vpop.f32.mrf.mxu0
    %v414 = vadd.f32 0.0, %v413
    %v415 = vpop.f32.mrf.mxu0
    %v416 = vpop.f32.mrf.mxu0
    %417 = vdwg.mxu0
    %v446 = vunpack.c.l.b16 %v255
    %v447 = vunpack.c.h.b16 %v255
    %v448 = vunpack.c.l.b16 %v256
    %v449 = vunpack.c.h.b16 %v256
    %v450 = vunpack.c.l.b16 %v257
    %v451 = vunpack.c.h.b16 %v257
    %v452 = vunpack.c.l.b16 %v258
    %v453 = vunpack.c.h.b16 %v258
    %v454 = vunpack.c.l.b16 %v259
    %v455 = vunpack.c.h.b16 %v259
    %v456 = vunpack.c.l.b16 %v260
    %v457 = vunpack.c.h.b16 %v260
    %v458 = vunpack.c.l.b16 %v261
    %v459 = vunpack.c.h.b16 %v261
    %v460 = vunpack.c.l.b16 %v262
    %v461 = vunpack.c.h.b16 %v262
    %v462 = vunpack.c.l.b16 %v263
    %v463 = vunpack.c.h.b16 %v263
    %v464 = vunpack.c.l.b16 %v264
    %v465 = vunpack.c.h.b16 %v264
    %v466 = vunpack.c.l.b16 %v265
    %v467 = vunpack.c.h.b16 %v265
    %v468 = vunpack.c.l.b16 %v266
    %v469 = vunpack.c.h.b16 %v266
    %v470 = vunpack.c.l.b16 %v267
    %v471 = vunpack.c.h.b16 %v267
    %v472 = vunpack.c.l.b16 %v268
    %v473 = vunpack.c.h.b16 %v268
    %v474 = vunpack.c.l.b16 %v269
    %v475 = vunpack.c.h.b16 %v269
    %v476 = vunpack.c.l.b16 %v270
    %v477 = vunpack.c.h.b16 %v270
    %v478 = vunpack.c.l.b16 %v271
    %v479 = vunpack.c.h.b16 %v271
    %v480 = vunpack.c.l.b16 %v272
    %v481 = vunpack.c.h.b16 %v272
    %v482 = vunpack.c.l.b16 %v273
    %v483 = vunpack.c.h.b16 %v273
    %v484 = vunpack.c.l.b16 %v274
    %v485 = vunpack.c.h.b16 %v274
    %v486 = vunpack.c.l.b16 %v275
    %v487 = vunpack.c.h.b16 %v275
    %v488 = vunpack.c.l.b16 %v276
    %v489 = vunpack.c.h.b16 %v276
    %v490 = vunpack.c.l.b16 %v277
    %v491 = vunpack.c.h.b16 %v277
    %v492 = vunpack.c.l.b16 %v278
    %v493 = vunpack.c.h.b16 %v278
    %v494 = vunpack.c.l.b16 %v279
    %v495 = vunpack.c.h.b16 %v279
    %v496 = vunpack.c.l.b16 %v280
    %v497 = vunpack.c.h.b16 %v280
    %v498 = vunpack.c.l.b16 %v281
    %v499 = vunpack.c.h.b16 %v281
    %v500 = vunpack.c.l.b16 %v282
    %v501 = vunpack.c.h.b16 %v282
    %v502 = vpack.c.b16 %v450, %v446
    %v503 = vpack.c.b16 %v451, %v447
    %v504 = vpack.c.b16 %v452, %v448
    %v505 = vpack.c.b16 %v453, %v449
    %v506 = vpack.c.b16 %v458, %v454
    %v507 = vpack.c.b16 %v459, %v455
    %v508 = vpack.c.b16 %v460, %v456
    %v509 = vpack.c.b16 %v461, %v457
    %v510 = vpack.c.b16 %v466, %v462
    %v511 = vpack.c.b16 %v467, %v463
    %v512 = vpack.c.b16 %v468, %v464
    %v513 = vpack.c.b16 %v469, %v465
    %v514 = vpack.c.b16 %v474, %v470
    %v515 = vpack.c.b16 %v475, %v471
    %v516 = vpack.c.b16 %v476, %v472
    %v517 = vpack.c.b16 %v477, %v473
    %v518 = vpack.c.b16 %v482, %v478
    %v519 = vpack.c.b16 %v483, %v479
    %v520 = vpack.c.b16 %v484, %v480
    %v521 = vpack.c.b16 %v485, %v481
    %v522 = vpack.c.b16 %v490, %v486
    %v523 = vpack.c.b16 %v491, %v487
    %v524 = vpack.c.b16 %v492, %v488
    %v525 = vpack.c.b16 %v493, %v489
    %v526 = vpack.c.b16 %v498, %v494
    %v527 = vpack.c.b16 %v499, %v495
    %v528 = vpack.c.b16 %v500, %v496
    %v529 = vpack.c.b16 %v501, %v497
    %vm554 = vcmask 883712
    %v556 = vsel %vm554, %v254, 0
    %vm558 = vcmask 1045504
    %v560 = vsel %vm558, %v526, 0
    %v563 = vsel %vm558, %v527, 0
    %v566 = vsel %vm558, %v528, 0
    %v569 = vsel %vm558, %v529, 0
    %571 = vmatprep.subr.bf16.mxu0 0
    %572 = vmatpush1.bf16.msra.mxu0 0
    %573 = vmatprep.subr.bf16.mxu0 %v563
    %574 = vmatpush1.bf16.msra.mxu0 %v560
    %575 = vmatprep.subr.bf16.mxu0 %v523
    %576 = vmatpush1.bf16.msra.mxu0 %v522
    %577 = vmatprep.subr.bf16.mxu0 %v519
    %578 = vmatpush1.bf16.msra.mxu0 %v518
    %579 = vmatprep.subr.bf16.mxu0 %v515
    %580 = vmatpush1.bf16.msra.mxu0 %v514
    %581 = vmatprep.subr.bf16.mxu0 %v511
    %582 = vmatpush1.bf16.msra.mxu0 %v510
    %583 = vmatprep.subr.bf16.mxu0 %v507
    %584 = vmatpush1.bf16.msra.mxu0 %v506
    %585 = vmatprep.subr.bf16.mxu0 %v503
    %586 = vmatpush1.bf16.msra.mxu0 %v502
    %587 = vmatprep.subr.bf16.mxu0 0
    %588 = vmatpush2.bf16.msra.mxu0 0
    %589 = vmatprep.subr.bf16.mxu0 0
    %590 = vmatpush2.bf16.msra.mxu0 0
    %591 = vmatprep.subr.bf16.mxu0 0
    %592 = vmatpush2.bf16.msra.mxu0 0
    %593 = vmatprep.subr.bf16.mxu0 0
    %594 = vmatpush2.bf16.msra.mxu0 0
    %595 = vmatprep.subr.bf16.mxu0 0
    %596 = vmatpush2.bf16.msra.mxu0 0
    %597 = vmatprep.subr.bf16.mxu0 0
    %598 = vmatpush2.bf16.msra.mxu0 0
    %599 = vmatprep.subr.bf16.mxu0 0
    %600 = vmatpush2.bf16.msra.mxu0 0
    %601 = vmatprep.subr.bf16.mxu0 0
    %602 = vmatpush2.bf16.msra.mxu0 0
    %603 = vmatprep.mubr.bf16.mxu0 0
    %604 = vmatmul.mubr.bf16.gmra.mxu0 %v556
    %v605 = vpop.f32.mrf.mxu0
    %v606 = vadd.f32 %v371, %v605
    %v607 = vpop.f32.mrf.mxu0
    %v608 = vadd.f32 %v373, %v607
    %v609 = vpop.f32.mrf.mxu0
    %v610 = vpop.f32.mrf.mxu0
    %611 = vdwg.mxu0
    %612 = vmatprep.subr.bf16.mxu0 0
    %613 = vmatpush1.bf16.msra.mxu0 0
    %614 = vmatprep.subr.bf16.mxu0 %v569
    %615 = vmatpush1.bf16.msra.mxu0 %v566
    %616 = vmatprep.subr.bf16.mxu0 %v525
    %617 = vmatpush1.bf16.msra.mxu0 %v524
    %618 = vmatprep.subr.bf16.mxu0 %v521
    %619 = vmatpush1.bf16.msra.mxu0 %v520
    %620 = vmatprep.subr.bf16.mxu0 %v517
    %621 = vmatpush1.bf16.msra.mxu0 %v516
    %622 = vmatprep.subr.bf16.mxu0 %v513
    %623 = vmatpush1.bf16.msra.mxu0 %v512
    %624 = vmatprep.subr.bf16.mxu0 %v509
    %625 = vmatpush1.bf16.msra.mxu0 %v508
    %626 = vmatprep.subr.bf16.mxu0 %v505
    %627 = vmatpush1.bf16.msra.mxu0 %v504
    %628 = vmatprep.subr.bf16.mxu0 0
    %629 = vmatpush2.bf16.msra.mxu0 0
    %630 = vmatprep.subr.bf16.mxu0 0
    %631 = vmatpush2.bf16.msra.mxu0 0
    %632 = vmatprep.subr.bf16.mxu0 0
    %633 = vmatpush2.bf16.msra.mxu0 0
    %634 = vmatprep.subr.bf16.mxu0 0
    %635 = vmatpush2.bf16.msra.mxu0 0
    %636 = vmatprep.subr.bf16.mxu0 0
    %637 = vmatpush2.bf16.msra.mxu0 0
    %638 = vmatprep.subr.bf16.mxu0 0
    %639 = vmatpush2.bf16.msra.mxu0 0
    %640 = vmatprep.subr.bf16.mxu0 0
    %641 = vmatpush2.bf16.msra.mxu0 0
    %642 = vmatprep.subr.bf16.mxu0 0
    %643 = vmatpush2.bf16.msra.mxu0 0
    %644 = vmatprep.mubr.bf16.mxu0 0
    %645 = vmatmul.mubr.bf16.gmra.mxu0 %v556
    %v646 = vpop.f32.mrf.mxu0
    %v647 = vadd.f32 %v412, %v646
    %v648 = vpop.f32.mrf.mxu0
    %v649 = vadd.f32 %v414, %v648
    %v650 = vpop.f32.mrf.mxu0
    %v651 = vpop.f32.mrf.mxu0
    %652 = vdwg.mxu0
    %v653 = vld [vmem:[#allocation10] ss:$4 sm:$0xf]
    %v655 = vlaneseq
    %v656 = vshrl.u32 %v655, 7
    %v657 = vsub.s32 0, %v656
    %v658 = vrot.slane %v653, %v657
    %v659 = vlaneseq
    %v660 = vshrl.u32 %v659, 7
    %v661 = vsub.s32 1, %v660
    %v662 = vrot.slane %v653, %v661
    %v663 = vlaneseq
    %v664 = vshrl.u32 %v663, 7
    %v665 = vsub.s32 2, %v664
    %v666 = vrot.slane %v653, %v665
    %v667 = vlaneseq
    %v668 = vshrl.u32 %v667, 7
    %v669 = vsub.s32 3, %v668
    %v670 = vrot.slane %v653, %v669
    %v675 = vadd.f32 %v606, %v658
    %v676 = vadd.f32 %v608, %v662
    %v677 = vadd.f32 %v647, %v666
    %v678 = vadd.f32 %v649, %v670
    %v679 = vrot.slane %v675, 4
    %v680 = vadd.f32 %v675, %v679
    %v681 = vrot.slane %v680, 2
    %v682 = vadd.f32 %v680, %v681
    %v683 = vrot.slane %v682, 1
    %v684 = vadd.f32 %v682, %v683
    %v685 = vrot.slane %v676, 4
    %v686 = vadd.f32 %v676, %v685
    %v687 = vrot.slane %v686, 2
    %v688 = vadd.f32 %v686, %v687
    %v689 = vrot.slane %v688, 1
    %v690 = vadd.f32 %v688, %v689
    %v691 = vrot.slane %v677, 4
    %v692 = vadd.f32 %v677, %v691
    %v693 = vrot.slane %v692, 2
    %v694 = vadd.f32 %v692, %v693
    %v695 = vrot.slane %v694, 1
    %v696 = vadd.f32 %v694, %v695
    %v697 = vrot.slane %v678, 4
    %v698 = vadd.f32 %v678, %v697
    %v699 = vrot.slane %v698, 2
    %v700 = vadd.f32 %v698, %v699
    %v701 = vrot.slane %v700, 1
    %v702 = vadd.f32 %v700, %v701
    %v703 = vmul.f32 %v675, %v675
    %v704 = vmul.f32 %v676, %v676
    %v705 = vmul.f32 %v677, %v677
    %v706 = vmul.f32 %v678, %v678
    %v707 = vrot.slane %v703, 4
    %v708 = vadd.f32 %v703, %v707
    %v709 = vrot.slane %v708, 2
    %v710 = vadd.f32 %v708, %v709
    %v711 = vrot.slane %v710, 1
    %v712 = vadd.f32 %v710, %v711
    %v713 = vrot.slane %v704, 4
    %v714 = vadd.f32 %v704, %v713
    %v715 = vrot.slane %v714, 2
    %v716 = vadd.f32 %v714, %v715
    %v717 = vrot.slane %v716, 1
    %v718 = vadd.f32 %v716, %v717
    %v719 = vrot.slane %v705, 4
    %v720 = vadd.f32 %v705, %v719
    %v721 = vrot.slane %v720, 2
    %v722 = vadd.f32 %v720, %v721
    %v723 = vrot.slane %v722, 1
    %v724 = vadd.f32 %v722, %v723
    %v725 = vrot.slane %v706, 4
    %v726 = vadd.f32 %v706, %v725
    %v727 = vrot.slane %v726, 2
    %v728 = vadd.f32 %v726, %v727
    %v729 = vrot.slane %v728, 1
    %v730 = vadd.f32 %v728, %v729
    %v731 = vmul.f32 %v684, 0.125
    %v732 = vmul.f32 %v690, 0.125
    %v733 = vmul.f32 %v696, 0.125
    %v734 = vmul.f32 %v702, 0.125
    %v735 = vmul.f32 %v712, 0.125
    %v736 = vmul.f32 %v718, 0.125
    %v737 = vmul.f32 %v724, 0.125
    %v738 = vmul.f32 %v730, 0.125
    %v739 = vmul.f32 %v731, %v731
    %v740 = vmul.f32 %v732, %v732
    %v741 = vmul.f32 %v733, %v733
    %v742 = vmul.f32 %v734, %v734
    %v743 = vsub.f32 %v735, %v739
    %v744 = vsub.f32 %v736, %v740
    %v745 = vsub.f32 %v737, %v741
    %v746 = vsub.f32 %v738, %v742
    %s747 = scalar_lea.vmem [#allocation10], 1
    %v748 = vld [vmem:[%s747] ss:$4 sm:$0xf]
    %v749 = vadd.f32 %v743, 0.8
    %v750 = vadd.f32 %v744, 0.8
    %v751 = vadd.f32 %v745, 0.8
    %v752 = vadd.f32 %v746, 0.8
    %v753 = vrsqrt.pop %v749
    %v754 = vrsqrt.pop %v750
    %v755 = vrsqrt.pop %v751
    %v756 = vrsqrt.pop %v752
    %v761 = vcombine.low %v753, %v754
    %v762 = vcombine.low %v755, %v756
    %v764 = vunpack.c.l.s4 1966171168
    %v765 = vunpack.c.0.s8 %v764
    %v766 = vlaneseq
    %v767 = vshrl.u32 %v766, 7
    %v768 = vsub.s32 %v765, %v767
    %v769 = vrot.slane %v761, %v768
    %v771 = vunpack.c.l.s4 1966171168
    %v772 = vunpack.c.0.s8 %v771
    %v773 = vlaneseq
    %v774 = vshrl.u32 %v773, 7
    %v775 = vsub.s32 %v772, %v774
    %v776 = vrot.slane %v762, %v775
    %v777 = vcombine.low %v769, %v776
    %v779 = vunpack.c.l.s4 1966171168
    %v780 = vunpack.c.0.s8 %v779
    %v781 = vlaneseq
    %v782 = vshrl.u32 %v781, 7
    %v783 = vsub.s32 %v780, %v782
    %v784 = vrot.slane %v777, %v783
    %v786 = vmul.f32 %v748, %v784
    %s787 = scalar_lea.vmem [#allocation10], 2
    %v788 = vld [vmem:[%s787] ss:$4 sm:$0xf]
    %v790 = vlaneseq
    %v791 = vshrl.u32 %v790, 7
    %v792 = vsub.s32 0, %v791
    %v793 = vrot.slane %v786, %v792
    %v794 = vlaneseq
    %v795 = vshrl.u32 %v794, 7
    %v796 = vsub.s32 1, %v795
    %v797 = vrot.slane %v786, %v796
    %v798 = vlaneseq
    %v799 = vshrl.u32 %v798, 7
    %v800 = vsub.s32 2, %v799
    %v801 = vrot.slane %v786, %v800
    %v802 = vlaneseq
    %v803 = vshrl.u32 %v802, 7
    %v804 = vsub.s32 3, %v803
    %v805 = vrot.slane %v786, %v804
    %v810 = vmul.f32 %v731, %v793
    %v811 = vmul.f32 %v732, %v797
    %v812 = vmul.f32 %v733, %v801
    %v813 = vmul.f32 %v734, %v805
    %v818 = vcombine.low %v810, %v811
    %v819 = vcombine.low %v812, %v813
    %v821 = vunpack.c.l.s4 1966171168
    %v822 = vunpack.c.0.s8 %v821
    %v823 = vlaneseq
    %v824 = vshrl.u32 %v823, 7
    %v825 = vsub.s32 %v822, %v824
    %v826 = vrot.slane %v818, %v825
    %v828 = vunpack.c.l.s4 1966171168
    %v829 = vunpack.c.0.s8 %v828
    %v830 = vlaneseq
    %v831 = vshrl.u32 %v830, 7
    %v832 = vsub.s32 %v829, %v831
    %v833 = vrot.slane %v819, %v832
    %v834 = vcombine.low %v826, %v833
    %v836 = vunpack.c.l.s4 1966171168
    %v837 = vunpack.c.0.s8 %v836
    %v838 = vlaneseq
    %v839 = vshrl.u32 %v838, 7
    %v840 = vsub.s32 %v837, %v839
    %v841 = vrot.slane %v834, %v840
    %v843 = vsub.f32 %v788, %v841
    %v844 = vmul.f32 %v675, %v793
    %v845 = vmul.f32 %v676, %v797
    %v846 = vmul.f32 %v677, %v801
    %v847 = vmul.f32 %v678, %v805
    %v849 = vlaneseq
    %v850 = vshrl.u32 %v849, 7
    %v851 = vsub.s32 0, %v850
    %v852 = vrot.slane %v843, %v851
    %v853 = vlaneseq
    %v854 = vshrl.u32 %v853, 7
    %v855 = vsub.s32 1, %v854
    %v856 = vrot.slane %v843, %v855
    %v857 = vlaneseq
    %v858 = vshrl.u32 %v857, 7
    %v859 = vsub.s32 2, %v858
    %v860 = vrot.slane %v843, %v859
    %v861 = vlaneseq
    %v862 = vshrl.u32 %v861, 7
    %v863 = vsub.s32 3, %v862
    %v864 = vrot.slane %v843, %v863
    %v869 = vadd.f32 %v844, %v852
    %v870 = vadd.f32 %v845, %v856
    %v871 = vadd.f32 %v846, %v860
    %v872 = vadd.f32 %v847, %v864
    %vm873 = vcmp.gt.f32.partialorder %v869, 0.0
    %vm874 = vcmp.gt.f32.partialorder %v870, 0.0
    %vm875 = vcmp.gt.f32.partialorder %v871, 0.0
    %vm876 = vcmp.gt.f32.partialorder %v872, 0.0
    %v877 = vmul.f32 %v869, 0.2
    %v878 = vmul.f32 %v870, 0.2
    %v879 = vmul.f32 %v871, 0.2
    %v880 = vmul.f32 %v872, 0.2
    %v881 = vsel %vm873, %v869, %v877
    %v882 = vsel %vm874, %v870, %v878
    %v883 = vsel %vm875, %v871, %v879
    %v884 = vsel %vm876, %v872, %v880
    %v885 = vpack.c.bf16 %v881, %v881
    %v886 = vpack.c.bf16 %v882, %v882
    %v887 = vpack.c.bf16 %v883, %v883
    %v888 = vpack.c.bf16 %v884, %v884
    %v889 = vld [vmem:[#allocation13] ss:$4 sm:$0x3]
    %v890 = vld [vmem:[#allocation12] sm:$0xff]
    %v891 = vld [vmem:[#allocation12 + $0x8] sm:$0xff]
    %v892 = vld [vmem:[#allocation12 + $0x10] sm:$0xff]
    %v893 = vld [vmem:[#allocation12 + $0x18] sm:$0xff]
    %v894 = vld [vmem:[#allocation12 + $0x20] sm:$0xff]
    %v895 = vld [vmem:[#allocation12 + $0x28] sm:$0xff]
    %v896 = vld [vmem:[#allocation12 + $0x30] sm:$0xff]
    %v897 = vld [vmem:[#allocation12 + $0x38] sm:$0xff]
    %v898 = vld [vmem:[#allocation12 + $0x40] sm:$0xff]
    %v899 = vld [vmem:[#allocation12 + $0x48] sm:$0xff]
    %v900 = vld [vmem:[#allocation12 + $0x50] sm:$0xff]
    %v901 = vld [vmem:[#allocation12 + $0x58] sm:$0xff]
    %v902 = vld [vmem:[#allocation12 + $0x60] sm:$0xff]
    %v903 = vld [vmem:[#allocation12 + $0x68] sm:$0xff]
    %v904 = vld [vmem:[#allocation12 + $0x70] sm:$0xff]
    %v905 = vld [vmem:[#allocation12 + $0x78] sm:$0xff]
    %v906 = vld [vmem:[#allocation12 + $0x80] sm:$0xff]
    %v907 = vld [vmem:[#allocation12 + $0x88] sm:$0xff]
    %v908 = vld [vmem:[#allocation12 + $0x90] sm:$0xff]
    %v909 = vld [vmem:[#allocation12 + $0x98] sm:$0xff]
    %v910 = vld [vmem:[#allocation12 + $0xa0] sm:$0xff]
    %v911 = vld [vmem:[#allocation12 + $0xa8] sm:$0xff]
    %v912 = vld [vmem:[#allocation12 + $0xb0] sm:$0xff]
    %v913 = vld [vmem:[#allocation12 + $0xb8] sm:$0xff]
    %v914 = vld [vmem:[#allocation12 + $0xc0] sm:$0xff]
    %v915 = vld [vmem:[#allocation12 + $0xc8] sm:$0xff]
    %v916 = vld [vmem:[#allocation12 + $0xd0] sm:$0xff]
    %v917 = vld [vmem:[#allocation12 + $0xd8] sm:$0xff]
    %v918 = vld [vmem:[#allocation12 + $0xe0] sm:$0xff]
    %v919 = vld [vmem:[#allocation12 + $0xe8] sm:$0xff]
    %v920 = vld [vmem:[#allocation12 + $0xf0] sm:$0xff]
    %v921 = vld [vmem:[#allocation12 + $0xf8] sm:$0xff]
    %v922 = vld [vmem:[#allocation12 + $0x100] sm:$0xff]
    %v923 = vld [vmem:[#allocation12 + $0x108] sm:$0xff]
    %v924 = vld [vmem:[#allocation12 + $0x110] sm:$0xff]
    %v925 = vld [vmem:[#allocation12 + $0x118] sm:$0xff]
    %v926 = vld [vmem:[#allocation12 + $0x120] sm:$0xff]
    %v927 = vld [vmem:[#allocation12 + $0x128] sm:$0xff]
    %v928 = vld [vmem:[#allocation12 + $0x130] sm:$0xff]
    %v929 = vld [vmem:[#allocation12 + $0x138] sm:$0xff]
    %v930 = vld [vmem:[#allocation12 + $0x140] sm:$0xff]
    %v931 = vld [vmem:[#allocation12 + $0x148] sm:$0xff]
    %v932 = vld [vmem:[#allocation12 + $0x150] sm:$0xff]
    %v933 = vld [vmem:[#allocation12 + $0x158] sm:$0xff]
    %v934 = vld [vmem:[#allocation12 + $0x160] sm:$0xff]
    %v935 = vld [vmem:[#allocation12 + $0x168] sm:$0xff]
    %v936 = vld [vmem:[#allocation12 + $0x170] sm:$0xff]
    %v937 = vld [vmem:[#allocation12 + $0x178] sm:$0xff]
    %v938 = vld [vmem:[#allocation12 + $0x180] sm:$0xff]
    %v939 = vld [vmem:[#allocation12 + $0x188] sm:$0xff]
    %v940 = vld [vmem:[#allocation12 + $0x190] sm:$0xff]
    %v941 = vld [vmem:[#allocation12 + $0x198] sm:$0xff]
    %v942 = vld [vmem:[#allocation12 + $0x1a0] sm:$0xff]
    %v943 = vld [vmem:[#allocation12 + $0x1a8] sm:$0xff]
    %v944 = vld [vmem:[#allocation12 + $0x1b0] sm:$0xff]
    %v945 = vld [vmem:[#allocation12 + $0x1b8] sm:$0xff]
    %v946 = vld [vmem:[#allocation12 + $0x1c0] sm:$0xff]
    %v947 = vld [vmem:[#allocation12 + $0x1c8] sm:$0xff]
    %v948 = vld [vmem:[#allocation12 + $0x1d0] sm:$0xff]
    %v949 = vld [vmem:[#allocation12 + $0x1d8] sm:$0xff]
    %v950 = vld [vmem:[#allocation12 + $0x1e0] sm:$0xff]
    %v951 = vld [vmem:[#allocation12 + $0x1e8] sm:$0xff]
    %v952 = vld [vmem:[#allocation12 + $0x1f0] sm:$0xff]
    %v953 = vld [vmem:[#allocation12 + $0x1f8] sm:$0xff]
    %v955 = vlaneseq
    %v956 = vshrl.u32 %v955, 7
    %v957 = vsub.s32 0, %v956
    %v958 = vrot.slane %v889, %v957
    %v959 = vlaneseq
    %v960 = vshrl.u32 %v959, 7
    %v961 = vsub.s32 1, %v960
    %v962 = vrot.slane %v889, %v961
    %v1029 = vunpack.c.l.b16 %v890
    %v1030 = vunpack.c.h.b16 %v890
    %v1031 = vunpack.c.l.b16 %v891
    %v1032 = vunpack.c.h.b16 %v891
    %v1033 = vunpack.c.l.b16 %v892
    %v1034 = vunpack.c.h.b16 %v892
    %v1035 = vunpack.c.l.b16 %v893
    %v1036 = vunpack.c.h.b16 %v893
    %v1037 = vunpack.c.l.b16 %v894
    %v1038 = vunpack.c.h.b16 %v894
    %v1039 = vunpack.c.l.b16 %v895
    %v1040 = vunpack.c.h.b16 %v895
    %v1041 = vunpack.c.l.b16 %v896
    %v1042 = vunpack.c.h.b16 %v896
    %v1043 = vunpack.c.l.b16 %v897
    %v1044 = vunpack.c.h.b16 %v897
    %v1045 = vunpack.c.l.b16 %v898
    %v1046 = vunpack.c.h.b16 %v898
    %v1047 = vunpack.c.l.b16 %v899
    %v1048 = vunpack.c.h.b16 %v899
    %v1049 = vunpack.c.l.b16 %v900
    %v1050 = vunpack.c.h.b16 %v900
    %v1051 = vunpack.c.l.b16 %v901
    %v1052 = vunpack.c.h.b16 %v901
    %v1053 = vunpack.c.l.b16 %v902
    %v1054 = vunpack.c.h.b16 %v902
    %v1055 = vunpack.c.l.b16 %v903
    %v1056 = vunpack.c.h.b16 %v903
    %v1057 = vunpack.c.l.b16 %v904
    %v1058 = vunpack.c.h.b16 %v904
    %v1059 = vunpack.c.l.b16 %v905
    %v1060 = vunpack.c.h.b16 %v905
    %v1061 = vunpack.c.l.b16 %v906
    %v1062 = vunpack.c.h.b16 %v906
    %v1063 = vunpack.c.l.b16 %v907
    %v1064 = vunpack.c.h.b16 %v907
    %v1065 = vunpack.c.l.b16 %v908
    %v1066 = vunpack.c.h.b16 %v908
    %v1067 = vunpack.c.l.b16 %v909
    %v1068 = vunpack.c.h.b16 %v909
    %v1069 = vunpack.c.l.b16 %v910
    %v1070 = vunpack.c.h.b16 %v910
    %v1071 = vunpack.c.l.b16 %v911
    %v1072 = vunpack.c.h.b16 %v911
    %v1073 = vunpack.c.l.b16 %v912
    %v1074 = vunpack.c.h.b16 %v912
    %v1075 = vunpack.c.l.b16 %v913
    %v1076 = vunpack.c.h.b16 %v913
    %v1077 = vunpack.c.l.b16 %v914
    %v1078 = vunpack.c.h.b16 %v914
    %v1079 = vunpack.c.l.b16 %v915
    %v1080 = vunpack.c.h.b16 %v915
    %v1081 = vunpack.c.l.b16 %v916
    %v1082 = vunpack.c.h.b16 %v916
    %v1083 = vunpack.c.l.b16 %v917
    %v1084 = vunpack.c.h.b16 %v917
    %v1085 = vunpack.c.l.b16 %v918
    %v1086 = vunpack.c.h.b16 %v918
    %v1087 = vunpack.c.l.b16 %v919
    %v1088 = vunpack.c.h.b16 %v919
    %v1089 = vunpack.c.l.b16 %v920
    %v1090 = vunpack.c.h.b16 %v920
    %v1091 = vunpack.c.l.b16 %v921
    %v1092 = vunpack.c.h.b16 %v921
    %v1093 = vunpack.c.l.b16 %v922
    %v1094 = vunpack.c.h.b16 %v922
    %v1095 = vunpack.c.l.b16 %v923
    %v1096 = vunpack.c.h.b16 %v923
    %v1097 = vunpack.c.l.b16 %v924
    %v1098 = vunpack.c.h.b16 %v924
    %v1099 = vunpack.c.l.b16 %v925
    %v1100 = vunpack.c.h.b16 %v925
    %v1101 = vunpack.c.l.b16 %v926
    %v1102 = vunpack.c.h.b16 %v926
    %v1103 = vunpack.c.l.b16 %v927
    %v1104 = vunpack.c.h.b16 %v927
    %v1105 = vunpack.c.l.b16 %v928
    %v1106 = vunpack.c.h.b16 %v928
    %v1107 = vunpack.c.l.b16 %v929
    %v1108 = vunpack.c.h.b16 %v929
    %v1109 = vunpack.c.l.b16 %v930
    %v1110 = vunpack.c.h.b16 %v930
    %v1111 = vunpack.c.l.b16 %v931
    %v1112 = vunpack.c.h.b16 %v931
    %v1113 = vunpack.c.l.b16 %v932
    %v1114 = vunpack.c.h.b16 %v932
    %v1115 = vunpack.c.l.b16 %v933
    %v1116 = vunpack.c.h.b16 %v933
    %v1117 = vunpack.c.l.b16 %v934
    %v1118 = vunpack.c.h.b16 %v934
    %v1119 = vunpack.c.l.b16 %v935
    %v1120 = vunpack.c.h.b16 %v935
    %v1121 = vunpack.c.l.b16 %v936
    %v1122 = vunpack.c.h.b16 %v936
    %v1123 = vunpack.c.l.b16 %v937
    %v1124 = vunpack.c.h.b16 %v937
    %v1125 = vunpack.c.l.b16 %v938
    %v1126 = vunpack.c.h.b16 %v938
    %v1127 = vunpack.c.l.b16 %v939
    %v1128 = vunpack.c.h.b16 %v939
    %v1129 = vunpack.c.l.b16 %v940
    %v1130 = vunpack.c.h.b16 %v940
    %v1131 = vunpack.c.l.b16 %v941
    %v1132 = vunpack.c.h.b16 %v941
    %v1133 = vunpack.c.l.b16 %v942
    %v1134 = vunpack.c.h.b16 %v942
    %v1135 = vunpack.c.l.b16 %v943
    %v1136 = vunpack.c.h.b16 %v943
    %v1137 = vunpack.c.l.b16 %v944
    %v1138 = vunpack.c.h.b16 %v944
    %v1139 = vunpack.c.l.b16 %v945
    %v1140 = vunpack.c.h.b16 %v945
    %v1141 = vunpack.c.l.b16 %v946
    %v1142 = vunpack.c.h.b16 %v946
    %v1143 = vunpack.c.l.b16 %v947
    %v1144 = vunpack.c.h.b16 %v947
    %v1145 = vunpack.c.l.b16 %v948
    %v1146 = vunpack.c.h.b16 %v948
    %v1147 = vunpack.c.l.b16 %v949
    %v1148 = vunpack.c.h.b16 %v949
    %v1149 = vunpack.c.l.b16 %v950
    %v1150 = vunpack.c.h.b16 %v950
    %v1151 = vunpack.c.l.b16 %v951
    %v1152 = vunpack.c.h.b16 %v951
    %v1153 = vunpack.c.l.b16 %v952
    %v1154 = vunpack.c.h.b16 %v952
    %v1155 = vunpack.c.l.b16 %v953
    %v1156 = vunpack.c.h.b16 %v953
    %v1157 = vpack.c.b16 %v1031, %v1029
    %v1158 = vpack.c.b16 %v1032, %v1030
    %v1159 = vpack.c.b16 %v1035, %v1033
    %v1160 = vpack.c.b16 %v1036, %v1034
    %v1161 = vpack.c.b16 %v1039, %v1037
    %v1162 = vpack.c.b16 %v1040, %v1038
    %v1163 = vpack.c.b16 %v1043, %v1041
    %v1164 = vpack.c.b16 %v1044, %v1042
    %v1165 = vpack.c.b16 %v1047, %v1045
    %v1166 = vpack.c.b16 %v1048, %v1046
    %v1167 = vpack.c.b16 %v1051, %v1049
    %v1168 = vpack.c.b16 %v1052, %v1050
    %v1169 = vpack.c.b16 %v1055, %v1053
    %v1170 = vpack.c.b16 %v1056, %v1054
    %v1171 = vpack.c.b16 %v1059, %v1057
    %v1172 = vpack.c.b16 %v1060, %v1058
    %v1173 = vpack.c.b16 %v1063, %v1061
    %v1174 = vpack.c.b16 %v1064, %v1062
    %v1175 = vpack.c.b16 %v1067, %v1065
    %v1176 = vpack.c.b16 %v1068, %v1066
    %v1177 = vpack.c.b16 %v1071, %v1069
    %v1178 = vpack.c.b16 %v1072, %v1070
    %v1179 = vpack.c.b16 %v1075, %v1073
    %v1180 = vpack.c.b16 %v1076, %v1074
    %v1181 = vpack.c.b16 %v1079, %v1077
    %v1182 = vpack.c.b16 %v1080, %v1078
    %v1183 = vpack.c.b16 %v1083, %v1081
    %v1184 = vpack.c.b16 %v1084, %v1082
    %v1185 = vpack.c.b16 %v1087, %v1085
    %v1186 = vpack.c.b16 %v1088, %v1086
    %v1187 = vpack.c.b16 %v1091, %v1089
    %v1188 = vpack.c.b16 %v1092, %v1090
    %v1189 = vpack.c.b16 %v1095, %v1093
    %v1190 = vpack.c.b16 %v1096, %v1094
    %v1191 = vpack.c.b16 %v1099, %v1097
    %v1192 = vpack.c.b16 %v1100, %v1098
    %v1193 = vpack.c.b16 %v1103, %v1101
    %v1194 = vpack.c.b16 %v1104, %v1102
    %v1195 = vpack.c.b16 %v1107, %v1105
    %v1196 = vpack.c.b16 %v1108, %v1106
    %v1197 = vpack.c.b16 %v1111, %v1109
    %v1198 = vpack.c.b16 %v1112, %v1110
    %v1199 = vpack.c.b16 %v1115, %v1113
    %v1200 = vpack.c.b16 %v1116, %v1114
    %v1201 = vpack.c.b16 %v1119, %v1117
    %v1202 = vpack.c.b16 %v1120, %v1118
    %v1203 = vpack.c.b16 %v1123, %v1121
    %v1204 = vpack.c.b16 %v1124, %v1122
    %v1205 = vpack.c.b16 %v1127, %v1125
    %v1206 = vpack.c.b16 %v1128, %v1126
    %v1207 = vpack.c.b16 %v1131, %v1129
    %v1208 = vpack.c.b16 %v1132, %v1130
    %v1209 = vpack.c.b16 %v1135, %v1133
    %v1210 = vpack.c.b16 %v1136, %v1134
    %v1211 = vpack.c.b16 %v1139, %v1137
    %v1212 = vpack.c.b16 %v1140, %v1138
    %v1213 = vpack.c.b16 %v1143, %v1141
    %v1214 = vpack.c.b16 %v1144, %v1142
    %v1215 = vpack.c.b16 %v1147, %v1145
    %v1216 = vpack.c.b16 %v1148, %v1146
    %v1217 = vpack.c.b16 %v1151, %v1149
    %v1218 = vpack.c.b16 %v1152, %v1150
    %v1219 = vpack.c.b16 %v1155, %v1153
    %v1220 = vpack.c.b16 %v1156, %v1154
    %1285 = vmatprep.subr.bf16.mxu0 %v1172
    %1286 = vmatpush1.bf16.msra.mxu0 %v1171
    %1287 = vmatprep.subr.bf16.mxu0 %v1170
    %1288 = vmatpush1.bf16.msra.mxu0 %v1169
    %1289 = vmatprep.subr.bf16.mxu0 %v1168
    %1290 = vmatpush1.bf16.msra.mxu0 %v1167
    %1291 = vmatprep.subr.bf16.mxu0 %v1166
    %1292 = vmatpush1.bf16.msra.mxu0 %v1165
    %1293 = vmatprep.subr.bf16.mxu0 %v1164
    %1294 = vmatpush1.bf16.msra.mxu0 %v1163
    %1295 = vmatprep.subr.bf16.mxu0 %v1162
    %1296 = vmatpush1.bf16.msra.mxu0 %v1161
    %1297 = vmatprep.subr.bf16.mxu0 %v1160
    %1298 = vmatpush1.bf16.msra.mxu0 %v1159
    %1299 = vmatprep.subr.bf16.mxu0 %v1158
    %1300 = vmatpush1.bf16.msra.mxu0 %v1157
    %1301 = vmatprep.subr.bf16.mxu0 %v1188
    %1302 = vmatpush2.bf16.msra.mxu0 %v1187
    %1303 = vmatprep.subr.bf16.mxu0 %v1186
    %1304 = vmatpush2.bf16.msra.mxu0 %v1185
    %1305 = vmatprep.subr.bf16.mxu0 %v1184
    %1306 = vmatpush2.bf16.msra.mxu0 %v1183
    %1307 = vmatprep.subr.bf16.mxu0 %v1182
    %1308 = vmatpush2.bf16.msra.mxu0 %v1181
    %1309 = vmatprep.subr.bf16.mxu0 %v1180
    %1310 = vmatpush2.bf16.msra.mxu0 %v1179
    %1311 = vmatprep.subr.bf16.mxu0 %v1178
    %1312 = vmatpush2.bf16.msra.mxu0 %v1177
    %1313 = vmatprep.subr.bf16.mxu0 %v1176
    %1314 = vmatpush2.bf16.msra.mxu0 %v1175
    %1315 = vmatprep.subr.bf16.mxu0 %v1174
    %1316 = vmatpush2.bf16.msra.mxu0 %v1173
    %1317 = vmatprep.mubr.bf16.mxu0 %v886
    %1318 = vmatmul.mubr.bf16.gmra.mxu0 %v885
    %v1319 = vpop.f32.mrf.mxu0
    %v1320 = vadd.f32 %v958, %v1319
    %v1321 = vpop.f32.mrf.mxu0
    %v1322 = vadd.f32 %v962, %v1321
    %v1323 = vpop.f32.mrf.mxu0
    %v1324 = vpop.f32.mrf.mxu0
    %1325 = vdwg.mxu0
    %1326 = vmatprep.subr.bf16.mxu0 %v1204
    %1327 = vmatpush1.bf16.msra.mxu0 %v1203
    %1328 = vmatprep.subr.bf16.mxu0 %v1202
    %1329 = vmatpush1.bf16.msra.mxu0 %v1201
    %1330 = vmatprep.subr.bf16.mxu0 %v1200
    %1331 = vmatpush1.bf16.msra.mxu0 %v1199
    %1332 = vmatprep.subr.bf16.mxu0 %v1198
    %1333 = vmatpush1.bf16.msra.mxu0 %v1197
    %1334 = vmatprep.subr.bf16.mxu0 %v1196
    %1335 = vmatpush1.bf16.msra.mxu0 %v1195
    %1336 = vmatprep.subr.bf16.mxu0 %v1194
    %1337 = vmatpush1.bf16.msra.mxu0 %v1193
    %1338 = vmatprep.subr.bf16.mxu0 %v1192
    %1339 = vmatpush1.bf16.msra.mxu0 %v1191
    %1340 = vmatprep.subr.bf16.mxu0 %v1190
    %1341 = vmatpush1.bf16.msra.mxu0 %v1189
    %1342 = vmatprep.subr.bf16.mxu0 %v1220
    %1343 = vmatpush2.bf16.msra.mxu0 %v1219
    %1344 = vmatprep.subr.bf16.mxu0 %v1218
    %1345 = vmatpush2.bf16.msra.mxu0 %v1217
    %1346 = vmatprep.subr.bf16.mxu0 %v1216
    %1347 = vmatpush2.bf16.msra.mxu0 %v1215
    %1348 = vmatprep.subr.bf16.mxu0 %v1214
    %1349 = vmatpush2.bf16.msra.mxu0 %v1213
    %1350 = vmatprep.subr.bf16.mxu0 %v1212
    %1351 = vmatpush2.bf16.msra.mxu0 %v1211
    %1352 = vmatprep.subr.bf16.mxu0 %v1210
    %1353 = vmatpush2.bf16.msra.mxu0 %v1209
    %1354 = vmatprep.subr.bf16.mxu0 %v1208
    %1355 = vmatpush2.bf16.msra.mxu0 %v1207
    %1356 = vmatprep.subr.bf16.mxu0 %v1206
    %1357 = vmatpush2.bf16.msra.mxu0 %v1205
    %1358 = vmatprep.mubr.bf16.mxu0 %v888
    %1359 = vmatmul.mubr.bf16.gmra.mxu0 %v887
    %v1360 = vpop.f32.mrf.mxu0
    %v1361 = vadd.f32 %v1320, %v1360
    %v1362 = vpop.f32.mrf.mxu0
    %v1363 = vadd.f32 %v1322, %v1362
    %v1364 = vpop.f32.mrf.mxu0
    %v1365 = vpop.f32.mrf.mxu0
    %1366 = vdwg.mxu0
    %v1367 = vrot.slane %v1361, 4
    %v1368 = vadd.f32 %v1361, %v1367
    %v1369 = vrot.slane %v1368, 2
    %v1370 = vadd.f32 %v1368, %v1369
    %v1371 = vrot.slane %v1370, 1
    %v1372 = vadd.f32 %v1370, %v1371
    %v1373 = vrot.slane %v1363, 4
    %v1374 = vadd.f32 %v1363, %v1373
    %v1375 = vrot.slane %v1374, 2
    %v1376 = vadd.f32 %v1374, %v1375
    %v1377 = vrot.slane %v1376, 1
    %v1378 = vadd.f32 %v1376, %v1377
    %v1379 = vmul.f32 %v1361, %v1361
    %v1380 = vmul.f32 %v1363, %v1363
    %v1381 = vrot.slane %v1379, 4
    %v1382 = vadd.f32 %v1379, %v1381
    %v1383 = vrot.slane %v1382, 2
    %v1384 = vadd.f32 %v1382, %v1383
    %v1385 = vrot.slane %v1384, 1
    %v1386 = vadd.f32 %v1384, %v1385
    %v1387 = vrot.slane %v1380, 4
    %v1388 = vadd.f32 %v1380, %v1387
    %v1389 = vrot.slane %v1388, 2
    %v1390 = vadd.f32 %v1388, %v1389
    %v1391 = vrot.slane %v1390, 1
    %v1392 = vadd.f32 %v1390, %v1391
    %v1393 = vmul.f32 %v1372, 0.125
    %v1394 = vmul.f32 %v1378, 0.125
    %v1395 = vmul.f32 %v1386, 0.125
    %v1396 = vmul.f32 %v1392, 0.125
    %v1397 = vmul.f32 %v1393, %v1393
    %v1398 = vmul.f32 %v1394, %v1394
    %v1399 = vsub.f32 %v1395, %v1397
    %v1400 = vsub.f32 %v1396, %v1398
    %s1401 = scalar_lea.vmem [#allocation13], 1
    %v1402 = vld [vmem:[%s1401] ss:$4 sm:$0x3]
    %v1403 = vadd.f32 %v1399, 0.8
    %v1404 = vadd.f32 %v1400, 0.8
    %v1405 = vrsqrt.pop %v1403
    %v1406 = vrsqrt.pop %v1404
    %v1409 = vcombine.low %v1405, %v1406
    %v1411 = vunpack.c.l.s4 1966171168
    %v1412 = vunpack.c.0.s8 %v1411
    %v1413 = vlaneseq
    %v1414 = vshrl.u32 %v1413, 7
    %v1415 = vsub.s32 %v1412, %v1414
    %v1416 = vrot.slane %v1409, %v1415
    %v1418 = vunpack.c.l.s4 1966171168
    %v1419 = vunpack.c.0.s8 %v1418
    %v1420 = vlaneseq
    %v1421 = vshrl.u32 %v1420, 7
    %v1422 = vsub.s32 %v1419, %v1421
    %v1423 = vrot.slane %v1416, %v1422
    %v1425 = vmul.f32 %v1402, %v1423
    %s1426 = scalar_lea.vmem [#allocation13], 2
    %v1427 = vld [vmem:[%s1426] ss:$4 sm:$0x3]
    %v1429 = vlaneseq
    %v1430 = vshrl.u32 %v1429, 7
    %v1431 = vsub.s32 0, %v1430
    %v1432 = vrot.slane %v1425, %v1431
    %v1433 = vlaneseq
    %v1434 = vshrl.u32 %v1433, 7
    %v1435 = vsub.s32 1, %v1434
    %v1436 = vrot.slane %v1425, %v1435
    %v1439 = vmul.f32 %v1393, %v1432
    %v1440 = vmul.f32 %v1394, %v1436
    %v1443 = vcombine.low %v1439, %v1440
    %v1445 = vunpack.c.l.s4 1966171168
    %v1446 = vunpack.c.0.s8 %v1445
    %v1447 = vlaneseq
    %v1448 = vshrl.u32 %v1447, 7
    %v1449 = vsub.s32 %v1446, %v1448
    %v1450 = vrot.slane %v1443, %v1449
    %v1452 = vunpack.c.l.s4 1966171168
    %v1453 = vunpack.c.0.s8 %v1452
    %v1454 = vlaneseq
    %v1455 = vshrl.u32 %v1454, 7
    %v1456 = vsub.s32 %v1453, %v1455
    %v1457 = vrot.slane %v1450, %v1456
    %v1459 = vsub.f32 %v1427, %v1457
    %v1460 = vmul.f32 %v1361, %v1432
    %v1461 = vmul.f32 %v1363, %v1436
    %v1463 = vlaneseq
    %v1464 = vshrl.u32 %v1463, 7
    %v1465 = vsub.s32 0, %v1464
    %v1466 = vrot.slane %v1459, %v1465
    %v1467 = vlaneseq
    %v1468 = vshrl.u32 %v1467, 7
    %v1469 = vsub.s32 1, %v1468
    %v1470 = vrot.slane %v1459, %v1469
    %v1473 = vadd.f32 %v1460, %v1466
    %v1474 = vadd.f32 %v1461, %v1470
    %vm1475 = vcmp.gt.f32.partialorder %v1473, 0.0
    %vm1476 = vcmp.gt.f32.partialorder %v1474, 0.0
    %v1477 = vmul.f32 %v1473, 0.2
    %v1478 = vmul.f32 %v1474, 0.2
    %v1479 = vsel %vm1475, %v1473, %v1477
    %v1480 = vsel %vm1476, %v1474, %v1478
    %v1481 = vpack.c.bf16 %v1479, %v1479
    %v1482 = vpack.c.bf16 %v1480, %v1480
    %v1483 = vld [vmem:[#allocation16] ss:$4 sm:$0xf]
    %v1484 = vld [vmem:[#allocation15] sm:$0xff]
    %v1485 = vld [vmem:[#allocation15 + $0x8] sm:$0xff]
    %v1486 = vld [vmem:[#allocation15 + $0x10] sm:$0xff]
    %v1487 = vld [vmem:[#allocation15 + $0x18] sm:$0xff]
    %v1488 = vld [vmem:[#allocation15 + $0x20] sm:$0xff]
    %v1489 = vld [vmem:[#allocation15 + $0x28] sm:$0xff]
    %v1490 = vld [vmem:[#allocation15 + $0x30] sm:$0xff]
    %v1491 = vld [vmem:[#allocation15 + $0x38] sm:$0xff]
    %v1492 = vld [vmem:[#allocation15 + $0x40] sm:$0xff]
    %v1493 = vld [vmem:[#allocation15 + $0x48] sm:$0xff]
    %v1494 = vld [vmem:[#allocation15 + $0x50] sm:$0xff]
    %v1495 = vld [vmem:[#allocation15 + $0x58] sm:$0xff]
    %v1496 = vld [vmem:[#allocation15 + $0x60] sm:$0xff]
    %v1497 = vld [vmem:[#allocation15 + $0x68] sm:$0xff]
    %v1498 = vld [vmem:[#allocation15 + $0x70] sm:$0xff]
    %v1499 = vld [vmem:[#allocation15 + $0x78] sm:$0xff]
    %v1500 = vld [vmem:[#allocation15 + $0x80] sm:$0xff]
    %v1501 = vld [vmem:[#allocation15 + $0x88] sm:$0xff]
    %v1502 = vld [vmem:[#allocation15 + $0x90] sm:$0xff]
    %v1503 = vld [vmem:[#allocation15 + $0x98] sm:$0xff]
    %v1504 = vld [vmem:[#allocation15 + $0xa0] sm:$0xff]
    %v1505 = vld [vmem:[#allocation15 + $0xa8] sm:$0xff]
    %v1506 = vld [vmem:[#allocation15 + $0xb0] sm:$0xff]
    %v1507 = vld [vmem:[#allocation15 + $0xb8] sm:$0xff]
    %v1508 = vld [vmem:[#allocation15 + $0xc0] sm:$0xff]
    %v1509 = vld [vmem:[#allocation15 + $0xc8] sm:$0xff]
    %v1510 = vld [vmem:[#allocation15 + $0xd0] sm:$0xff]
    %v1511 = vld [vmem:[#allocation15 + $0xd8] sm:$0xff]
    %v1512 = vld [vmem:[#allocation15 + $0xe0] sm:$0xff]
    %v1513 = vld [vmem:[#allocation15 + $0xe8] sm:$0xff]
    %v1514 = vld [vmem:[#allocation15 + $0xf0] sm:$0xff]
    %v1515 = vld [vmem:[#allocation15 + $0xf8] sm:$0xff]
    %v1516 = vld [vmem:[#allocation15 + $0x100] sm:$0xff]
    %v1517 = vld [vmem:[#allocation15 + $0x108] sm:$0xff]
    %v1518 = vld [vmem:[#allocation15 + $0x110] sm:$0xff]
    %v1519 = vld [vmem:[#allocation15 + $0x118] sm:$0xff]
    %v1520 = vld [vmem:[#allocation15 + $0x120] sm:$0xff]
    %v1521 = vld [vmem:[#allocation15 + $0x128] sm:$0xff]
    %v1522 = vld [vmem:[#allocation15 + $0x130] sm:$0xff]
    %v1523 = vld [vmem:[#allocation15 + $0x138] sm:$0xff]
    %v1524 = vld [vmem:[#allocation15 + $0x140] sm:$0xff]
    %v1525 = vld [vmem:[#allocation15 + $0x148] sm:$0xff]
    %v1526 = vld [vmem:[#allocation15 + $0x150] sm:$0xff]
    %v1527 = vld [vmem:[#allocation15 + $0x158] sm:$0xff]
    %v1528 = vld [vmem:[#allocation15 + $0x160] sm:$0xff]
    %v1529 = vld [vmem:[#allocation15 + $0x168] sm:$0xff]
    %v1530 = vld [vmem:[#allocation15 + $0x170] sm:$0xff]
    %v1531 = vld [vmem:[#allocation15 + $0x178] sm:$0xff]
    %v1532 = vld [vmem:[#allocation15 + $0x180] sm:$0xff]
    %v1533 = vld [vmem:[#allocation15 + $0x188] sm:$0xff]
    %v1534 = vld [vmem:[#allocation15 + $0x190] sm:$0xff]
    %v1535 = vld [vmem:[#allocation15 + $0x198] sm:$0xff]
    %v1536 = vld [vmem:[#allocation15 + $0x1a0] sm:$0xff]
    %v1537 = vld [vmem:[#allocation15 + $0x1a8] sm:$0xff]
    %v1538 = vld [vmem:[#allocation15 + $0x1b0] sm:$0xff]
    %v1539 = vld [vmem:[#allocation15 + $0x1b8] sm:$0xff]
    %v1540 = vld [vmem:[#allocation15 + $0x1c0] sm:$0xff]
    %v1541 = vld [vmem:[#allocation15 + $0x1c8] sm:$0xff]
    %v1542 = vld [vmem:[#allocation15 + $0x1d0] sm:$0xff]
    %v1543 = vld [vmem:[#allocation15 + $0x1d8] sm:$0xff]
    %v1544 = vld [vmem:[#allocation15 + $0x1e0] sm:$0xff]
    %v1545 = vld [vmem:[#allocation15 + $0x1e8] sm:$0xff]
    %v1546 = vld [vmem:[#allocation15 + $0x1f0] sm:$0xff]
    %v1547 = vld [vmem:[#allocation15 + $0x1f8] sm:$0xff]
    %v1549 = vlaneseq
    %v1550 = vshrl.u32 %v1549, 7
    %v1551 = vsub.s32 0, %v1550
    %v1552 = vrot.slane %v1483, %v1551
    %v1553 = vlaneseq
    %v1554 = vshrl.u32 %v1553, 7
    %v1555 = vsub.s32 1, %v1554
    %v1556 = vrot.slane %v1483, %v1555
    %v1557 = vlaneseq
    %v1558 = vshrl.u32 %v1557, 7
    %v1559 = vsub.s32 2, %v1558
    %v1560 = vrot.slane %v1483, %v1559
    %v1561 = vlaneseq
    %v1562 = vshrl.u32 %v1561, 7
    %v1563 = vsub.s32 3, %v1562
    %v1564 = vrot.slane %v1483, %v1563
    %v1633 = vunpack.c.l.b16 %v1484
    %v1634 = vunpack.c.h.b16 %v1484
    %v1635 = vunpack.c.l.b16 %v1485
    %v1636 = vunpack.c.h.b16 %v1485
    %v1637 = vunpack.c.l.b16 %v1486
    %v1638 = vunpack.c.h.b16 %v1486
    %v1639 = vunpack.c.l.b16 %v1487
    %v1640 = vunpack.c.h.b16 %v1487
    %v1641 = vunpack.c.l.b16 %v1488
    %v1642 = vunpack.c.h.b16 %v1488
    %v1643 = vunpack.c.l.b16 %v1489
    %v1644 = vunpack.c.h.b16 %v1489
    %v1645 = vunpack.c.l.b16 %v1490
    %v1646 = vunpack.c.h.b16 %v1490
    %v1647 = vunpack.c.l.b16 %v1491
    %v1648 = vunpack.c.h.b16 %v1491
    %v1649 = vunpack.c.l.b16 %v1492
    %v1650 = vunpack.c.h.b16 %v1492
    %v1651 = vunpack.c.l.b16 %v1493
    %v1652 = vunpack.c.h.b16 %v1493
    %v1653 = vunpack.c.l.b16 %v1494
    %v1654 = vunpack.c.h.b16 %v1494
    %v1655 = vunpack.c.l.b16 %v1495
    %v1656 = vunpack.c.h.b16 %v1495
    %v1657 = vunpack.c.l.b16 %v1496
    %v1658 = vunpack.c.h.b16 %v1496
    %v1659 = vunpack.c.l.b16 %v1497
    %v1660 = vunpack.c.h.b16 %v1497
    %v1661 = vunpack.c.l.b16 %v1498
    %v1662 = vunpack.c.h.b16 %v1498
    %v1663 = vunpack.c.l.b16 %v1499
    %v1664 = vunpack.c.h.b16 %v1499
    %v1665 = vunpack.c.l.b16 %v1500
    %v1666 = vunpack.c.h.b16 %v1500
    %v1667 = vunpack.c.l.b16 %v1501
    %v1668 = vunpack.c.h.b16 %v1501
    %v1669 = vunpack.c.l.b16 %v1502
    %v1670 = vunpack.c.h.b16 %v1502
    %v1671 = vunpack.c.l.b16 %v1503
    %v1672 = vunpack.c.h.b16 %v1503
    %v1673 = vunpack.c.l.b16 %v1504
    %v1674 = vunpack.c.h.b16 %v1504
    %v1675 = vunpack.c.l.b16 %v1505
    %v1676 = vunpack.c.h.b16 %v1505
    %v1677 = vunpack.c.l.b16 %v1506
    %v1678 = vunpack.c.h.b16 %v1506
    %v1679 = vunpack.c.l.b16 %v1507
    %v1680 = vunpack.c.h.b16 %v1507
    %v1681 = vunpack.c.l.b16 %v1508
    %v1682 = vunpack.c.h.b16 %v1508
    %v1683 = vunpack.c.l.b16 %v1509
    %v1684 = vunpack.c.h.b16 %v1509
    %v1685 = vunpack.c.l.b16 %v1510
    %v1686 = vunpack.c.h.b16 %v1510
    %v1687 = vunpack.c.l.b16 %v1511
    %v1688 = vunpack.c.h.b16 %v1511
    %v1689 = vunpack.c.l.b16 %v1512
    %v1690 = vunpack.c.h.b16 %v1512
    %v1691 = vunpack.c.l.b16 %v1513
    %v1692 = vunpack.c.h.b16 %v1513
    %v1693 = vunpack.c.l.b16 %v1514
    %v1694 = vunpack.c.h.b16 %v1514
    %v1695 = vunpack.c.l.b16 %v1515
    %v1696 = vunpack.c.h.b16 %v1515
    %v1697 = vunpack.c.l.b16 %v1516
    %v1698 = vunpack.c.h.b16 %v1516
    %v1699 = vunpack.c.l.b16 %v1517
    %v1700 = vunpack.c.h.b16 %v1517
    %v1701 = vunpack.c.l.b16 %v1518
    %v1702 = vunpack.c.h.b16 %v1518
    %v1703 = vunpack.c.l.b16 %v1519
    %v1704 = vunpack.c.h.b16 %v1519
    %v1705 = vunpack.c.l.b16 %v1520
    %v1706 = vunpack.c.h.b16 %v1520
    %v1707 = vunpack.c.l.b16 %v1521
    %v1708 = vunpack.c.h.b16 %v1521
    %v1709 = vunpack.c.l.b16 %v1522
    %v1710 = vunpack.c.h.b16 %v1522
    %v1711 = vunpack.c.l.b16 %v1523
    %v1712 = vunpack.c.h.b16 %v1523
    %v1713 = vunpack.c.l.b16 %v1524
    %v1714 = vunpack.c.h.b16 %v1524
    %v1715 = vunpack.c.l.b16 %v1525
    %v1716 = vunpack.c.h.b16 %v1525
    %v1717 = vunpack.c.l.b16 %v1526
    %v1718 = vunpack.c.h.b16 %v1526
    %v1719 = vunpack.c.l.b16 %v1527
    %v1720 = vunpack.c.h.b16 %v1527
    %v1721 = vunpack.c.l.b16 %v1528
    %v1722 = vunpack.c.h.b16 %v1528
    %v1723 = vunpack.c.l.b16 %v1529
    %v1724 = vunpack.c.h.b16 %v1529
    %v1725 = vunpack.c.l.b16 %v1530
    %v1726 = vunpack.c.h.b16 %v1530
    %v1727 = vunpack.c.l.b16 %v1531
    %v1728 = vunpack.c.h.b16 %v1531
    %v1729 = vunpack.c.l.b16 %v1532
    %v1730 = vunpack.c.h.b16 %v1532
    %v1731 = vunpack.c.l.b16 %v1533
    %v1732 = vunpack.c.h.b16 %v1533
    %v1733 = vunpack.c.l.b16 %v1534
    %v1734 = vunpack.c.h.b16 %v1534
    %v1735 = vunpack.c.l.b16 %v1535
    %v1736 = vunpack.c.h.b16 %v1535
    %v1737 = vunpack.c.l.b16 %v1536
    %v1738 = vunpack.c.h.b16 %v1536
    %v1739 = vunpack.c.l.b16 %v1537
    %v1740 = vunpack.c.h.b16 %v1537
    %v1741 = vunpack.c.l.b16 %v1538
    %v1742 = vunpack.c.h.b16 %v1538
    %v1743 = vunpack.c.l.b16 %v1539
    %v1744 = vunpack.c.h.b16 %v1539
    %v1745 = vunpack.c.l.b16 %v1540
    %v1746 = vunpack.c.h.b16 %v1540
    %v1747 = vunpack.c.l.b16 %v1541
    %v1748 = vunpack.c.h.b16 %v1541
    %v1749 = vunpack.c.l.b16 %v1542
    %v1750 = vunpack.c.h.b16 %v1542
    %v1751 = vunpack.c.l.b16 %v1543
    %v1752 = vunpack.c.h.b16 %v1543
    %v1753 = vunpack.c.l.b16 %v1544
    %v1754 = vunpack.c.h.b16 %v1544
    %v1755 = vunpack.c.l.b16 %v1545
    %v1756 = vunpack.c.h.b16 %v1545
    %v1757 = vunpack.c.l.b16 %v1546
    %v1758 = vunpack.c.h.b16 %v1546
    %v1759 = vunpack.c.l.b16 %v1547
    %v1760 = vunpack.c.h.b16 %v1547
    %v1761 = vpack.c.b16 %v1637, %v1633
    %v1762 = vpack.c.b16 %v1638, %v1634
    %v1763 = vpack.c.b16 %v1639, %v1635
    %v1764 = vpack.c.b16 %v1640, %v1636
    %v1765 = vpack.c.b16 %v1645, %v1641
    %v1766 = vpack.c.b16 %v1646, %v1642
    %v1767 = vpack.c.b16 %v1647, %v1643
    %v1768 = vpack.c.b16 %v1648, %v1644
    %v1769 = vpack.c.b16 %v1653, %v1649
    %v1770 = vpack.c.b16 %v1654, %v1650
    %v1771 = vpack.c.b16 %v1655, %v1651
    %v1772 = vpack.c.b16 %v1656, %v1652
    %v1773 = vpack.c.b16 %v1661, %v1657
    %v1774 = vpack.c.b16 %v1662, %v1658
    %v1775 = vpack.c.b16 %v1663, %v1659
    %v1776 = vpack.c.b16 %v1664, %v1660
    %v1777 = vpack.c.b16 %v1669, %v1665
    %v1778 = vpack.c.b16 %v1670, %v1666
    %v1779 = vpack.c.b16 %v1671, %v1667
    %v1780 = vpack.c.b16 %v1672, %v1668
    %v1781 = vpack.c.b16 %v1677, %v1673
    %v1782 = vpack.c.b16 %v1678, %v1674
    %v1783 = vpack.c.b16 %v1679, %v1675
    %v1784 = vpack.c.b16 %v1680, %v1676
    %v1785 = vpack.c.b16 %v1685, %v1681
    %v1786 = vpack.c.b16 %v1686, %v1682
    %v1787 = vpack.c.b16 %v1687, %v1683
    %v1788 = vpack.c.b16 %v1688, %v1684
    %v1789 = vpack.c.b16 %v1693, %v1689
    %v1790 = vpack.c.b16 %v1694, %v1690
    %v1791 = vpack.c.b16 %v1695, %v1691
    %v1792 = vpack.c.b16 %v1696, %v1692
    %v1793 = vpack.c.b16 %v1701, %v1697
    %v1794 = vpack.c.b16 %v1702, %v1698
    %v1795 = vpack.c.b16 %v1703, %v1699
    %v1796 = vpack.c.b16 %v1704, %v1700
    %v1797 = vpack.c.b16 %v1709, %v1705
    %v1798 = vpack.c.b16 %v1710, %v1706
    %v1799 = vpack.c.b16 %v1711, %v1707
    %v1800 = vpack.c.b16 %v1712, %v1708
    %v1801 = vpack.c.b16 %v1717, %v1713
    %v1802 = vpack.c.b16 %v1718, %v1714
    %v1803 = vpack.c.b16 %v1719, %v1715
    %v1804 = vpack.c.b16 %v1720, %v1716
    %v1805 = vpack.c.b16 %v1725, %v1721
    %v1806 = vpack.c.b16 %v1726, %v1722
    %v1807 = vpack.c.b16 %v1727, %v1723
    %v1808 = vpack.c.b16 %v1728, %v1724
    %v1809 = vpack.c.b16 %v1733, %v1729
    %v1810 = vpack.c.b16 %v1734, %v1730
    %v1811 = vpack.c.b16 %v1735, %v1731
    %v1812 = vpack.c.b16 %v1736, %v1732
    %v1813 = vpack.c.b16 %v1741, %v1737
    %v1814 = vpack.c.b16 %v1742, %v1738
    %v1815 = vpack.c.b16 %v1743, %v1739
    %v1816 = vpack.c.b16 %v1744, %v1740
    %v1817 = vpack.c.b16 %v1749, %v1745
    %v1818 = vpack.c.b16 %v1750, %v1746
    %v1819 = vpack.c.b16 %v1751, %v1747
    %v1820 = vpack.c.b16 %v1752, %v1748
    %v1821 = vpack.c.b16 %v1757, %v1753
    %v1822 = vpack.c.b16 %v1758, %v1754
    %v1823 = vpack.c.b16 %v1759, %v1755
    %v1824 = vpack.c.b16 %v1760, %v1756
    %1889 = vmatprep.subr.bf16.mxu0 %v1790
    %1890 = vmatpush1.bf16.msra.mxu0 %v1789
    %1891 = vmatprep.subr.bf16.mxu0 %v1786
    %1892 = vmatpush1.bf16.msra.mxu0 %v1785
    %1893 = vmatprep.subr.bf16.mxu0 %v1782
    %1894 = vmatpush1.bf16.msra.mxu0 %v1781
    %1895 = vmatprep.subr.bf16.mxu0 %v1778
    %1896 = vmatpush1.bf16.msra.mxu0 %v1777
    %1897 = vmatprep.subr.bf16.mxu0 %v1774
    %1898 = vmatpush1.bf16.msra.mxu0 %v1773
    %1899 = vmatprep.subr.bf16.mxu0 %v1770
    %1900 = vmatpush1.bf16.msra.mxu0 %v1769
    %1901 = vmatprep.subr.bf16.mxu0 %v1766
    %1902 = vmatpush1.bf16.msra.mxu0 %v1765
    %1903 = vmatprep.subr.bf16.mxu0 %v1762
    %1904 = vmatpush1.bf16.msra.mxu0 %v1761
    %1905 = vmatprep.subr.bf16.mxu0 %v1822
    %1906 = vmatpush2.bf16.msra.mxu0 %v1821
    %1907 = vmatprep.subr.bf16.mxu0 %v1818
    %1908 = vmatpush2.bf16.msra.mxu0 %v1817
    %1909 = vmatprep.subr.bf16.mxu0 %v1814
    %1910 = vmatpush2.bf16.msra.mxu0 %v1813
    %1911 = vmatprep.subr.bf16.mxu0 %v1810
    %1912 = vmatpush2.bf16.msra.mxu0 %v1809
    %1913 = vmatprep.subr.bf16.mxu0 %v1806
    %1914 = vmatpush2.bf16.msra.mxu0 %v1805
    %1915 = vmatprep.subr.bf16.mxu0 %v1802
    %1916 = vmatpush2.bf16.msra.mxu0 %v1801
    %1917 = vmatprep.subr.bf16.mxu0 %v1798
    %1918 = vmatpush2.bf16.msra.mxu0 %v1797
    %1919 = vmatprep.subr.bf16.mxu0 %v1794
    %1920 = vmatpush2.bf16.msra.mxu0 %v1793
    %1921 = vmatprep.mubr.bf16.mxu0 %v1482
    %1922 = vmatmul.mubr.bf16.gmra.mxu0 %v1481
    %v1923 = vpop.f32.mrf.mxu0
    %v1924 = vadd.f32 %v1552, %v1923
    %v1925 = vpop.f32.mrf.mxu0
    %v1926 = vadd.f32 %v1556, %v1925
    %v1927 = vpop.f32.mrf.mxu0
    %v1928 = vpop.f32.mrf.mxu0
    %1929 = vdwg.mxu0
    %1930 = vmatprep.subr.bf16.mxu0 %v1792
    %1931 = vmatpush1.bf16.msra.mxu0 %v1791
    %1932 = vmatprep.subr.bf16.mxu0 %v1788
    %1933 = vmatpush1.bf16.msra.mxu0 %v1787
    %1934 = vmatprep.subr.bf16.mxu0 %v1784
    %1935 = vmatpush1.bf16.msra.mxu0 %v1783
    %1936 = vmatprep.subr.bf16.mxu0 %v1780
    %1937 = vmatpush1.bf16.msra.mxu0 %v1779
    %1938 = vmatprep.subr.bf16.mxu0 %v1776
    %1939 = vmatpush1.bf16.msra.mxu0 %v1775
    %1940 = vmatprep.subr.bf16.mxu0 %v1772
    %1941 = vmatpush1.bf16.msra.mxu0 %v1771
    %1942 = vmatprep.subr.bf16.mxu0 %v1768
    %1943 = vmatpush1.bf16.msra.mxu0 %v1767
    %1944 = vmatprep.subr.bf16.mxu0 %v1764
    %1945 = vmatpush1.bf16.msra.mxu0 %v1763
    %1946 = vmatprep.subr.bf16.mxu0 %v1824
    %1947 = vmatpush2.bf16.msra.mxu0 %v1823
    %1948 = vmatprep.subr.bf16.mxu0 %v1820
    %1949 = vmatpush2.bf16.msra.mxu0 %v1819
    %1950 = vmatprep.subr.bf16.mxu0 %v1816
    %1951 = vmatpush2.bf16.msra.mxu0 %v1815
    %1952 = vmatprep.subr.bf16.mxu0 %v1812
    %1953 = vmatpush2.bf16.msra.mxu0 %v1811
    %1954 = vmatprep.subr.bf16.mxu0 %v1808
    %1955 = vmatpush2.bf16.msra.mxu0 %v1807
    %1956 = vmatprep.subr.bf16.mxu0 %v1804
    %1957 = vmatpush2.bf16.msra.mxu0 %v1803
    %1958 = vmatprep.subr.bf16.mxu0 %v1800
    %1959 = vmatpush2.bf16.msra.mxu0 %v1799
    %1960 = vmatprep.subr.bf16.mxu0 %v1796
    %1961 = vmatpush2.bf16.msra.mxu0 %v1795
    %1962 = vmatprep.mubr.bf16.mxu0 %v1482
    %1963 = vmatmul.mubr.bf16.gmra.mxu0 %v1481
    %v1964 = vpop.f32.mrf.mxu0
    %v1965 = vadd.f32 %v1560, %v1964
    %v1966 = vpop.f32.mrf.mxu0
    %v1967 = vadd.f32 %v1564, %v1966
    %v1968 = vpop.f32.mrf.mxu0
    %v1969 = vpop.f32.mrf.mxu0
    %1970 = vdwg.mxu0
    %v1971 = vrot.slane %v1924, 4
    %v1972 = vadd.f32 %v1924, %v1971
    %v1973 = vrot.slane %v1972, 2
    %v1974 = vadd.f32 %v1972, %v1973
    %v1975 = vrot.slane %v1974, 1
    %v1976 = vadd.f32 %v1974, %v1975
    %v1977 = vrot.slane %v1926, 4
    %v1978 = vadd.f32 %v1926, %v1977
    %v1979 = vrot.slane %v1978, 2
    %v1980 = vadd.f32 %v1978, %v1979
    %v1981 = vrot.slane %v1980, 1
    %v1982 = vadd.f32 %v1980, %v1981
    %v1983 = vrot.slane %v1965, 4
    %v1984 = vadd.f32 %v1965, %v1983
    %v1985 = vrot.slane %v1984, 2
    %v1986 = vadd.f32 %v1984, %v1985
    %v1987 = vrot.slane %v1986, 1
    %v1988 = vadd.f32 %v1986, %v1987
    %v1989 = vrot.slane %v1967, 4
    %v1990 = vadd.f32 %v1967, %v1989
    %v1991 = vrot.slane %v1990, 2
    %v1992 = vadd.f32 %v1990, %v1991
    %v1993 = vrot.slane %v1992, 1
    %v1994 = vadd.f32 %v1992, %v1993
    %v1995 = vmul.f32 %v1924, %v1924
    %v1996 = vmul.f32 %v1926, %v1926
    %v1997 = vmul.f32 %v1965, %v1965
    %v1998 = vmul.f32 %v1967, %v1967
    %v1999 = vrot.slane %v1995, 4
    %v2000 = vadd.f32 %v1995, %v1999
    %v2001 = vrot.slane %v2000, 2
    %v2002 = vadd.f32 %v2000, %v2001
    %v2003 = vrot.slane %v2002, 1
    %v2004 = vadd.f32 %v2002, %v2003
    %v2005 = vrot.slane %v1996, 4
    %v2006 = vadd.f32 %v1996, %v2005
    %v2007 = vrot.slane %v2006, 2
    %v2008 = vadd.f32 %v2006, %v2007
    %v2009 = vrot.slane %v2008, 1
    %v2010 = vadd.f32 %v2008, %v2009
    %v2011 = vrot.slane %v1997, 4
    %v2012 = vadd.f32 %v1997, %v2011
    %v2013 = vrot.slane %v2012, 2
    %v2014 = vadd.f32 %v2012, %v2013
    %v2015 = vrot.slane %v2014, 1
    %v2016 = vadd.f32 %v2014, %v2015
    %v2017 = vrot.slane %v1998, 4
    %v2018 = vadd.f32 %v1998, %v2017
    %v2019 = vrot.slane %v2018, 2
    %v2020 = vadd.f32 %v2018, %v2019
    %v2021 = vrot.slane %v2020, 1
    %v2022 = vadd.f32 %v2020, %v2021
    %v2023 = vmul.f32 %v1976, 0.125
    %v2024 = vmul.f32 %v1982, 0.125
    %v2025 = vmul.f32 %v1988, 0.125
    %v2026 = vmul.f32 %v1994, 0.125
    %v2027 = vmul.f32 %v2004, 0.125
    %v2028 = vmul.f32 %v2010, 0.125
    %v2029 = vmul.f32 %v2016, 0.125
    %v2030 = vmul.f32 %v2022, 0.125
    %v2031 = vmul.f32 %v2023, %v2023
    %v2032 = vmul.f32 %v2024, %v2024
    %v2033 = vmul.f32 %v2025, %v2025
    %v2034 = vmul.f32 %v2026, %v2026
    %v2035 = vsub.f32 %v2027, %v2031
    %v2036 = vsub.f32 %v2028, %v2032
    %v2037 = vsub.f32 %v2029, %v2033
    %v2038 = vsub.f32 %v2030, %v2034
    %s2039 = scalar_lea.vmem [#allocation16], 1
    %v2040 = vld [vmem:[%s2039] ss:$4 sm:$0xf]
    %v2041 = vadd.f32 %v2035, 0.8
    %v2042 = vadd.f32 %v2036, 0.8
    %v2043 = vadd.f32 %v2037, 0.8
    %v2044 = vadd.f32 %v2038, 0.8
    %v2045 = vrsqrt.pop %v2041
    %v2046 = vrsqrt.pop %v2042
    %v2047 = vrsqrt.pop %v2043
    %v2048 = vrsqrt.pop %v2044
    %v2053 = vcombine.low %v2045, %v2046
    %v2054 = vcombine.low %v2047, %v2048
    %v2056 = vunpack.c.l.s4 1966171168
    %v2057 = vunpack.c.0.s8 %v2056
    %v2058 = vlaneseq
    %v2059 = vshrl.u32 %v2058, 7
    %v2060 = vsub.s32 %v2057, %v2059
    %v2061 = vrot.slane %v2053, %v2060
    %v2063 = vunpack.c.l.s4 1966171168
    %v2064 = vunpack.c.0.s8 %v2063
    %v2065 = vlaneseq
    %v2066 = vshrl.u32 %v2065, 7
    %v2067 = vsub.s32 %v2064, %v2066
    %v2068 = vrot.slane %v2054, %v2067
    %v2069 = vcombine.low %v2061, %v2068
    %v2071 = vunpack.c.l.s4 1966171168
    %v2072 = vunpack.c.0.s8 %v2071
    %v2073 = vlaneseq
    %v2074 = vshrl.u32 %v2073, 7
    %v2075 = vsub.s32 %v2072, %v2074
    %v2076 = vrot.slane %v2069, %v2075
    %v2078 = vmul.f32 %v2040, %v2076
    %s2079 = scalar_lea.vmem [#allocation16], 2
    %v2080 = vld [vmem:[%s2079] ss:$4 sm:$0xf]
    %v2082 = vlaneseq
    %v2083 = vshrl.u32 %v2082, 7
    %v2084 = vsub.s32 0, %v2083
    %v2085 = vrot.slane %v2078, %v2084
    %v2086 = vlaneseq
    %v2087 = vshrl.u32 %v2086, 7
    %v2088 = vsub.s32 1, %v2087
    %v2089 = vrot.slane %v2078, %v2088
    %v2090 = vlaneseq
    %v2091 = vshrl.u32 %v2090, 7
    %v2092 = vsub.s32 2, %v2091
    %v2093 = vrot.slane %v2078, %v2092
    %v2094 = vlaneseq
    %v2095 = vshrl.u32 %v2094, 7
    %v2096 = vsub.s32 3, %v2095
    %v2097 = vrot.slane %v2078, %v2096
    %v2102 = vmul.f32 %v2023, %v2085
    %v2103 = vmul.f32 %v2024, %v2089
    %v2104 = vmul.f32 %v2025, %v2093
    %v2105 = vmul.f32 %v2026, %v2097
    %v2110 = vcombine.low %v2102, %v2103
    %v2111 = vcombine.low %v2104, %v2105
    %v2113 = vunpack.c.l.s4 1966171168
    %v2114 = vunpack.c.0.s8 %v2113
    %v2115 = vlaneseq
    %v2116 = vshrl.u32 %v2115, 7
    %v2117 = vsub.s32 %v2114, %v2116
    %v2118 = vrot.slane %v2110, %v2117
    %v2120 = vunpack.c.l.s4 1966171168
    %v2121 = vunpack.c.0.s8 %v2120
    %v2122 = vlaneseq
    %v2123 = vshrl.u32 %v2122, 7
    %v2124 = vsub.s32 %v2121, %v2123
    %v2125 = vrot.slane %v2111, %v2124
    %v2126 = vcombine.low %v2118, %v2125
    %v2128 = vunpack.c.l.s4 1966171168
    %v2129 = vunpack.c.0.s8 %v2128
    %v2130 = vlaneseq
    %v2131 = vshrl.u32 %v2130, 7
    %v2132 = vsub.s32 %v2129, %v2131
    %v2133 = vrot.slane %v2126, %v2132
    %v2135 = vsub.f32 %v2080, %v2133
    %v2136 = vmul.f32 %v1924, %v2085
    %v2137 = vmul.f32 %v1926, %v2089
    %v2138 = vmul.f32 %v1965, %v2093
    %v2139 = vmul.f32 %v1967, %v2097
    %v2141 = vlaneseq
    %v2142 = vshrl.u32 %v2141, 7
    %v2143 = vsub.s32 0, %v2142
    %v2144 = vrot.slane %v2135, %v2143
    %v2145 = vlaneseq
    %v2146 = vshrl.u32 %v2145, 7
    %v2147 = vsub.s32 1, %v2146
    %v2148 = vrot.slane %v2135, %v2147
    %v2149 = vlaneseq
    %v2150 = vshrl.u32 %v2149, 7
    %v2151 = vsub.s32 2, %v2150
    %v2152 = vrot.slane %v2135, %v2151
    %v2153 = vlaneseq
    %v2154 = vshrl.u32 %v2153, 7
    %v2155 = vsub.s32 3, %v2154
    %v2156 = vrot.slane %v2135, %v2155
    %v2161 = vadd.f32 %v2136, %v2144
    %v2162 = vadd.f32 %v2137, %v2148
    %v2163 = vadd.f32 %v2138, %v2152
    %v2164 = vadd.f32 %v2139, %v2156
    %vm2165 = vcmp.gt.f32.partialorder %v2161, 0.0
    %vm2166 = vcmp.gt.f32.partialorder %v2162, 0.0
    %vm2167 = vcmp.gt.f32.partialorder %v2163, 0.0
    %vm2168 = vcmp.gt.f32.partialorder %v2164, 0.0
    %v2169 = vmul.f32 %v2161, 0.2
    %v2170 = vmul.f32 %v2162, 0.2
    %v2171 = vmul.f32 %v2163, 0.2
    %v2172 = vmul.f32 %v2164, 0.2
    %v2173 = vsel %vm2165, %v2161, %v2169
    %v2174 = vsel %vm2166, %v2162, %v2170
    %v2175 = vsel %vm2167, %v2163, %v2171
    %v2176 = vsel %vm2168, %v2164, %v2172
    %v2177 = vpack.c.bf16 %v2173, %v2173
    %v2178 = vpack.c.bf16 %v2174, %v2174
    %v2179 = vpack.c.bf16 %v2175, %v2175
    %v2180 = vpack.c.bf16 %v2176, %v2176
    %s2181 = smul.u32 4, 64
    %s2182 = smul.u32 %s2181, 8
    %s2183 = sshll.u32 %s2182, 4
    %2184 = dma.done [#allocation3], %s2183
    %v2185 = vld [vmem:[#allocation2] sm:$0xff]
    %v2186 = vld [vmem:[#allocation2 + $0x8] sm:$0xff]
    %v2187 = vld [vmem:[#allocation2 + $0x10] sm:$0xff]
    %v2188 = vld [vmem:[#allocation2 + $0x18] sm:$0xff]
    %v2189 = vld [vmem:[#allocation2 + $0x20] sm:$0xff]
    %v2190 = vld [vmem:[#allocation2 + $0x28] sm:$0xff]
    %v2191 = vld [vmem:[#allocation2 + $0x30] sm:$0xff]
    %v2192 = vld [vmem:[#allocation2 + $0x38] sm:$0xff]
    %v2193 = vld [vmem:[#allocation2 + $0x40] sm:$0xff]
    %v2194 = vld [vmem:[#allocation2 + $0x48] sm:$0xff]
    %v2195 = vld [vmem:[#allocation2 + $0x50] sm:$0xff]
    %v2196 = vld [vmem:[#allocation2 + $0x58] sm:$0xff]
    %v2197 = vld [vmem:[#allocation2 + $0x60] sm:$0xff]
    %v2198 = vld [vmem:[#allocation2 + $0x68] sm:$0xff]
    %v2199 = vld [vmem:[#allocation2 + $0x70] sm:$0xff]
    %v2200 = vld [vmem:[#allocation2 + $0x78] sm:$0xff]
    %v2201 = vld [vmem:[#allocation2 + $0x80] sm:$0xff]
    %v2202 = vld [vmem:[#allocation2 + $0x88] sm:$0xff]
    %v2203 = vld [vmem:[#allocation2 + $0x90] sm:$0xff]
    %v2204 = vld [vmem:[#allocation2 + $0x98] sm:$0xff]
    %v2205 = vld [vmem:[#allocation2 + $0xa0] sm:$0xff]
    %v2206 = vld [vmem:[#allocation2 + $0xa8] sm:$0xff]
    %v2207 = vld [vmem:[#allocation2 + $0xb0] sm:$0xff]
    %v2208 = vld [vmem:[#allocation2 + $0xb8] sm:$0xff]
    %v2209 = vld [vmem:[#allocation2 + $0xc0] sm:$0xff]
    %v2210 = vld [vmem:[#allocation2 + $0xc8] sm:$0xff]
    %v2211 = vld [vmem:[#allocation2 + $0xd0] sm:$0xff]
    %v2212 = vld [vmem:[#allocation2 + $0xd8] sm:$0xff]
    %v2213 = vld [vmem:[#allocation2 + $0xe0] sm:$0xff]
    %v2214 = vld [vmem:[#allocation2 + $0xe8] sm:$0xff]
    %v2215 = vld [vmem:[#allocation2 + $0xf0] sm:$0xff]
    %v2216 = vld [vmem:[#allocation2 + $0xf8] sm:$0xff]
    %v2217 = vld [vmem:[#allocation2 + $0x100] sm:$0xff]
    %v2218 = vld [vmem:[#allocation2 + $0x108] sm:$0xff]
    %v2219 = vld [vmem:[#allocation2 + $0x110] sm:$0xff]
    %v2220 = vld [vmem:[#allocation2 + $0x118] sm:$0xff]
    %v2221 = vld [vmem:[#allocation2 + $0x120] sm:$0xff]
    %v2222 = vld [vmem:[#allocation2 + $0x128] sm:$0xff]
    %v2223 = vld [vmem:[#allocation2 + $0x130] sm:$0xff]
    %v2224 = vld [vmem:[#allocation2 + $0x138] sm:$0xff]
    %v2225 = vld [vmem:[#allocation2 + $0x140] sm:$0xff]
    %v2226 = vld [vmem:[#allocation2 + $0x148] sm:$0xff]
    %v2227 = vld [vmem:[#allocation2 + $0x150] sm:$0xff]
    %v2228 = vld [vmem:[#allocation2 + $0x158] sm:$0xff]
    %v2229 = vld [vmem:[#allocation2 + $0x160] sm:$0xff]
    %v2230 = vld [vmem:[#allocation2 + $0x168] sm:$0xff]
    %v2231 = vld [vmem:[#allocation2 + $0x170] sm:$0xff]
    %v2232 = vld [vmem:[#allocation2 + $0x178] sm:$0xff]
    %v2233 = vld [vmem:[#allocation2 + $0x180] sm:$0xff]
    %v2234 = vld [vmem:[#allocation2 + $0x188] sm:$0xff]
    %v2235 = vld [vmem:[#allocation2 + $0x190] sm:$0xff]
    %v2236 = vld [vmem:[#allocation2 + $0x198] sm:$0xff]
    %v2237 = vld [vmem:[#allocation2 + $0x1a0] sm:$0xff]
    %v2238 = vld [vmem:[#allocation2 + $0x1a8] sm:$0xff]
    %v2239 = vld [vmem:[#allocation2 + $0x1b0] sm:$0xff]
    %v2240 = vld [vmem:[#allocation2 + $0x1b8] sm:$0xff]
    %v2241 = vld [vmem:[#allocation2 + $0x1c0] sm:$0xff]
    %v2242 = vld [vmem:[#allocation2 + $0x1c8] sm:$0xff]
    %v2243 = vld [vmem:[#allocation2 + $0x1d0] sm:$0xff]
    %v2244 = vld [vmem:[#allocation2 + $0x1d8] sm:$0xff]
    %v2245 = vld [vmem:[#allocation2 + $0x1e0] sm:$0xff]
    %v2246 = vld [vmem:[#allocation2 + $0x1e8] sm:$0xff]
    %v2247 = vld [vmem:[#allocation2 + $0x1f0] sm:$0xff]
    %v2248 = vld [vmem:[#allocation2 + $0x1f8] sm:$0xff]
    %v2249 = vld [vmem:[#allocation2 + $0x200] sm:$0xff]
    %v2250 = vld [vmem:[#allocation2 + $0x208] sm:$0xff]
    %v2251 = vld [vmem:[#allocation2 + $0x210] sm:$0xff]
    %v2252 = vld [vmem:[#allocation2 + $0x218] sm:$0xff]
    %v2253 = vld [vmem:[#allocation2 + $0x220] sm:$0xff]
    %v2254 = vld [vmem:[#allocation2 + $0x228] sm:$0xff]
    %v2255 = vld [vmem:[#allocation2 + $0x230] sm:$0xff]
    %v2256 = vld [vmem:[#allocation2 + $0x238] sm:$0xff]
    %v2257 = vld [vmem:[#allocation2 + $0x240] sm:$0xff]
    %v2258 = vld [vmem:[#allocation2 + $0x248] sm:$0xff]
    %v2259 = vld [vmem:[#allocation2 + $0x250] sm:$0xff]
    %v2260 = vld [vmem:[#allocation2 + $0x258] sm:$0xff]
    %v2261 = vld [vmem:[#allocation2 + $0x260] sm:$0xff]
    %v2262 = vld [vmem:[#allocation2 + $0x268] sm:$0xff]
    %v2263 = vld [vmem:[#allocation2 + $0x270] sm:$0xff]
    %v2264 = vld [vmem:[#allocation2 + $0x278] sm:$0xff]
    %v2265 = vld [vmem:[#allocation2 + $0x280] sm:$0xff]
    %v2266 = vld [vmem:[#allocation2 + $0x288] sm:$0xff]
    %v2267 = vld [vmem:[#allocation2 + $0x290] sm:$0xff]
    %v2268 = vld [vmem:[#allocation2 + $0x298] sm:$0xff]
    %v2269 = vld [vmem:[#allocation2 + $0x2a0] sm:$0xff]
    %v2270 = vld [vmem:[#allocation2 + $0x2a8] sm:$0xff]
    %v2271 = vld [vmem:[#allocation2 + $0x2b0] sm:$0xff]
    %v2272 = vld [vmem:[#allocation2 + $0x2b8] sm:$0xff]
    %v2273 = vld [vmem:[#allocation2 + $0x2c0] sm:$0xff]
    %v2274 = vld [vmem:[#allocation2 + $0x2c8] sm:$0xff]
    %v2275 = vld [vmem:[#allocation2 + $0x2d0] sm:$0xff]
    %v2276 = vld [vmem:[#allocation2 + $0x2d8] sm:$0xff]
    %v2277 = vld [vmem:[#allocation2 + $0x2e0] sm:$0xff]
    %v2278 = vld [vmem:[#allocation2 + $0x2e8] sm:$0xff]
    %v2279 = vld [vmem:[#allocation2 + $0x2f0] sm:$0xff]
    %v2280 = vld [vmem:[#allocation2 + $0x2f8] sm:$0xff]
    %v2281 = vld [vmem:[#allocation2 + $0x300] sm:$0xff]
    %v2282 = vld [vmem:[#allocation2 + $0x308] sm:$0xff]
    %v2283 = vld [vmem:[#allocation2 + $0x310] sm:$0xff]
    %v2284 = vld [vmem:[#allocation2 + $0x318] sm:$0xff]
    %v2285 = vld [vmem:[#allocation2 + $0x320] sm:$0xff]
    %v2286 = vld [vmem:[#allocation2 + $0x328] sm:$0xff]
    %v2287 = vld [vmem:[#allocation2 + $0x330] sm:$0xff]
    %v2288 = vld [vmem:[#allocation2 + $0x338] sm:$0xff]
    %v2289 = vld [vmem:[#allocation2 + $0x340] sm:$0xff]
    %v2290 = vld [vmem:[#allocation2 + $0x348] sm:$0xff]
    %v2291 = vld [vmem:[#allocation2 + $0x350] sm:$0xff]
    %v2292 = vld [vmem:[#allocation2 + $0x358] sm:$0xff]
    %v2293 = vld [vmem:[#allocation2 + $0x360] sm:$0xff]
    %v2294 = vld [vmem:[#allocation2 + $0x368] sm:$0xff]
    %v2295 = vld [vmem:[#allocation2 + $0x370] sm:$0xff]
    %v2296 = vld [vmem:[#allocation2 + $0x378] sm:$0xff]
    %v2297 = vld [vmem:[#allocation2 + $0x380] sm:$0xff]
    %v2298 = vld [vmem:[#allocation2 + $0x388] sm:$0xff]
    %v2299 = vld [vmem:[#allocation2 + $0x390] sm:$0xff]
    %v2300 = vld [vmem:[#allocation2 + $0x398] sm:$0xff]
    %v2301 = vld [vmem:[#allocation2 + $0x3a0] sm:$0xff]
    %v2302 = vld [vmem:[#allocation2 + $0x3a8] sm:$0xff]
    %v2303 = vld [vmem:[#allocation2 + $0x3b0] sm:$0xff]
    %v2304 = vld [vmem:[#allocation2 + $0x3b8] sm:$0xff]
    %v2305 = vld [vmem:[#allocation2 + $0x3c0] sm:$0xff]
    %v2306 = vld [vmem:[#allocation2 + $0x3c8] sm:$0xff]
    %v2307 = vld [vmem:[#allocation2 + $0x3d0] sm:$0xff]
    %v2308 = vld [vmem:[#allocation2 + $0x3d8] sm:$0xff]
    %v2309 = vld [vmem:[#allocation2 + $0x3e0] sm:$0xff]
    %v2310 = vld [vmem:[#allocation2 + $0x3e8] sm:$0xff]
    %v2311 = vld [vmem:[#allocation2 + $0x3f0] sm:$0xff]
    %v2312 = vld [vmem:[#allocation2 + $0x3f8] sm:$0xff]
    %v2313 = vld [vmem:[#allocation2 + $0x400] sm:$0xff]
    %v2314 = vld [vmem:[#allocation2 + $0x408] sm:$0xff]
    %v2315 = vld [vmem:[#allocation2 + $0x410] sm:$0xff]
    %v2316 = vld [vmem:[#allocation2 + $0x418] sm:$0xff]
    %v2317 = vld [vmem:[#allocation2 + $0x420] sm:$0xff]
    %v2318 = vld [vmem:[#allocation2 + $0x428] sm:$0xff]
    %v2319 = vld [vmem:[#allocation2 + $0x430] sm:$0xff]
    %v2320 = vld [vmem:[#allocation2 + $0x438] sm:$0xff]
    %v2321 = vld [vmem:[#allocation2 + $0x440] sm:$0xff]
    %v2322 = vld [vmem:[#allocation2 + $0x448] sm:$0xff]
    %v2323 = vld [vmem:[#allocation2 + $0x450] sm:$0xff]
    %v2324 = vld [vmem:[#allocation2 + $0x458] sm:$0xff]
    %v2325 = vld [vmem:[#allocation2 + $0x460] sm:$0xff]
    %v2326 = vld [vmem:[#allocation2 + $0x468] sm:$0xff]
    %v2327 = vld [vmem:[#allocation2 + $0x470] sm:$0xff]
    %v2328 = vld [vmem:[#allocation2 + $0x478] sm:$0xff]
    %v2329 = vld [vmem:[#allocation2 + $0x480] sm:$0xff]
    %v2330 = vld [vmem:[#allocation2 + $0x488] sm:$0xff]
    %v2331 = vld [vmem:[#allocation2 + $0x490] sm:$0xff]
    %v2332 = vld [vmem:[#allocation2 + $0x498] sm:$0xff]
    %v2333 = vld [vmem:[#allocation2 + $0x4a0] sm:$0xff]
    %v2334 = vld [vmem:[#allocation2 + $0x4a8] sm:$0xff]
    %v2335 = vld [vmem:[#allocation2 + $0x4b0] sm:$0xff]
    %v2336 = vld [vmem:[#allocation2 + $0x4b8] sm:$0xff]
    %v2337 = vld [vmem:[#allocation2 + $0x4c0] sm:$0xff]
    %v2338 = vld [vmem:[#allocation2 + $0x4c8] sm:$0xff]
    %v2339 = vld [vmem:[#allocation2 + $0x4d0] sm:$0xff]
    %v2340 = vld [vmem:[#allocation2 + $0x4d8] sm:$0xff]
    %v2341 = vld [vmem:[#allocation2 + $0x4e0] sm:$0xff]
    %v2342 = vld [vmem:[#allocation2 + $0x4e8] sm:$0xff]
    %v2343 = vld [vmem:[#allocation2 + $0x4f0] sm:$0xff]
    %v2344 = vld [vmem:[#allocation2 + $0x4f8] sm:$0xff]
    %v2345 = vld [vmem:[#allocation2 + $0x500] sm:$0xff]
    %v2346 = vld [vmem:[#allocation2 + $0x508] sm:$0xff]
    %v2347 = vld [vmem:[#allocation2 + $0x510] sm:$0xff]
    %v2348 = vld [vmem:[#allocation2 + $0x518] sm:$0xff]
    %v2349 = vld [vmem:[#allocation2 + $0x520] sm:$0xff]
    %v2350 = vld [vmem:[#allocation2 + $0x528] sm:$0xff]
    %v2351 = vld [vmem:[#allocation2 + $0x530] sm:$0xff]
    %v2352 = vld [vmem:[#allocation2 + $0x538] sm:$0xff]
    %v2353 = vld [vmem:[#allocation2 + $0x540] sm:$0xff]
    %v2354 = vld [vmem:[#allocation2 + $0x548] sm:$0xff]
    %v2355 = vld [vmem:[#allocation2 + $0x550] sm:$0xff]
    %v2356 = vld [vmem:[#allocation2 + $0x558] sm:$0xff]
    %v2357 = vld [vmem:[#allocation2 + $0x560] sm:$0xff]
    %v2358 = vld [vmem:[#allocation2 + $0x568] sm:$0xff]
    %v2359 = vld [vmem:[#allocation2 + $0x570] sm:$0xff]
    %v2360 = vld [vmem:[#allocation2 + $0x578] sm:$0xff]
    %v2361 = vld [vmem:[#allocation2 + $0x580] sm:$0xff]
    %v2362 = vld [vmem:[#allocation2 + $0x588] sm:$0xff]
    %v2363 = vld [vmem:[#allocation2 + $0x590] sm:$0xff]
    %v2364 = vld [vmem:[#allocation2 + $0x598] sm:$0xff]
    %v2365 = vld [vmem:[#allocation2 + $0x5a0] sm:$0xff]
    %v2366 = vld [vmem:[#allocation2 + $0x5a8] sm:$0xff]
    %v2367 = vld [vmem:[#allocation2 + $0x5b0] sm:$0xff]
    %v2368 = vld [vmem:[#allocation2 + $0x5b8] sm:$0xff]
    %v2369 = vld [vmem:[#allocation2 + $0x5c0] sm:$0xff]
    %v2370 = vld [vmem:[#allocation2 + $0x5c8] sm:$0xff]
    %v2371 = vld [vmem:[#allocation2 + $0x5d0] sm:$0xff]
    %v2372 = vld [vmem:[#allocation2 + $0x5d8] sm:$0xff]
    %v2373 = vld [vmem:[#allocation2 + $0x5e0] sm:$0xff]
    %v2374 = vld [vmem:[#allocation2 + $0x5e8] sm:$0xff]
    %v2375 = vld [vmem:[#allocation2 + $0x5f0] sm:$0xff]
    %v2376 = vld [vmem:[#allocation2 + $0x5f8] sm:$0xff]
    %v2377 = vld [vmem:[#allocation2 + $0x600] sm:$0xff]
    %v2378 = vld [vmem:[#allocation2 + $0x608] sm:$0xff]
    %v2379 = vld [vmem:[#allocation2 + $0x610] sm:$0xff]
    %v2380 = vld [vmem:[#allocation2 + $0x618] sm:$0xff]
    %v2381 = vld [vmem:[#allocation2 + $0x620] sm:$0xff]
    %v2382 = vld [vmem:[#allocation2 + $0x628] sm:$0xff]
    %v2383 = vld [vmem:[#allocation2 + $0x630] sm:$0xff]
    %v2384 = vld [vmem:[#allocation2 + $0x638] sm:$0xff]
    %v2385 = vld [vmem:[#allocation2 + $0x640] sm:$0xff]
    %v2386 = vld [vmem:[#allocation2 + $0x648] sm:$0xff]
    %v2387 = vld [vmem:[#allocation2 + $0x650] sm:$0xff]
    %v2388 = vld [vmem:[#allocation2 + $0x658] sm:$0xff]
    %v2389 = vld [vmem:[#allocation2 + $0x660] sm:$0xff]
    %v2390 = vld [vmem:[#allocation2 + $0x668] sm:$0xff]
    %v2391 = vld [vmem:[#allocation2 + $0x670] sm:$0xff]
    %v2392 = vld [vmem:[#allocation2 + $0x678] sm:$0xff]
    %v2393 = vld [vmem:[#allocation2 + $0x680] sm:$0xff]
    %v2394 = vld [vmem:[#allocation2 + $0x688] sm:$0xff]
    %v2395 = vld [vmem:[#allocation2 + $0x690] sm:$0xff]
    %v2396 = vld [vmem:[#allocation2 + $0x698] sm:$0xff]
    %v2397 = vld [vmem:[#allocation2 + $0x6a0] sm:$0xff]
    %v2398 = vld [vmem:[#allocation2 + $0x6a8] sm:$0xff]
    %v2399 = vld [vmem:[#allocation2 + $0x6b0] sm:$0xff]
    %v2400 = vld [vmem:[#allocation2 + $0x6b8] sm:$0xff]
    %v2401 = vld [vmem:[#allocation2 + $0x6c0] sm:$0xff]
    %v2402 = vld [vmem:[#allocation2 + $0x6c8] sm:$0xff]
    %v2403 = vld [vmem:[#allocation2 + $0x6d0] sm:$0xff]
    %v2404 = vld [vmem:[#allocation2 + $0x6d8] sm:$0xff]
    %v2405 = vld [vmem:[#allocation2 + $0x6e0] sm:$0xff]
    %v2406 = vld [vmem:[#allocation2 + $0x6e8] sm:$0xff]
    %v2407 = vld [vmem:[#allocation2 + $0x6f0] sm:$0xff]
    %v2408 = vld [vmem:[#allocation2 + $0x6f8] sm:$0xff]
    %v2409 = vld [vmem:[#allocation2 + $0x700] sm:$0xff]
    %v2410 = vld [vmem:[#allocation2 + $0x708] sm:$0xff]
    %v2411 = vld [vmem:[#allocation2 + $0x710] sm:$0xff]
    %v2412 = vld [vmem:[#allocation2 + $0x718] sm:$0xff]
    %v2413 = vld [vmem:[#allocation2 + $0x720] sm:$0xff]
    %v2414 = vld [vmem:[#allocation2 + $0x728] sm:$0xff]
    %v2415 = vld [vmem:[#allocation2 + $0x730] sm:$0xff]
    %v2416 = vld [vmem:[#allocation2 + $0x738] sm:$0xff]
    %v2417 = vld [vmem:[#allocation2 + $0x740] sm:$0xff]
    %v2418 = vld [vmem:[#allocation2 + $0x748] sm:$0xff]
    %v2419 = vld [vmem:[#allocation2 + $0x750] sm:$0xff]
    %v2420 = vld [vmem:[#allocation2 + $0x758] sm:$0xff]
    %v2421 = vld [vmem:[#allocation2 + $0x760] sm:$0xff]
    %v2422 = vld [vmem:[#allocation2 + $0x768] sm:$0xff]
    %v2423 = vld [vmem:[#allocation2 + $0x770] sm:$0xff]
    %v2424 = vld [vmem:[#allocation2 + $0x778] sm:$0xff]
    %v2425 = vld [vmem:[#allocation2 + $0x780] sm:$0xff]
    %v2426 = vld [vmem:[#allocation2 + $0x788] sm:$0xff]
    %v2427 = vld [vmem:[#allocation2 + $0x790] sm:$0xff]
    %v2428 = vld [vmem:[#allocation2 + $0x798] sm:$0xff]
    %v2429 = vld [vmem:[#allocation2 + $0x7a0] sm:$0xff]
    %v2430 = vld [vmem:[#allocation2 + $0x7a8] sm:$0xff]
    %v2431 = vld [vmem:[#allocation2 + $0x7b0] sm:$0xff]
    %v2432 = vld [vmem:[#allocation2 + $0x7b8] sm:$0xff]
    %v2433 = vld [vmem:[#allocation2 + $0x7c0] sm:$0xff]
    %v2434 = vld [vmem:[#allocation2 + $0x7c8] sm:$0xff]
    %v2435 = vld [vmem:[#allocation2 + $0x7d0] sm:$0xff]
    %v2436 = vld [vmem:[#allocation2 + $0x7d8] sm:$0xff]
    %v2437 = vld [vmem:[#allocation2 + $0x7e0] sm:$0xff]
    %v2438 = vld [vmem:[#allocation2 + $0x7e8] sm:$0xff]
    %v2439 = vld [vmem:[#allocation2 + $0x7f0] sm:$0xff]
    %v2440 = vld [vmem:[#allocation2 + $0x7f8] sm:$0xff]
    %v2441 = vld [vmem:[#allocation18] sm:$0xff]
    %v2443 = vlaneseq
    %v2444 = vshrl.u32 %v2443, 7
    %v2445 = vsub.s32 0, %v2444
    %v2446 = vrot.slane %v2441, %v2445
    %v2447 = vlaneseq
    %v2448 = vshrl.u32 %v2447, 7
    %v2449 = vsub.s32 1, %v2448
    %v2450 = vrot.slane %v2441, %v2449
    %v2451 = vlaneseq
    %v2452 = vshrl.u32 %v2451, 7
    %v2453 = vsub.s32 2, %v2452
    %v2454 = vrot.slane %v2441, %v2453
    %v2455 = vlaneseq
    %v2456 = vshrl.u32 %v2455, 7
    %v2457 = vsub.s32 3, %v2456
    %v2458 = vrot.slane %v2441, %v2457
    %v2459 = vlaneseq
    %v2460 = vshrl.u32 %v2459, 7
    %v2461 = vsub.s32 4, %v2460
    %v2462 = vrot.slane %v2441, %v2461
    %v2463 = vlaneseq
    %v2464 = vshrl.u32 %v2463, 7
    %v2465 = vsub.s32 5, %v2464
    %v2466 = vrot.slane %v2441, %v2465
    %v2467 = vlaneseq
    %v2468 = vshrl.u32 %v2467, 7
    %v2469 = vsub.s32 6, %v2468
    %v2470 = vrot.slane %v2441, %v2469
    %v2471 = vlaneseq
    %v2472 = vshrl.u32 %v2471, 7
    %v2473 = vsub.s32 7, %v2472
    %v2474 = vrot.slane %v2441, %v2473
    %v2739 = vunpack.c.l.b16 %v2185
    %v2740 = vunpack.c.h.b16 %v2185
    %v2741 = vunpack.c.l.b16 %v2186
    %v2742 = vunpack.c.h.b16 %v2186
    %v2743 = vunpack.c.l.b16 %v2187
    %v2744 = vunpack.c.h.b16 %v2187
    %v2745 = vunpack.c.l.b16 %v2188
    %v2746 = vunpack.c.h.b16 %v2188
    %v2747 = vunpack.c.l.b16 %v2189
    %v2748 = vunpack.c.h.b16 %v2189
    %v2749 = vunpack.c.l.b16 %v2190
    %v2750 = vunpack.c.h.b16 %v2190
    %v2751 = vunpack.c.l.b16 %v2191
    %v2752 = vunpack.c.h.b16 %v2191
    %v2753 = vunpack.c.l.b16 %v2192
    %v2754 = vunpack.c.h.b16 %v2192
    %v2755 = vunpack.c.l.b16 %v2193
    %v2756 = vunpack.c.h.b16 %v2193
    %v2757 = vunpack.c.l.b16 %v2194
    %v2758 = vunpack.c.h.b16 %v2194
    %v2759 = vunpack.c.l.b16 %v2195
    %v2760 = vunpack.c.h.b16 %v2195
    %v2761 = vunpack.c.l.b16 %v2196
    %v2762 = vunpack.c.h.b16 %v2196
    %v2763 = vunpack.c.l.b16 %v2197
    %v2764 = vunpack.c.h.b16 %v2197
    %v2765 = vunpack.c.l.b16 %v2198
    %v2766 = vunpack.c.h.b16 %v2198
    %v2767 = vunpack.c.l.b16 %v2199
    %v2768 = vunpack.c.h.b16 %v2199
    %v2769 = vunpack.c.l.b16 %v2200
    %v2770 = vunpack.c.h.b16 %v2200
    %v2771 = vunpack.c.l.b16 %v2201
    %v2772 = vunpack.c.h.b16 %v2201
    %v2773 = vunpack.c.l.b16 %v2202
    %v2774 = vunpack.c.h.b16 %v2202
    %v2775 = vunpack.c.l.b16 %v2203
    %v2776 = vunpack.c.h.b16 %v2203
    %v2777 = vunpack.c.l.b16 %v2204
    %v2778 = vunpack.c.h.b16 %v2204
    %v2779 = vunpack.c.l.b16 %v2205
    %v2780 = vunpack.c.h.b16 %v2205
    %v2781 = vunpack.c.l.b16 %v2206
    %v2782 = vunpack.c.h.b16 %v2206
    %v2783 = vunpack.c.l.b16 %v2207
    %v2784 = vunpack.c.h.b16 %v2207
    %v2785 = vunpack.c.l.b16 %v2208
    %v2786 = vunpack.c.h.b16 %v2208
    %v2787 = vunpack.c.l.b16 %v2209
    %v2788 = vunpack.c.h.b16 %v2209
    %v2789 = vunpack.c.l.b16 %v2210
    %v2790 = vunpack.c.h.b16 %v2210
    %v2791 = vunpack.c.l.b16 %v2211
    %v2792 = vunpack.c.h.b16 %v2211
    %v2793 = vunpack.c.l.b16 %v2212
    %v2794 = vunpack.c.h.b16 %v2212
    %v2795 = vunpack.c.l.b16 %v2213
    %v2796 = vunpack.c.h.b16 %v2213
    %v2797 = vunpack.c.l.b16 %v2214
    %v2798 = vunpack.c.h.b16 %v2214
    %v2799 = vunpack.c.l.b16 %v2215
    %v2800 = vunpack.c.h.b16 %v2215
    %v2801 = vunpack.c.l.b16 %v2216
    %v2802 = vunpack.c.h.b16 %v2216
    %v2803 = vunpack.c.l.b16 %v2217
    %v2804 = vunpack.c.h.b16 %v2217
    %v2805 = vunpack.c.l.b16 %v2218
    %v2806 = vunpack.c.h.b16 %v2218
    %v2807 = vunpack.c.l.b16 %v2219
    %v2808 = vunpack.c.h.b16 %v2219
    %v2809 = vunpack.c.l.b16 %v2220
    %v2810 = vunpack.c.h.b16 %v2220
    %v2811 = vunpack.c.l.b16 %v2221
    %v2812 = vunpack.c.h.b16 %v2221
    %v2813 = vunpack.c.l.b16 %v2222
    %v2814 = vunpack.c.h.b16 %v2222
    %v2815 = vunpack.c.l.b16 %v2223
    %v2816 = vunpack.c.h.b16 %v2223
    %v2817 = vunpack.c.l.b16 %v2224
    %v2818 = vunpack.c.h.b16 %v2224
    %v2819 = vunpack.c.l.b16 %v2225
    %v2820 = vunpack.c.h.b16 %v2225
    %v2821 = vunpack.c.l.b16 %v2226
    %v2822 = vunpack.c.h.b16 %v2226
    %v2823 = vunpack.c.l.b16 %v2227
    %v2824 = vunpack.c.h.b16 %v2227
    %v2825 = vunpack.c.l.b16 %v2228
    %v2826 = vunpack.c.h.b16 %v2228
    %v2827 = vunpack.c.l.b16 %v2229
    %v2828 = vunpack.c.h.b16 %v2229
    %v2829 = vunpack.c.l.b16 %v2230
    %v2830 = vunpack.c.h.b16 %v2230
    %v2831 = vunpack.c.l.b16 %v2231
    %v2832 = vunpack.c.h.b16 %v2231
    %v2833 = vunpack.c.l.b16 %v2232
    %v2834 = vunpack.c.h.b16 %v2232
    %v2835 = vunpack.c.l.b16 %v2233
    %v2836 = vunpack.c.h.b16 %v2233
    %v2837 = vunpack.c.l.b16 %v2234
    %v2838 = vunpack.c.h.b16 %v2234
    %v2839 = vunpack.c.l.b16 %v2235
    %v2840 = vunpack.c.h.b16 %v2235
    %v2841 = vunpack.c.l.b16 %v2236
    %v2842 = vunpack.c.h.b16 %v2236
    %v2843 = vunpack.c.l.b16 %v2237
    %v2844 = vunpack.c.h.b16 %v2237
    %v2845 = vunpack.c.l.b16 %v2238
    %v2846 = vunpack.c.h.b16 %v2238
    %v2847 = vunpack.c.l.b16 %v2239
    %v2848 = vunpack.c.h.b16 %v2239
    %v2849 = vunpack.c.l.b16 %v2240
    %v2850 = vunpack.c.h.b16 %v2240
    %v2851 = vunpack.c.l.b16 %v2241
    %v2852 = vunpack.c.h.b16 %v2241
    %v2853 = vunpack.c.l.b16 %v2242
    %v2854 = vunpack.c.h.b16 %v2242
    %v2855 = vunpack.c.l.b16 %v2243
    %v2856 = vunpack.c.h.b16 %v2243
    %v2857 = vunpack.c.l.b16 %v2244
    %v2858 = vunpack.c.h.b16 %v2244
    %v2859 = vunpack.c.l.b16 %v2245
    %v2860 = vunpack.c.h.b16 %v2245
    %v2861 = vunpack.c.l.b16 %v2246
    %v2862 = vunpack.c.h.b16 %v2246
    %v2863 = vunpack.c.l.b16 %v2247
    %v2864 = vunpack.c.h.b16 %v2247
    %v2865 = vunpack.c.l.b16 %v2248
    %v2866 = vunpack.c.h.b16 %v2248
    %v2867 = vunpack.c.l.b16 %v2249
    %v2868 = vunpack.c.h.b16 %v2249
    %v2869 = vunpack.c.l.b16 %v2250
    %v2870 = vunpack.c.h.b16 %v2250
    %v2871 = vunpack.c.l.b16 %v2251
    %v2872 = vunpack.c.h.b16 %v2251
    %v2873 = vunpack.c.l.b16 %v2252
    %v2874 = vunpack.c.h.b16 %v2252
    %v2875 = vunpack.c.l.b16 %v2253
    %v2876 = vunpack.c.h.b16 %v2253
    %v2877 = vunpack.c.l.b16 %v2254
    %v2878 = vunpack.c.h.b16 %v2254
    %v2879 = vunpack.c.l.b16 %v2255
    %v2880 = vunpack.c.h.b16 %v2255
    %v2881 = vunpack.c.l.b16 %v2256
    %v2882 = vunpack.c.h.b16 %v2256
    %v2883 = vunpack.c.l.b16 %v2257
    %v2884 = vunpack.c.h.b16 %v2257
    %v2885 = vunpack.c.l.b16 %v2258
    %v2886 = vunpack.c.h.b16 %v2258
    %v2887 = vunpack.c.l.b16 %v2259
    %v2888 = vunpack.c.h.b16 %v2259
    %v2889 = vunpack.c.l.b16 %v2260
    %v2890 = vunpack.c.h.b16 %v2260
    %v2891 = vunpack.c.l.b16 %v2261
    %v2892 = vunpack.c.h.b16 %v2261
    %v2893 = vunpack.c.l.b16 %v2262
    %v2894 = vunpack.c.h.b16 %v2262
    %v2895 = vunpack.c.l.b16 %v2263
    %v2896 = vunpack.c.h.b16 %v2263
    %v2897 = vunpack.c.l.b16 %v2264
    %v2898 = vunpack.c.h.b16 %v2264
    %v2899 = vunpack.c.l.b16 %v2265
    %v2900 = vunpack.c.h.b16 %v2265
    %v2901 = vunpack.c.l.b16 %v2266
    %v2902 = vunpack.c.h.b16 %v2266
    %v2903 = vunpack.c.l.b16 %v2267
    %v2904 = vunpack.c.h.b16 %v2267
    %v2905 = vunpack.c.l.b16 %v2268
    %v2906 = vunpack.c.h.b16 %v2268
    %v2907 = vunpack.c.l.b16 %v2269
    %v2908 = vunpack.c.h.b16 %v2269
    %v2909 = vunpack.c.l.b16 %v2270
    %v2910 = vunpack.c.h.b16 %v2270
    %v2911 = vunpack.c.l.b16 %v2271
    %v2912 = vunpack.c.h.b16 %v2271
    %v2913 = vunpack.c.l.b16 %v2272
    %v2914 = vunpack.c.h.b16 %v2272
    %v2915 = vunpack.c.l.b16 %v2273
    %v2916 = vunpack.c.h.b16 %v2273
    %v2917 = vunpack.c.l.b16 %v2274
    %v2918 = vunpack.c.h.b16 %v2274
    %v2919 = vunpack.c.l.b16 %v2275
    %v2920 = vunpack.c.h.b16 %v2275
    %v2921 = vunpack.c.l.b16 %v2276
    %v2922 = vunpack.c.h.b16 %v2276
    %v2923 = vunpack.c.l.b16 %v2277
    %v2924 = vunpack.c.h.b16 %v2277
    %v2925 = vunpack.c.l.b16 %v2278
    %v2926 = vunpack.c.h.b16 %v2278
    %v2927 = vunpack.c.l.b16 %v2279
    %v2928 = vunpack.c.h.b16 %v2279
    %v2929 = vunpack.c.l.b16 %v2280
    %v2930 = vunpack.c.h.b16 %v2280
    %v2931 = vunpack.c.l.b16 %v2281
    %v2932 = vunpack.c.h.b16 %v2281
    %v2933 = vunpack.c.l.b16 %v2282
    %v2934 = vunpack.c.h.b16 %v2282
    %v2935 = vunpack.c.l.b16 %v2283
    %v2936 = vunpack.c.h.b16 %v2283
    %v2937 = vunpack.c.l.b16 %v2284
    %v2938 = vunpack.c.h.b16 %v2284
    %v2939 = vunpack.c.l.b16 %v2285
    %v2940 = vunpack.c.h.b16 %v2285
    %v2941 = vunpack.c.l.b16 %v2286
    %v2942 = vunpack.c.h.b16 %v2286
    %v2943 = vunpack.c.l.b16 %v2287
    %v2944 = vunpack.c.h.b16 %v2287
    %v2945 = vunpack.c.l.b16 %v2288
    %v2946 = vunpack.c.h.b16 %v2288
    %v2947 = vunpack.c.l.b16 %v2289
    %v2948 = vunpack.c.h.b16 %v2289
    %v2949 = vunpack.c.l.b16 %v2290
    %v2950 = vunpack.c.h.b16 %v2290
    %v2951 = vunpack.c.l.b16 %v2291
    %v2952 = vunpack.c.h.b16 %v2291
    %v2953 = vunpack.c.l.b16 %v2292
    %v2954 = vunpack.c.h.b16 %v2292
    %v2955 = vunpack.c.l.b16 %v2293
    %v2956 = vunpack.c.h.b16 %v2293
    %v2957 = vunpack.c.l.b16 %v2294
    %v2958 = vunpack.c.h.b16 %v2294
    %v2959 = vunpack.c.l.b16 %v2295
    %v2960 = vunpack.c.h.b16 %v2295
    %v2961 = vunpack.c.l.b16 %v2296
    %v2962 = vunpack.c.h.b16 %v2296
    %v2963 = vunpack.c.l.b16 %v2297
    %v2964 = vunpack.c.h.b16 %v2297
    %v2965 = vunpack.c.l.b16 %v2298
    %v2966 = vunpack.c.h.b16 %v2298
    %v2967 = vunpack.c.l.b16 %v2299
    %v2968 = vunpack.c.h.b16 %v2299
    %v2969 = vunpack.c.l.b16 %v2300
    %v2970 = vunpack.c.h.b16 %v2300
    %v2971 = vunpack.c.l.b16 %v2301
    %v2972 = vunpack.c.h.b16 %v2301
    %v2973 = vunpack.c.l.b16 %v2302
    %v2974 = vunpack.c.h.b16 %v2302
    %v2975 = vunpack.c.l.b16 %v2303
    %v2976 = vunpack.c.h.b16 %v2303
    %v2977 = vunpack.c.l.b16 %v2304
    %v2978 = vunpack.c.h.b16 %v2304
    %v2979 = vunpack.c.l.b16 %v2305
    %v2980 = vunpack.c.h.b16 %v2305
    %v2981 = vunpack.c.l.b16 %v2306
    %v2982 = vunpack.c.h.b16 %v2306
    %v2983 = vunpack.c.l.b16 %v2307
    %v2984 = vunpack.c.h.b16 %v2307
    %v2985 = vunpack.c.l.b16 %v2308
    %v2986 = vunpack.c.h.b16 %v2308
    %v2987 = vunpack.c.l.b16 %v2309
    %v2988 = vunpack.c.h.b16 %v2309
    %v2989 = vunpack.c.l.b16 %v2310
    %v2990 = vunpack.c.h.b16 %v2310
    %v2991 = vunpack.c.l.b16 %v2311
    %v2992 = vunpack.c.h.b16 %v2311
    %v2993 = vunpack.c.l.b16 %v2312
    %v2994 = vunpack.c.h.b16 %v2312
    %v2995 = vunpack.c.l.b16 %v2313
    %v2996 = vunpack.c.h.b16 %v2313
    %v2997 = vunpack.c.l.b16 %v2314
    %v2998 = vunpack.c.h.b16 %v2314
    %v2999 = vunpack.c.l.b16 %v2315
    %v3000 = vunpack.c.h.b16 %v2315
    %v3001 = vunpack.c.l.b16 %v2316
    %v3002 = vunpack.c.h.b16 %v2316
    %v3003 = vunpack.c.l.b16 %v2317
    %v3004 = vunpack.c.h.b16 %v2317
    %v3005 = vunpack.c.l.b16 %v2318
    %v3006 = vunpack.c.h.b16 %v2318
    %v3007 = vunpack.c.l.b16 %v2319
    %v3008 = vunpack.c.h.b16 %v2319
    %v3009 = vunpack.c.l.b16 %v2320
    %v3010 = vunpack.c.h.b16 %v2320
    %v3011 = vunpack.c.l.b16 %v2321
    %v3012 = vunpack.c.h.b16 %v2321
    %v3013 = vunpack.c.l.b16 %v2322
    %v3014 = vunpack.c.h.b16 %v2322
    %v3015 = vunpack.c.l.b16 %v2323
    %v3016 = vunpack.c.h.b16 %v2323
    %v3017 = vunpack.c.l.b16 %v2324
    %v3018 = vunpack.c.h.b16 %v2324
    %v3019 = vunpack.c.l.b16 %v2325
    %v3020 = vunpack.c.h.b16 %v2325
    %v3021 = vunpack.c.l.b16 %v2326
    %v3022 = vunpack.c.h.b16 %v2326
    %v3023 = vunpack.c.l.b16 %v2327
    %v3024 = vunpack.c.h.b16 %v2327
    %v3025 = vunpack.c.l.b16 %v2328
    %v3026 = vunpack.c.h.b16 %v2328
    %v3027 = vunpack.c.l.b16 %v2329
    %v3028 = vunpack.c.h.b16 %v2329
    %v3029 = vunpack.c.l.b16 %v2330
    %v3030 = vunpack.c.h.b16 %v2330
    %v3031 = vunpack.c.l.b16 %v2331
    %v3032 = vunpack.c.h.b16 %v2331
    %v3033 = vunpack.c.l.b16 %v2332
    %v3034 = vunpack.c.h.b16 %v2332
    %v3035 = vunpack.c.l.b16 %v2333
    %v3036 = vunpack.c.h.b16 %v2333
    %v3037 = vunpack.c.l.b16 %v2334
    %v3038 = vunpack.c.h.b16 %v2334
    %v3039 = vunpack.c.l.b16 %v2335
    %v3040 = vunpack.c.h.b16 %v2335
    %v3041 = vunpack.c.l.b16 %v2336
    %v3042 = vunpack.c.h.b16 %v2336
    %v3043 = vunpack.c.l.b16 %v2337
    %v3044 = vunpack.c.h.b16 %v2337
    %v3045 = vunpack.c.l.b16 %v2338
    %v3046 = vunpack.c.h.b16 %v2338
    %v3047 = vunpack.c.l.b16 %v2339
    %v3048 = vunpack.c.h.b16 %v2339
    %v3049 = vunpack.c.l.b16 %v2340
    %v3050 = vunpack.c.h.b16 %v2340
    %v3051 = vunpack.c.l.b16 %v2341
    %v3052 = vunpack.c.h.b16 %v2341
    %v3053 = vunpack.c.l.b16 %v2342
    %v3054 = vunpack.c.h.b16 %v2342
    %v3055 = vunpack.c.l.b16 %v2343
    %v3056 = vunpack.c.h.b16 %v2343
    %v3057 = vunpack.c.l.b16 %v2344
    %v3058 = vunpack.c.h.b16 %v2344
    %v3059 = vunpack.c.l.b16 %v2345
    %v3060 = vunpack.c.h.b16 %v2345
    %v3061 = vunpack.c.l.b16 %v2346
    %v3062 = vunpack.c.h.b16 %v2346
    %v3063 = vunpack.c.l.b16 %v2347
    %v3064 = vunpack.c.h.b16 %v2347
    %v3065 = vunpack.c.l.b16 %v2348
    %v3066 = vunpack.c.h.b16 %v2348
    %v3067 = vunpack.c.l.b16 %v2349
    %v3068 = vunpack.c.h.b16 %v2349
    %v3069 = vunpack.c.l.b16 %v2350
    %v3070 = vunpack.c.h.b16 %v2350
    %v3071 = vunpack.c.l.b16 %v2351
    %v3072 = vunpack.c.h.b16 %v2351
    %v3073 = vunpack.c.l.b16 %v2352
    %v3074 = vunpack.c.h.b16 %v2352
    %v3075 = vunpack.c.l.b16 %v2353
    %v3076 = vunpack.c.h.b16 %v2353
    %v3077 = vunpack.c.l.b16 %v2354
    %v3078 = vunpack.c.h.b16 %v2354
    %v3079 = vunpack.c.l.b16 %v2355
    %v3080 = vunpack.c.h.b16 %v2355
    %v3081 = vunpack.c.l.b16 %v2356
    %v3082 = vunpack.c.h.b16 %v2356
    %v3083 = vunpack.c.l.b16 %v2357
    %v3084 = vunpack.c.h.b16 %v2357
    %v3085 = vunpack.c.l.b16 %v2358
    %v3086 = vunpack.c.h.b16 %v2358
    %v3087 = vunpack.c.l.b16 %v2359
    %v3088 = vunpack.c.h.b16 %v2359
    %v3089 = vunpack.c.l.b16 %v2360
    %v3090 = vunpack.c.h.b16 %v2360
    %v3091 = vunpack.c.l.b16 %v2361
    %v3092 = vunpack.c.h.b16 %v2361
    %v3093 = vunpack.c.l.b16 %v2362
    %v3094 = vunpack.c.h.b16 %v2362
    %v3095 = vunpack.c.l.b16 %v2363
    %v3096 = vunpack.c.h.b16 %v2363
    %v3097 = vunpack.c.l.b16 %v2364
    %v3098 = vunpack.c.h.b16 %v2364
    %v3099 = vunpack.c.l.b16 %v2365
    %v3100 = vunpack.c.h.b16 %v2365
    %v3101 = vunpack.c.l.b16 %v2366
    %v3102 = vunpack.c.h.b16 %v2366
    %v3103 = vunpack.c.l.b16 %v2367
    %v3104 = vunpack.c.h.b16 %v2367
    %v3105 = vunpack.c.l.b16 %v2368
    %v3106 = vunpack.c.h.b16 %v2368
    %v3107 = vunpack.c.l.b16 %v2369
    %v3108 = vunpack.c.h.b16 %v2369
    %v3109 = vunpack.c.l.b16 %v2370
    %v3110 = vunpack.c.h.b16 %v2370
    %v3111 = vunpack.c.l.b16 %v2371
    %v3112 = vunpack.c.h.b16 %v2371
    %v3113 = vunpack.c.l.b16 %v2372
    %v3114 = vunpack.c.h.b16 %v2372
    %v3115 = vunpack.c.l.b16 %v2373
    %v3116 = vunpack.c.h.b16 %v2373
    %v3117 = vunpack.c.l.b16 %v2374
    %v3118 = vunpack.c.h.b16 %v2374
    %v3119 = vunpack.c.l.b16 %v2375
    %v3120 = vunpack.c.h.b16 %v2375
    %v3121 = vunpack.c.l.b16 %v2376
    %v3122 = vunpack.c.h.b16 %v2376
    %v3123 = vunpack.c.l.b16 %v2377
    %v3124 = vunpack.c.h.b16 %v2377
    %v3125 = vunpack.c.l.b16 %v2378
    %v3126 = vunpack.c.h.b16 %v2378
    %v3127 = vunpack.c.l.b16 %v2379
    %v3128 = vunpack.c.h.b16 %v2379
    %v3129 = vunpack.c.l.b16 %v2380
    %v3130 = vunpack.c.h.b16 %v2380
    %v3131 = vunpack.c.l.b16 %v2381
    %v3132 = vunpack.c.h.b16 %v2381
    %v3133 = vunpack.c.l.b16 %v2382
    %v3134 = vunpack.c.h.b16 %v2382
    %v3135 = vunpack.c.l.b16 %v2383
    %v3136 = vunpack.c.h.b16 %v2383
    %v3137 = vunpack.c.l.b16 %v2384
    %v3138 = vunpack.c.h.b16 %v2384
    %v3139 = vunpack.c.l.b16 %v2385
    %v3140 = vunpack.c.h.b16 %v2385
    %v3141 = vunpack.c.l.b16 %v2386
    %v3142 = vunpack.c.h.b16 %v2386
    %v3143 = vunpack.c.l.b16 %v2387
    %v3144 = vunpack.c.h.b16 %v2387
    %v3145 = vunpack.c.l.b16 %v2388
    %v3146 = vunpack.c.h.b16 %v2388
    %v3147 = vunpack.c.l.b16 %v2389
    %v3148 = vunpack.c.h.b16 %v2389
    %v3149 = vunpack.c.l.b16 %v2390
    %v3150 = vunpack.c.h.b16 %v2390
    %v3151 = vunpack.c.l.b16 %v2391
    %v3152 = vunpack.c.h.b16 %v2391
    %v3153 = vunpack.c.l.b16 %v2392
    %v3154 = vunpack.c.h.b16 %v2392
    %v3155 = vunpack.c.l.b16 %v2393
    %v3156 = vunpack.c.h.b16 %v2393
    %v3157 = vunpack.c.l.b16 %v2394
    %v3158 = vunpack.c.h.b16 %v2394
    %v3159 = vunpack.c.l.b16 %v2395
    %v3160 = vunpack.c.h.b16 %v2395
    %v3161 = vunpack.c.l.b16 %v2396
    %v3162 = vunpack.c.h.b16 %v2396
    %v3163 = vunpack.c.l.b16 %v2397
    %v3164 = vunpack.c.h.b16 %v2397
    %v3165 = vunpack.c.l.b16 %v2398
    %v3166 = vunpack.c.h.b16 %v2398
    %v3167 = vunpack.c.l.b16 %v2399
    %v3168 = vunpack.c.h.b16 %v2399
    %v3169 = vunpack.c.l.b16 %v2400
    %v3170 = vunpack.c.h.b16 %v2400
    %v3171 = vunpack.c.l.b16 %v2401
    %v3172 = vunpack.c.h.b16 %v2401
    %v3173 = vunpack.c.l.b16 %v2402
    %v3174 = vunpack.c.h.b16 %v2402
    %v3175 = vunpack.c.l.b16 %v2403
    %v3176 = vunpack.c.h.b16 %v2403
    %v3177 = vunpack.c.l.b16 %v2404
    %v3178 = vunpack.c.h.b16 %v2404
    %v3179 = vunpack.c.l.b16 %v2405
    %v3180 = vunpack.c.h.b16 %v2405
    %v3181 = vunpack.c.l.b16 %v2406
    %v3182 = vunpack.c.h.b16 %v2406
    %v3183 = vunpack.c.l.b16 %v2407
    %v3184 = vunpack.c.h.b16 %v2407
    %v3185 = vunpack.c.l.b16 %v2408
    %v3186 = vunpack.c.h.b16 %v2408
    %v3187 = vunpack.c.l.b16 %v2409
    %v3188 = vunpack.c.h.b16 %v2409
    %v3189 = vunpack.c.l.b16 %v2410
    %v3190 = vunpack.c.h.b16 %v2410
    %v3191 = vunpack.c.l.b16 %v2411
    %v3192 = vunpack.c.h.b16 %v2411
    %v3193 = vunpack.c.l.b16 %v2412
    %v3194 = vunpack.c.h.b16 %v2412
    %v3195 = vunpack.c.l.b16 %v2413
    %v3196 = vunpack.c.h.b16 %v2413
    %v3197 = vunpack.c.l.b16 %v2414
    %v3198 = vunpack.c.h.b16 %v2414
    %v3199 = vunpack.c.l.b16 %v2415
    %v3200 = vunpack.c.h.b16 %v2415
    %v3201 = vunpack.c.l.b16 %v2416
    %v3202 = vunpack.c.h.b16 %v2416
    %v3203 = vunpack.c.l.b16 %v2417
    %v3204 = vunpack.c.h.b16 %v2417
    %v3205 = vunpack.c.l.b16 %v2418
    %v3206 = vunpack.c.h.b16 %v2418
    %v3207 = vunpack.c.l.b16 %v2419
    %v3208 = vunpack.c.h.b16 %v2419
    %v3209 = vunpack.c.l.b16 %v2420
    %v3210 = vunpack.c.h.b16 %v2420
    %v3211 = vunpack.c.l.b16 %v2421
    %v3212 = vunpack.c.h.b16 %v2421
    %v3213 = vunpack.c.l.b16 %v2422
    %v3214 = vunpack.c.h.b16 %v2422
    %v3215 = vunpack.c.l.b16 %v2423
    %v3216 = vunpack.c.h.b16 %v2423
    %v3217 = vunpack.c.l.b16 %v2424
    %v3218 = vunpack.c.h.b16 %v2424
    %v3219 = vunpack.c.l.b16 %v2425
    %v3220 = vunpack.c.h.b16 %v2425
    %v3221 = vunpack.c.l.b16 %v2426
    %v3222 = vunpack.c.h.b16 %v2426
    %v3223 = vunpack.c.l.b16 %v2427
    %v3224 = vunpack.c.h.b16 %v2427
    %v3225 = vunpack.c.l.b16 %v2428
    %v3226 = vunpack.c.h.b16 %v2428
    %v3227 = vunpack.c.l.b16 %v2429
    %v3228 = vunpack.c.h.b16 %v2429
    %v3229 = vunpack.c.l.b16 %v2430
    %v3230 = vunpack.c.h.b16 %v2430
    %v3231 = vunpack.c.l.b16 %v2431
    %v3232 = vunpack.c.h.b16 %v2431
    %v3233 = vunpack.c.l.b16 %v2432
    %v3234 = vunpack.c.h.b16 %v2432
    %v3235 = vunpack.c.l.b16 %v2433
    %v3236 = vunpack.c.h.b16 %v2433
    %v3237 = vunpack.c.l.b16 %v2434
    %v3238 = vunpack.c.h.b16 %v2434
    %v3239 = vunpack.c.l.b16 %v2435
    %v3240 = vunpack.c.h.b16 %v2435
    %v3241 = vunpack.c.l.b16 %v2436
    %v3242 = vunpack.c.h.b16 %v2436
    %v3243 = vunpack.c.l.b16 %v2437
    %v3244 = vunpack.c.h.b16 %v2437
    %v3245 = vunpack.c.l.b16 %v2438
    %v3246 = vunpack.c.h.b16 %v2438
    %v3247 = vunpack.c.l.b16 %v2439
    %v3248 = vunpack.c.h.b16 %v2439
    %v3249 = vunpack.c.l.b16 %v2440
    %v3250 = vunpack.c.h.b16 %v2440
    %v3251 = vpack.c.b16 %v2747, %v2739
    %v3252 = vpack.c.b16 %v2748, %v2740
    %v3253 = vpack.c.b16 %v2749, %v2741
    %v3254 = vpack.c.b16 %v2750, %v2742
    %v3255 = vpack.c.b16 %v2751, %v2743
    %v3256 = vpack.c.b16 %v2752, %v2744
    %v3257 = vpack.c.b16 %v2753, %v2745
    %v3258 = vpack.c.b16 %v2754, %v2746
    %v3259 = vpack.c.b16 %v2763, %v2755
    %v3260 = vpack.c.b16 %v2764, %v2756
    %v3261 = vpack.c.b16 %v2765, %v2757
    %v3262 = vpack.c.b16 %v2766, %v2758
    %v3263 = vpack.c.b16 %v2767, %v2759
    %v3264 = vpack.c.b16 %v2768, %v2760
    %v3265 = vpack.c.b16 %v2769, %v2761
    %v3266 = vpack.c.b16 %v2770, %v2762
    %v3267 = vpack.c.b16 %v2779, %v2771
    %v3268 = vpack.c.b16 %v2780, %v2772
    %v3269 = vpack.c.b16 %v2781, %v2773
    %v3270 = vpack.c.b16 %v2782, %v2774
    %v3271 = vpack.c.b16 %v2783, %v2775
    %v3272 = vpack.c.b16 %v2784, %v2776
    %v3273 = vpack.c.b16 %v2785, %v2777
    %v3274 = vpack.c.b16 %v2786, %v2778
    %v3275 = vpack.c.b16 %v2795, %v2787
    %v3276 = vpack.c.b16 %v2796, %v2788
    %v3277 = vpack.c.b16 %v2797, %v2789
    %v3278 = vpack.c.b16 %v2798, %v2790
    %v3279 = vpack.c.b16 %v2799, %v2791
    %v3280 = vpack.c.b16 %v2800, %v2792
    %v3281 = vpack.c.b16 %v2801, %v2793
    %v3282 = vpack.c.b16 %v2802, %v2794
    %v3283 = vpack.c.b16 %v2811, %v2803
    %v3284 = vpack.c.b16 %v2812, %v2804
    %v3285 = vpack.c.b16 %v2813, %v2805
    %v3286 = vpack.c.b16 %v2814, %v2806
    %v3287 = vpack.c.b16 %v2815, %v2807
    %v3288 = vpack.c.b16 %v2816, %v2808
    %v3289 = vpack.c.b16 %v2817, %v2809
    %v3290 = vpack.c.b16 %v2818, %v2810
    %v3291 = vpack.c.b16 %v2827, %v2819
    %v3292 = vpack.c.b16 %v2828, %v2820
    %v3293 = vpack.c.b16 %v2829, %v2821
    %v3294 = vpack.c.b16 %v2830, %v2822
    %v3295 = vpack.c.b16 %v2831, %v2823
    %v3296 = vpack.c.b16 %v2832, %v2824
    %v3297 = vpack.c.b16 %v2833, %v2825
    %v3298 = vpack.c.b16 %v2834, %v2826
    %v3299 = vpack.c.b16 %v2843, %v2835
    %v3300 = vpack.c.b16 %v2844, %v2836
    %v3301 = vpack.c.b16 %v2845, %v2837
    %v3302 = vpack.c.b16 %v2846, %v2838
    %v3303 = vpack.c.b16 %v2847, %v2839
    %v3304 = vpack.c.b16 %v2848, %v2840
    %v3305 = vpack.c.b16 %v2849, %v2841
    %v3306 = vpack.c.b16 %v2850, %v2842
    %v3307 = vpack.c.b16 %v2859, %v2851
    %v3308 = vpack.c.b16 %v2860, %v2852
    %v3309 = vpack.c.b16 %v2861, %v2853
    %v3310 = vpack.c.b16 %v2862, %v2854
    %v3311 = vpack.c.b16 %v2863, %v2855
    %v3312 = vpack.c.b16 %v2864, %v2856
    %v3313 = vpack.c.b16 %v2865, %v2857
    %v3314 = vpack.c.b16 %v2866, %v2858
    %v3315 = vpack.c.b16 %v2875, %v2867
    %v3316 = vpack.c.b16 %v2876, %v2868
    %v3317 = vpack.c.b16 %v2877, %v2869
    %v3318 = vpack.c.b16 %v2878, %v2870
    %v3319 = vpack.c.b16 %v2879, %v2871
    %v3320 = vpack.c.b16 %v2880, %v2872
    %v3321 = vpack.c.b16 %v2881, %v2873
    %v3322 = vpack.c.b16 %v2882, %v2874
    %v3323 = vpack.c.b16 %v2891, %v2883
    %v3324 = vpack.c.b16 %v2892, %v2884
    %v3325 = vpack.c.b16 %v2893, %v2885
    %v3326 = vpack.c.b16 %v2894, %v2886
    %v3327 = vpack.c.b16 %v2895, %v2887
    %v3328 = vpack.c.b16 %v2896, %v2888
    %v3329 = vpack.c.b16 %v2897, %v2889
    %v3330 = vpack.c.b16 %v2898, %v2890
    %v3331 = vpack.c.b16 %v2907, %v2899
    %v3332 = vpack.c.b16 %v2908, %v2900
    %v3333 = vpack.c.b16 %v2909, %v2901
    %v3334 = vpack.c.b16 %v2910, %v2902
    %v3335 = vpack.c.b16 %v2911, %v2903
    %v3336 = vpack.c.b16 %v2912, %v2904
    %v3337 = vpack.c.b16 %v2913, %v2905
    %v3338 = vpack.c.b16 %v2914, %v2906
    %v3339 = vpack.c.b16 %v2923, %v2915
    %v3340 = vpack.c.b16 %v2924, %v2916
    %v3341 = vpack.c.b16 %v2925, %v2917
    %v3342 = vpack.c.b16 %v2926, %v2918
    %v3343 = vpack.c.b16 %v2927, %v2919
    %v3344 = vpack.c.b16 %v2928, %v2920
    %v3345 = vpack.c.b16 %v2929, %v2921
    %v3346 = vpack.c.b16 %v2930, %v2922
    %v3347 = vpack.c.b16 %v2939, %v2931
    %v3348 = vpack.c.b16 %v2940, %v2932
    %v3349 = vpack.c.b16 %v2941, %v2933
    %v3350 = vpack.c.b16 %v2942, %v2934
    %v3351 = vpack.c.b16 %v2943, %v2935
    %v3352 = vpack.c.b16 %v2944, %v2936
    %v3353 = vpack.c.b16 %v2945, %v2937
    %v3354 = vpack.c.b16 %v2946, %v2938
    %v3355 = vpack.c.b16 %v2955, %v2947
    %v3356 = vpack.c.b16 %v2956, %v2948
    %v3357 = vpack.c.b16 %v2957, %v2949
    %v3358 = vpack.c.b16 %v2958, %v2950
    %v3359 = vpack.c.b16 %v2959, %v2951
    %v3360 = vpack.c.b16 %v2960, %v2952
    %v3361 = vpack.c.b16 %v2961, %v2953
    %v3362 = vpack.c.b16 %v2962, %v2954
    %v3363 = vpack.c.b16 %v2971, %v2963
    %v3364 = vpack.c.b16 %v2972, %v2964
    %v3365 = vpack.c.b16 %v2973, %v2965
    %v3366 = vpack.c.b16 %v2974, %v2966
    %v3367 = vpack.c.b16 %v2975, %v2967
    %v3368 = vpack.c.b16 %v2976, %v2968
    %v3369 = vpack.c.b16 %v2977, %v2969
    %v3370 = vpack.c.b16 %v2978, %v2970
    %v3371 = vpack.c.b16 %v2987, %v2979
    %v3372 = vpack.c.b16 %v2988, %v2980
    %v3373 = vpack.c.b16 %v2989, %v2981
    %v3374 = vpack.c.b16 %v2990, %v2982
    %v3375 = vpack.c.b16 %v2991, %v2983
    %v3376 = vpack.c.b16 %v2992, %v2984
    %v3377 = vpack.c.b16 %v2993, %v2985
    %v3378 = vpack.c.b16 %v2994, %v2986
    %v3379 = vpack.c.b16 %v3003, %v2995
    %v3380 = vpack.c.b16 %v3004, %v2996
    %v3381 = vpack.c.b16 %v3005, %v2997
    %v3382 = vpack.c.b16 %v3006, %v2998
    %v3383 = vpack.c.b16 %v3007, %v2999
    %v3384 = vpack.c.b16 %v3008, %v3000
    %v3385 = vpack.c.b16 %v3009, %v3001
    %v3386 = vpack.c.b16 %v3010, %v3002
    %v3387 = vpack.c.b16 %v3019, %v3011
    %v3388 = vpack.c.b16 %v3020, %v3012
    %v3389 = vpack.c.b16 %v3021, %v3013
    %v3390 = vpack.c.b16 %v3022, %v3014
    %v3391 = vpack.c.b16 %v3023, %v3015
    %v3392 = vpack.c.b16 %v3024, %v3016
    %v3393 = vpack.c.b16 %v3025, %v3017
    %v3394 = vpack.c.b16 %v3026, %v3018
    %v3395 = vpack.c.b16 %v3035, %v3027
    %v3396 = vpack.c.b16 %v3036, %v3028
    %v3397 = vpack.c.b16 %v3037, %v3029
    %v3398 = vpack.c.b16 %v3038, %v3030
    %v3399 = vpack.c.b16 %v3039, %v3031
    %v3400 = vpack.c.b16 %v3040, %v3032
    %v3401 = vpack.c.b16 %v3041, %v3033
    %v3402 = vpack.c.b16 %v3042, %v3034
    %v3403 = vpack.c.b16 %v3051, %v3043
    %v3404 = vpack.c.b16 %v3052, %v3044
    %v3405 = vpack.c.b16 %v3053, %v3045
    %v3406 = vpack.c.b16 %v3054, %v3046
    %v3407 = vpack.c.b16 %v3055, %v3047
    %v3408 = vpack.c.b16 %v3056, %v3048
    %v3409 = vpack.c.b16 %v3057, %v3049
    %v3410 = vpack.c.b16 %v3058, %v3050
    %v3411 = vpack.c.b16 %v3067, %v3059
    %v3412 = vpack.c.b16 %v3068, %v3060
    %v3413 = vpack.c.b16 %v3069, %v3061
    %v3414 = vpack.c.b16 %v3070, %v3062
    %v3415 = vpack.c.b16 %v3071, %v3063
    %v3416 = vpack.c.b16 %v3072, %v3064
    %v3417 = vpack.c.b16 %v3073, %v3065
    %v3418 = vpack.c.b16 %v3074, %v3066
    %v3419 = vpack.c.b16 %v3083, %v3075
    %v3420 = vpack.c.b16 %v3084, %v3076
    %v3421 = vpack.c.b16 %v3085, %v3077
    %v3422 = vpack.c.b16 %v3086, %v3078
    %v3423 = vpack.c.b16 %v3087, %v3079
    %v3424 = vpack.c.b16 %v3088, %v3080
    %v3425 = vpack.c.b16 %v3089, %v3081
    %v3426 = vpack.c.b16 %v3090, %v3082
    %v3427 = vpack.c.b16 %v3099, %v3091
    %v3428 = vpack.c.b16 %v3100, %v3092
    %v3429 = vpack.c.b16 %v3101, %v3093
    %v3430 = vpack.c.b16 %v3102, %v3094
    %v3431 = vpack.c.b16 %v3103, %v3095
    %v3432 = vpack.c.b16 %v3104, %v3096
    %v3433 = vpack.c.b16 %v3105, %v3097
    %v3434 = vpack.c.b16 %v3106, %v3098
    %v3435 = vpack.c.b16 %v3115, %v3107
    %v3436 = vpack.c.b16 %v3116, %v3108
    %v3437 = vpack.c.b16 %v3117, %v3109
    %v3438 = vpack.c.b16 %v3118, %v3110
    %v3439 = vpack.c.b16 %v3119, %v3111
    %v3440 = vpack.c.b16 %v3120, %v3112
    %v3441 = vpack.c.b16 %v3121, %v3113
    %v3442 = vpack.c.b16 %v3122, %v3114
    %v3443 = vpack.c.b16 %v3131, %v3123
    %v3444 = vpack.c.b16 %v3132, %v3124
    %v3445 = vpack.c.b16 %v3133, %v3125
    %v3446 = vpack.c.b16 %v3134, %v3126
    %v3447 = vpack.c.b16 %v3135, %v3127
    %v3448 = vpack.c.b16 %v3136, %v3128
    %v3449 = vpack.c.b16 %v3137, %v3129
    %v3450 = vpack.c.b16 %v3138, %v3130
    %v3451 = vpack.c.b16 %v3147, %v3139
    %v3452 = vpack.c.b16 %v3148, %v3140
    %v3453 = vpack.c.b16 %v3149, %v3141
    %v3454 = vpack.c.b16 %v3150, %v3142
    %v3455 = vpack.c.b16 %v3151, %v3143
    %v3456 = vpack.c.b16 %v3152, %v3144
    %v3457 = vpack.c.b16 %v3153, %v3145
    %v3458 = vpack.c.b16 %v3154, %v3146
    %v3459 = vpack.c.b16 %v3163, %v3155
    %v3460 = vpack.c.b16 %v3164, %v3156
    %v3461 = vpack.c.b16 %v3165, %v3157
    %v3462 = vpack.c.b16 %v3166, %v3158
    %v3463 = vpack.c.b16 %v3167, %v3159
    %v3464 = vpack.c.b16 %v3168, %v3160
    %v3465 = vpack.c.b16 %v3169, %v3161
    %v3466 = vpack.c.b16 %v3170, %v3162
    %v3467 = vpack.c.b16 %v3179, %v3171
    %v3468 = vpack.c.b16 %v3180, %v3172
    %v3469 = vpack.c.b16 %v3181, %v3173
    %v3470 = vpack.c.b16 %v3182, %v3174
    %v3471 = vpack.c.b16 %v3183, %v3175
    %v3472 = vpack.c.b16 %v3184, %v3176
    %v3473 = vpack.c.b16 %v3185, %v3177
    %v3474 = vpack.c.b16 %v3186, %v3178
    %v3475 = vpack.c.b16 %v3195, %v3187
    %v3476 = vpack.c.b16 %v3196, %v3188
    %v3477 = vpack.c.b16 %v3197, %v3189
    %v3478 = vpack.c.b16 %v3198, %v3190
    %v3479 = vpack.c.b16 %v3199, %v3191
    %v3480 = vpack.c.b16 %v3200, %v3192
    %v3481 = vpack.c.b16 %v3201, %v3193
    %v3482 = vpack.c.b16 %v3202, %v3194
    %v3483 = vpack.c.b16 %v3211, %v3203
    %v3484 = vpack.c.b16 %v3212, %v3204
    %v3485 = vpack.c.b16 %v3213, %v3205
    %v3486 = vpack.c.b16 %v3214, %v3206
    %v3487 = vpack.c.b16 %v3215, %v3207
    %v3488 = vpack.c.b16 %v3216, %v3208
    %v3489 = vpack.c.b16 %v3217, %v3209
    %v3490 = vpack.c.b16 %v3218, %v3210
    %v3491 = vpack.c.b16 %v3227, %v3219
    %v3492 = vpack.c.b16 %v3228, %v3220
    %v3493 = vpack.c.b16 %v3229, %v3221
    %v3494 = vpack.c.b16 %v3230, %v3222
    %v3495 = vpack.c.b16 %v3231, %v3223
    %v3496 = vpack.c.b16 %v3232, %v3224
    %v3497 = vpack.c.b16 %v3233, %v3225
    %v3498 = vpack.c.b16 %v3234, %v3226
    %v3499 = vpack.c.b16 %v3243, %v3235
    %v3500 = vpack.c.b16 %v3244, %v3236
    %v3501 = vpack.c.b16 %v3245, %v3237
    %v3502 = vpack.c.b16 %v3246, %v3238
    %v3503 = vpack.c.b16 %v3247, %v3239
    %v3504 = vpack.c.b16 %v3248, %v3240
    %v3505 = vpack.c.b16 %v3249, %v3241
    %v3506 = vpack.c.b16 %v3250, %v3242
    %3763 = vmatprep.subr.bf16.mxu0 %v3308
    %3764 = vmatpush1.bf16.msra.mxu0 %v3307
    %3765 = vmatprep.subr.bf16.mxu0 %v3300
    %3766 = vmatpush1.bf16.msra.mxu0 %v3299
    %3767 = vmatprep.subr.bf16.mxu0 %v3292
    %3768 = vmatpush1.bf16.msra.mxu0 %v3291
    %3769 = vmatprep.subr.bf16.mxu0 %v3284
    %3770 = vmatpush1.bf16.msra.mxu0 %v3283
    %3771 = vmatprep.subr.bf16.mxu0 %v3276
    %3772 = vmatpush1.bf16.msra.mxu0 %v3275
    %3773 = vmatprep.subr.bf16.mxu0 %v3268
    %3774 = vmatpush1.bf16.msra.mxu0 %v3267
    %3775 = vmatprep.subr.bf16.mxu0 %v3260
    %3776 = vmatpush1.bf16.msra.mxu0 %v3259
    %3777 = vmatprep.subr.bf16.mxu0 %v3252
    %3778 = vmatpush1.bf16.msra.mxu0 %v3251
    %3779 = vmatprep.subr.bf16.mxu0 %v3372
    %3780 = vmatpush2.bf16.msra.mxu0 %v3371
    %3781 = vmatprep.subr.bf16.mxu0 %v3364
    %3782 = vmatpush2.bf16.msra.mxu0 %v3363
    %3783 = vmatprep.subr.bf16.mxu0 %v3356
    %3784 = vmatpush2.bf16.msra.mxu0 %v3355
    %3785 = vmatprep.subr.bf16.mxu0 %v3348
    %3786 = vmatpush2.bf16.msra.mxu0 %v3347
    %3787 = vmatprep.subr.bf16.mxu0 %v3340
    %3788 = vmatpush2.bf16.msra.mxu0 %v3339
    %3789 = vmatprep.subr.bf16.mxu0 %v3332
    %3790 = vmatpush2.bf16.msra.mxu0 %v3331
    %3791 = vmatprep.subr.bf16.mxu0 %v3324
    %3792 = vmatpush2.bf16.msra.mxu0 %v3323
    %3793 = vmatprep.subr.bf16.mxu0 %v3316
    %3794 = vmatpush2.bf16.msra.mxu0 %v3315
    %3795 = vmatprep.mubr.bf16.mxu0 %v2178
    %3796 = vmatmul.mubr.bf16.gmra.mxu0 %v2177
    %v3797 = vpop.f32.mrf.mxu0
    %v3798 = vadd.f32 %v2446, %v3797
    %v3799 = vpop.f32.mrf.mxu0
    %v3800 = vadd.f32 %v2450, %v3799
    %v3801 = vpop.f32.mrf.mxu0
    %v3802 = vpop.f32.mrf.mxu0
    %3803 = vdwg.mxu0
    %3804 = vmatprep.subr.bf16.mxu0 %v3436
    %3805 = vmatpush1.bf16.msra.mxu0 %v3435
    %3806 = vmatprep.subr.bf16.mxu0 %v3428
    %3807 = vmatpush1.bf16.msra.mxu0 %v3427
    %3808 = vmatprep.subr.bf16.mxu0 %v3420
    %3809 = vmatpush1.bf16.msra.mxu0 %v3419
    %3810 = vmatprep.subr.bf16.mxu0 %v3412
    %3811 = vmatpush1.bf16.msra.mxu0 %v3411
    %3812 = vmatprep.subr.bf16.mxu0 %v3404
    %3813 = vmatpush1.bf16.msra.mxu0 %v3403
    %3814 = vmatprep.subr.bf16.mxu0 %v3396
    %3815 = vmatpush1.bf16.msra.mxu0 %v3395
    %3816 = vmatprep.subr.bf16.mxu0 %v3388
    %3817 = vmatpush1.bf16.msra.mxu0 %v3387
    %3818 = vmatprep.subr.bf16.mxu0 %v3380
    %3819 = vmatpush1.bf16.msra.mxu0 %v3379
    %3820 = vmatprep.subr.bf16.mxu0 %v3500
    %3821 = vmatpush2.bf16.msra.mxu0 %v3499
    %3822 = vmatprep.subr.bf16.mxu0 %v3492
    %3823 = vmatpush2.bf16.msra.mxu0 %v3491
    %3824 = vmatprep.subr.bf16.mxu0 %v3484
    %3825 = vmatpush2.bf16.msra.mxu0 %v3483
    %3826 = vmatprep.subr.bf16.mxu0 %v3476
    %3827 = vmatpush2.bf16.msra.mxu0 %v3475
    %3828 = vmatprep.subr.bf16.mxu0 %v3468
    %3829 = vmatpush2.bf16.msra.mxu0 %v3467
    %3830 = vmatprep.subr.bf16.mxu0 %v3460
    %3831 = vmatpush2.bf16.msra.mxu0 %v3459
    %3832 = vmatprep.subr.bf16.mxu0 %v3452
    %3833 = vmatpush2.bf16.msra.mxu0 %v3451
    %3834 = vmatprep.subr.bf16.mxu0 %v3444
    %3835 = vmatpush2.bf16.msra.mxu0 %v3443
    %3836 = vmatprep.mubr.bf16.mxu0 %v2180
    %3837 = vmatmul.mubr.bf16.gmra.mxu0 %v2179
    %v3838 = vpop.f32.mrf.mxu0
    %v3839 = vadd.f32 %v3798, %v3838
    %v3840 = vpop.f32.mrf.mxu0
    %v3841 = vadd.f32 %v3800, %v3840
    %v3842 = vpop.f32.mrf.mxu0
    %v3843 = vpop.f32.mrf.mxu0
    %3844 = vdwg.mxu0
    %3845 = vmatprep.subr.bf16.mxu0 %v3310
    %3846 = vmatpush1.bf16.msra.mxu0 %v3309
    %3847 = vmatprep.subr.bf16.mxu0 %v3302
    %3848 = vmatpush1.bf16.msra.mxu0 %v3301
    %3849 = vmatprep.subr.bf16.mxu0 %v3294
    %3850 = vmatpush1.bf16.msra.mxu0 %v3293
    %3851 = vmatprep.subr.bf16.mxu0 %v3286
    %3852 = vmatpush1.bf16.msra.mxu0 %v3285
    %3853 = vmatprep.subr.bf16.mxu0 %v3278
    %3854 = vmatpush1.bf16.msra.mxu0 %v3277
    %3855 = vmatprep.subr.bf16.mxu0 %v3270
    %3856 = vmatpush1.bf16.msra.mxu0 %v3269
    %3857 = vmatprep.subr.bf16.mxu0 %v3262
    %3858 = vmatpush1.bf16.msra.mxu0 %v3261
    %3859 = vmatprep.subr.bf16.mxu0 %v3254
    %3860 = vmatpush1.bf16.msra.mxu0 %v3253
    %3861 = vmatprep.subr.bf16.mxu0 %v3374
    %3862 = vmatpush2.bf16.msra.mxu0 %v3373
    %3863 = vmatprep.subr.bf16.mxu0 %v3366
    %3864 = vmatpush2.bf16.msra.mxu0 %v3365
    %3865 = vmatprep.subr.bf16.mxu0 %v3358
    %3866 = vmatpush2.bf16.msra.mxu0 %v3357
    %3867 = vmatprep.subr.bf16.mxu0 %v3350
    %3868 = vmatpush2.bf16.msra.mxu0 %v3349
    %3869 = vmatprep.subr.bf16.mxu0 %v3342
    %3870 = vmatpush2.bf16.msra.mxu0 %v3341
    %3871 = vmatprep.subr.bf16.mxu0 %v3334
    %3872 = vmatpush2.bf16.msra.mxu0 %v3333
    %3873 = vmatprep.subr.bf16.mxu0 %v3326
    %3874 = vmatpush2.bf16.msra.mxu0 %v3325
    %3875 = vmatprep.subr.bf16.mxu0 %v3318
    %3876 = vmatpush2.bf16.msra.mxu0 %v3317
    %3877 = vmatprep.mubr.bf16.mxu0 %v2178
    %3878 = vmatmul.mubr.bf16.gmra.mxu0 %v2177
    %v3879 = vpop.f32.mrf.mxu0
    %v3880 = vadd.f32 %v2454, %v3879
    %v3881 = vpop.f32.mrf.mxu0
    %v3882 = vadd.f32 %v2458, %v3881
    %v3883 = vpop.f32.mrf.mxu0
    %v3884 = vpop.f32.mrf.mxu0
    %3885 = vdwg.mxu0
    %3886 = vmatprep.subr.bf16.mxu0 %v3438
    %3887 = vmatpush1.bf16.msra.mxu0 %v3437
    %3888 = vmatprep.subr.bf16.mxu0 %v3430
    %3889 = vmatpush1.bf16.msra.mxu0 %v3429
    %3890 = vmatprep.subr.bf16.mxu0 %v3422
    %3891 = vmatpush1.bf16.msra.mxu0 %v3421
    %3892 = vmatprep.subr.bf16.mxu0 %v3414
    %3893 = vmatpush1.bf16.msra.mxu0 %v3413
    %3894 = vmatprep.subr.bf16.mxu0 %v3406
    %3895 = vmatpush1.bf16.msra.mxu0 %v3405
    %3896 = vmatprep.subr.bf16.mxu0 %v3398
    %3897 = vmatpush1.bf16.msra.mxu0 %v3397
    %3898 = vmatprep.subr.bf16.mxu0 %v3390
    %3899 = vmatpush1.bf16.msra.mxu0 %v3389
    %3900 = vmatprep.subr.bf16.mxu0 %v3382
    %3901 = vmatpush1.bf16.msra.mxu0 %v3381
    %3902 = vmatprep.subr.bf16.mxu0 %v3502
    %3903 = vmatpush2.bf16.msra.mxu0 %v3501
    %3904 = vmatprep.subr.bf16.mxu0 %v3494
    %3905 = vmatpush2.bf16.msra.mxu0 %v3493
    %3906 = vmatprep.subr.bf16.mxu0 %v3486
    %3907 = vmatpush2.bf16.msra.mxu0 %v3485
    %3908 = vmatprep.subr.bf16.mxu0 %v3478
    %3909 = vmatpush2.bf16.msra.mxu0 %v3477
    %3910 = vmatprep.subr.bf16.mxu0 %v3470
    %3911 = vmatpush2.bf16.msra.mxu0 %v3469
    %3912 = vmatprep.subr.bf16.mxu0 %v3462
    %3913 = vmatpush2.bf16.msra.mxu0 %v3461
    %3914 = vmatprep.subr.bf16.mxu0 %v3454
    %3915 = vmatpush2.bf16.msra.mxu0 %v3453
    %3916 = vmatprep.subr.bf16.mxu0 %v3446
    %3917 = vmatpush2.bf16.msra.mxu0 %v3445
    %3918 = vmatprep.mubr.bf16.mxu0 %v2180
    %3919 = vmatmul.mubr.bf16.gmra.mxu0 %v2179
    %v3920 = vpop.f32.mrf.mxu0
    %v3921 = vadd.f32 %v3880, %v3920
    %v3922 = vpop.f32.mrf.mxu0
    %v3923 = vadd.f32 %v3882, %v3922
    %v3924 = vpop.f32.mrf.mxu0
    %v3925 = vpop.f32.mrf.mxu0
    %3926 = vdwg.mxu0
    %3927 = vmatprep.subr.bf16.mxu0 %v3312
    %3928 = vmatpush1.bf16.msra.mxu0 %v3311
    %3929 = vmatprep.subr.bf16.mxu0 %v3304
    %3930 = vmatpush1.bf16.msra.mxu0 %v3303
    %3931 = vmatprep.subr.bf16.mxu0 %v3296
    %3932 = vmatpush1.bf16.msra.mxu0 %v3295
    %3933 = vmatprep.subr.bf16.mxu0 %v3288
    %3934 = vmatpush1.bf16.msra.mxu0 %v3287
    %3935 = vmatprep.subr.bf16.mxu0 %v3280
    %3936 = vmatpush1.bf16.msra.mxu0 %v3279
    %3937 = vmatprep.subr.bf16.mxu0 %v3272
    %3938 = vmatpush1.bf16.msra.mxu0 %v3271
    %3939 = vmatprep.subr.bf16.mxu0 %v3264
    %3940 = vmatpush1.bf16.msra.mxu0 %v3263
    %3941 = vmatprep.subr.bf16.mxu0 %v3256
    %3942 = vmatpush1.bf16.msra.mxu0 %v3255
    %3943 = vmatprep.subr.bf16.mxu0 %v3376
    %3944 = vmatpush2.bf16.msra.mxu0 %v3375
    %3945 = vmatprep.subr.bf16.mxu0 %v3368
    %3946 = vmatpush2.bf16.msra.mxu0 %v3367
    %3947 = vmatprep.subr.bf16.mxu0 %v3360
    %3948 = vmatpush2.bf16.msra.mxu0 %v3359
    %3949 = vmatprep.subr.bf16.mxu0 %v3352
    %3950 = vmatpush2.bf16.msra.mxu0 %v3351
    %3951 = vmatprep.subr.bf16.mxu0 %v3344
    %3952 = vmatpush2.bf16.msra.mxu0 %v3343
    %3953 = vmatprep.subr.bf16.mxu0 %v3336
    %3954 = vmatpush2.bf16.msra.mxu0 %v3335
    %3955 = vmatprep.subr.bf16.mxu0 %v3328
    %3956 = vmatpush2.bf16.msra.mxu0 %v3327
    %3957 = vmatprep.subr.bf16.mxu0 %v3320
    %3958 = vmatpush2.bf16.msra.mxu0 %v3319
    %3959 = vmatprep.mubr.bf16.mxu0 %v2178
    %3960 = vmatmul.mubr.bf16.gmra.mxu0 %v2177
    %v3961 = vpop.f32.mrf.mxu0
    %v3962 = vadd.f32 %v2462, %v3961
    %v3963 = vpop.f32.mrf.mxu0
    %v3964 = vadd.f32 %v2466, %v3963
    %v3965 = vpop.f32.mrf.mxu0
    %v3966 = vpop.f32.mrf.mxu0
    %3967 = vdwg.mxu0
    %3968 = vmatprep.subr.bf16.mxu0 %v3440
    %3969 = vmatpush1.bf16.msra.mxu0 %v3439
    %3970 = vmatprep.subr.bf16.mxu0 %v3432
    %3971 = vmatpush1.bf16.msra.mxu0 %v3431
    %3972 = vmatprep.subr.bf16.mxu0 %v3424
    %3973 = vmatpush1.bf16.msra.mxu0 %v3423
    %3974 = vmatprep.subr.bf16.mxu0 %v3416
    %3975 = vmatpush1.bf16.msra.mxu0 %v3415
    %3976 = vmatprep.subr.bf16.mxu0 %v3408
    %3977 = vmatpush1.bf16.msra.mxu0 %v3407
    %3978 = vmatprep.subr.bf16.mxu0 %v3400
    %3979 = vmatpush1.bf16.msra.mxu0 %v3399
    %3980 = vmatprep.subr.bf16.mxu0 %v3392
    %3981 = vmatpush1.bf16.msra.mxu0 %v3391
    %3982 = vmatprep.subr.bf16.mxu0 %v3384
    %3983 = vmatpush1.bf16.msra.mxu0 %v3383
    %3984 = vmatprep.subr.bf16.mxu0 %v3504
    %3985 = vmatpush2.bf16.msra.mxu0 %v3503
    %3986 = vmatprep.subr.bf16.mxu0 %v3496
    %3987 = vmatpush2.bf16.msra.mxu0 %v3495
    %3988 = vmatprep.subr.bf16.mxu0 %v3488
    %3989 = vmatpush2.bf16.msra.mxu0 %v3487
    %3990 = vmatprep.subr.bf16.mxu0 %v3480
    %3991 = vmatpush2.bf16.msra.mxu0 %v3479
    %3992 = vmatprep.subr.bf16.mxu0 %v3472
    %3993 = vmatpush2.bf16.msra.mxu0 %v3471
    %3994 = vmatprep.subr.bf16.mxu0 %v3464
    %3995 = vmatpush2.bf16.msra.mxu0 %v3463
    %3996 = vmatprep.subr.bf16.mxu0 %v3456
    %3997 = vmatpush2.bf16.msra.mxu0 %v3455
    %3998 = vmatprep.subr.bf16.mxu0 %v3448
    %3999 = vmatpush2.bf16.msra.mxu0 %v3447
    %4000 = vmatprep.mubr.bf16.mxu0 %v2180
    %4001 = vmatmul.mubr.bf16.gmra.mxu0 %v2179
    %v4002 = vpop.f32.mrf.mxu0
    %v4003 = vadd.f32 %v3962, %v4002
    %v4004 = vpop.f32.mrf.mxu0
    %v4005 = vadd.f32 %v3964, %v4004
    %v4006 = vpop.f32.mrf.mxu0
    %v4007 = vpop.f32.mrf.mxu0
    %4008 = vdwg.mxu0
    %4009 = vmatprep.subr.bf16.mxu0 %v3314
    %4010 = vmatpush1.bf16.msra.mxu0 %v3313
    %4011 = vmatprep.subr.bf16.mxu0 %v3306
    %4012 = vmatpush1.bf16.msra.mxu0 %v3305
    %4013 = vmatprep.subr.bf16.mxu0 %v3298
    %4014 = vmatpush1.bf16.msra.mxu0 %v3297
    %4015 = vmatprep.subr.bf16.mxu0 %v3290
    %4016 = vmatpush1.bf16.msra.mxu0 %v3289
    %4017 = vmatprep.subr.bf16.mxu0 %v3282
    %4018 = vmatpush1.bf16.msra.mxu0 %v3281
    %4019 = vmatprep.subr.bf16.mxu0 %v3274
    %4020 = vmatpush1.bf16.msra.mxu0 %v3273
    %4021 = vmatprep.subr.bf16.mxu0 %v3266
    %4022 = vmatpush1.bf16.msra.mxu0 %v3265
    %4023 = vmatprep.subr.bf16.mxu0 %v3258
    %4024 = vmatpush1.bf16.msra.mxu0 %v3257
    %4025 = vmatprep.subr.bf16.mxu0 %v3378
    %4026 = vmatpush2.bf16.msra.mxu0 %v3377
    %4027 = vmatprep.subr.bf16.mxu0 %v3370
    %4028 = vmatpush2.bf16.msra.mxu0 %v3369
    %4029 = vmatprep.subr.bf16.mxu0 %v3362
    %4030 = vmatpush2.bf16.msra.mxu0 %v3361
    %4031 = vmatprep.subr.bf16.mxu0 %v3354
    %4032 = vmatpush2.bf16.msra.mxu0 %v3353
    %4033 = vmatprep.subr.bf16.mxu0 %v3346
    %4034 = vmatpush2.bf16.msra.mxu0 %v3345
    %4035 = vmatprep.subr.bf16.mxu0 %v3338
    %4036 = vmatpush2.bf16.msra.mxu0 %v3337
    %4037 = vmatprep.subr.bf16.mxu0 %v3330
    %4038 = vmatpush2.bf16.msra.mxu0 %v3329
    %4039 = vmatprep.subr.bf16.mxu0 %v3322
    %4040 = vmatpush2.bf16.msra.mxu0 %v3321
    %4041 = vmatprep.mubr.bf16.mxu0 %v2178
    %4042 = vmatmul.mubr.bf16.gmra.mxu0 %v2177
    %v4043 = vpop.f32.mrf.mxu0
    %v4044 = vadd.f32 %v2470, %v4043
    %v4045 = vpop.f32.mrf.mxu0
    %v4046 = vadd.f32 %v2474, %v4045
    %v4047 = vpop.f32.mrf.mxu0
    %v4048 = vpop.f32.mrf.mxu0
    %4049 = vdwg.mxu0
    %4050 = vmatprep.subr.bf16.mxu0 %v3442
    %4051 = vmatpush1.bf16.msra.mxu0 %v3441
    %4052 = vmatprep.subr.bf16.mxu0 %v3434
    %4053 = vmatpush1.bf16.msra.mxu0 %v3433
    %4054 = vmatprep.subr.bf16.mxu0 %v3426
    %4055 = vmatpush1.bf16.msra.mxu0 %v3425
    %4056 = vmatprep.subr.bf16.mxu0 %v3418
    %4057 = vmatpush1.bf16.msra.mxu0 %v3417
    %4058 = vmatprep.subr.bf16.mxu0 %v3410
    %4059 = vmatpush1.bf16.msra.mxu0 %v3409
    %4060 = vmatprep.subr.bf16.mxu0 %v3402
    %4061 = vmatpush1.bf16.msra.mxu0 %v3401
    %4062 = vmatprep.subr.bf16.mxu0 %v3394
    %4063 = vmatpush1.bf16.msra.mxu0 %v3393
    %4064 = vmatprep.subr.bf16.mxu0 %v3386
    %4065 = vmatpush1.bf16.msra.mxu0 %v3385
    %4066 = vmatprep.subr.bf16.mxu0 %v3506
    %4067 = vmatpush2.bf16.msra.mxu0 %v3505
    %4068 = vmatprep.subr.bf16.mxu0 %v3498
    %4069 = vmatpush2.bf16.msra.mxu0 %v3497
    %4070 = vmatprep.subr.bf16.mxu0 %v3490
    %4071 = vmatpush2.bf16.msra.mxu0 %v3489
    %4072 = vmatprep.subr.bf16.mxu0 %v3482
    %4073 = vmatpush2.bf16.msra.mxu0 %v3481
    %4074 = vmatprep.subr.bf16.mxu0 %v3474
    %4075 = vmatpush2.bf16.msra.mxu0 %v3473
    %4076 = vmatprep.subr.bf16.mxu0 %v3466
    %4077 = vmatpush2.bf16.msra.mxu0 %v3465
    %4078 = vmatprep.subr.bf16.mxu0 %v3458
    %4079 = vmatpush2.bf16.msra.mxu0 %v3457
    %4080 = vmatprep.subr.bf16.mxu0 %v3450
    %4081 = vmatpush2.bf16.msra.mxu0 %v3449
    %4082 = vmatprep.mubr.bf16.mxu0 %v2180
    %4083 = vmatmul.mubr.bf16.gmra.mxu0 %v2179
    %v4084 = vpop.f32.mrf.mxu0
    %v4085 = vadd.f32 %v4044, %v4084
    %v4086 = vpop.f32.mrf.mxu0
    %v4087 = vadd.f32 %v4046, %v4086
    %v4088 = vpop.f32.mrf.mxu0
    %v4089 = vpop.f32.mrf.mxu0
    %4090 = vdwg.mxu0
    %4091 = vst [vmem:[#allocation19] sm:$0xff] %v3839
    %4092 = vst [vmem:[#allocation19 + $0x8] sm:$0xff] %v3841
    %4093 = vst [vmem:[#allocation19 + $0x10] sm:$0xff] %v3921
    %4094 = vst [vmem:[#allocation19 + $0x18] sm:$0xff] %v3923
    %4095 = vst [vmem:[#allocation19 + $0x20] sm:$0xff] %v4003
    %4096 = vst [vmem:[#allocation19 + $0x28] sm:$0xff] %v4005
    %4097 = vst [vmem:[#allocation19 + $0x30] sm:$0xff] %v4085
    %4098 = vst [vmem:[#allocation19 + $0x38] sm:$0xff] %v4087
    // Predicated region
    $region86: #{generator_forward.1} parent=1 // pred_check
      _
    $region87: #{generator_forward.1} parent=1 // pred_check_branch
      %4100 = sbr.rel (0) target = $region89
    $region88: #{generator_forward.1} parent=1 // pred_region
      %s4102 = ssub.s32 1024, 1024
      %4103 = vsyncadd [#allocation6], %s4102
      %s4105 = sshll.u32 [#allocation19], 4
      %s4106 = int_to_ptr.vmem [resolvable:$true] %s4105
      %4108 = dma.vmem_to_hbm [thread:$0]  %s4106, 1024, %s12, [#allocation6]
    $region89: #{generator_forward.1} parent=1 // pred_fallthru
      _
    // Predicated region
    $region90: #{generator_forward.1} parent=1 // pred_check
      _
    $region91: #{generator_forward.1} parent=1 // pred_check_branch
      %4110 = sbr.rel (0) target = $region93
    $region92: #{generator_forward.1} parent=1 // pred_region
      %4111 = dma.done [#allocation6], 1024
    $region93: #{generator_forward.1} parent=1 // pred_fallthru
      _
    %4112 = vsyncpa [#allocation5], 1
    %4113 = vsyncpa [#allocation8], 1
    %4114 = vsyncpa [#allocation11], 1
    %4115 = vsyncpa [#allocation14], 1
    %4116 = vsyncpa [#allocation17], 1
    %4117 = vsyncpa [#allocation6], 1
  %4118 = vsyncmov [#allocation3]
  %s4119 = vpop.sfrf %4118
  %p4120 = scmp.eq.s32.totalorder %s4119, 0
  %p4121 = pneg %p4120
  %4123 = shalt.err (%p4121)

</llo_original>
